<compile_context>
chip_gen: v7x
topology: tpu7x:2x2x1
jax: 0.10.0
libtpu: 0.0.40
codegen_flags: <defaults>
</compile_context>

<pallas_src>
import functools

import numpy as np
import jax
import jax.numpy as jnp
from jax.experimental import pallas as pl
from jax.experimental.pallas import tpu as pltpu


# ----------------------------------------------------------------------------
# Fused forward kernel: single grid step, everything VMEM-resident.
#   x_ref:     (B*T, C)      wqkv_ref: (C, 3C)   bqkv_ref: (1, 3C)
#   wproj_ref: (C, C)        bproj_ref:(1, C)    o_ref:    (B*T, C)
# ----------------------------------------------------------------------------
def _fused_forward_kernel(x_ref, wqkv_ref, bqkv_ref, wproj_ref, bproj_ref,
                          o_ref, *, batch, seq, n_head, block_size, scale):
    BT, C = x_ref.shape
    D = C // n_head
    bs = block_size
    nb = seq // bs                 # kv/query blocks per batch element
    G = batch * nb                 # total diagonal (batch, q-block) groups

    x = x_ref[...]                                                   # (B*T, C)

    # qkv = x @ W_qkv + b_qkv  -- one lane-dense (B*T, 3C) MXU matmul.
    qkv = (jnp.dot(x, wqkv_ref[...], preferred_element_type=jnp.float32)
           + bqkv_ref[...])                                          # (B*T, 3C)

    # Row-group the q/k/v slabs into the per-(batch, block) diagonal tiles.
    # Row r = (b*nb + bi)*bs + s, so a plain row-major reshape gives (G, bs, C).
    q = qkv[:, 0 * C:1 * C].reshape(G, bs, C)
    k = qkv[:, 1 * C:2 * C].reshape(G, bs, C)
    v = qkv[:, 2 * C:3 * C].reshape(G, bs, C)

    # Within-block causal mask for the bi == bj block (triu, diagonal=1).
    row = jax.lax.broadcasted_iota(jnp.int32, (1, bs, bs), 1)
    col = jax.lax.broadcasted_iota(jnp.int32, (1, bs, bs), 2)
    diag_mask = col > row                                            # (1,bs,bs)

    # Query-block index of each group: g = b*nb + bi  ->  bi = g % nb.
    bi_ids = jax.lax.broadcasted_iota(jnp.int32, (G, bs, 1), 0) % nb

    neg_inf = jnp.float32(-jnp.inf)
    nan_f32 = jnp.float32(jnp.nan)
    zero_f32 = jnp.float32(0.0)

    head_outs = []
    for h in range(n_head):        # static, unrolled (n_head = 4)
        lo, hi = h * D, (h + 1) * D
        qh, kh, vh = q[:, :, lo:hi], k[:, :, lo:hi], v[:, :, lo:hi]  # (G,bs,D)

        # Diagonal score blocks only -- the only blocks the reference consumes.
        s = jnp.einsum("gqd,gkd->gqk", qh, kh,
                       preferred_element_type=jnp.float32) * scale   # (G,bs,bs)
        s = jnp.where(diag_mask, neg_inf, s)

        # At its diagonal step the running max m is still -inf, so the diagonal
        # p is exactly exp(s - rowmax(s)); its PV is the only live PV matmul.
        rowmax = jnp.max(s, axis=-1, keepdims=True)
        p_diag = jnp.exp(s - rowmax)
        pv_diag = jnp.einsum("gqk,gkd->gqd", p_diag, vh,
                             preferred_element_type=jnp.float32)      # (G,bs,D)

        # Reference recurrence over kv blocks (ascending bj), vectorized over
        # all (batch, q-block) groups.  Off-diagonal steps see -inf scores
        # (exactly what the reference's fill_(-inf) / over-masking triu rule
        # produces) and their PV matmuls are replaced by the exact dead values.
        m = jnp.full((G, bs, 1), -jnp.inf, jnp.float32)
        l = jnp.zeros((G, bs, 1), jnp.float32)
        out = jnp.zeros((G, bs, D), jnp.float32)
        for bj in range(nb):       # static, unrolled (nb = 2)
            is_diag = bi_ids == bj
            s_step = jnp.where(is_diag, s, neg_inf)
            m_new = jnp.maximum(m, jnp.max(s_step, axis=-1, keepdims=True))
            p = jnp.exp(s_step - m_new)
            l_new = l * jnp.exp(m - m_new) + jnp.sum(p, axis=-1, keepdims=True)
            # bj < bi: fully masked, m still -inf  -> p = NaN -> pv = NaN.
            # bj > bi: diagonal already processed  -> p = 0   -> pv = 0 exactly.
            pv_dead = jnp.where(bi_ids > bj, nan_f32, zero_f32)
            pv = jnp.where(is_diag, pv_diag, pv_dead)
            # Reference update: out += (out_block - out) * (l / l_new)
            out = out + (pv - out) * (l / l_new)
            m, l = m_new, l_new
        head_outs.append((out / l).reshape(BT, D))                   # (B*T, D)

    # Lane-concat the head outputs (C = 32 lanes, one vreg) and run the fused
    # output projection as a single (B*T, C) x (C, C) matmul.
    attn = jnp.concatenate(head_outs, axis=-1)                       # (B*T, C)
    o = (jnp.dot(attn, wproj_ref[...], preferred_element_type=jnp.float32)
         + bproj_ref[...])
    o_ref[...] = o.astype(o_ref.dtype)


# ----------------------------------------------------------------------------
# Wrapper: single pallas_call, single grid step, full arrays as blocks.
# (For much larger B one would instead tile Bblk batch elements per "parallel"
#  grid step so each step's qkv matmul reaches M >= 128/256 MXU rows.)
# ----------------------------------------------------------------------------
def simple_flash_attention_forward(params, x, *, n_head, block_size):
    B, T, C = x.shape
    assert C % n_head == 0, "n_embd must be divisible by n_head"
    assert T % block_size == 0, "ragged trailing blocks not implemented"
    D = C // n_head
    scale = D ** (-0.5)
    BT = B * T

    kernel = functools.partial(_fused_forward_kernel, batch=B, seq=T,
                               n_head=n_head, block_size=block_size, scale=scale)

    x2 = x.reshape(BT, C).astype(jnp.float32)                 # free reshape
    w_qkv = params["w_qkv"].astype(jnp.float32)               # (C, 3C)
    b_qkv = params["b_qkv"].reshape(1, 3 * C).astype(jnp.float32)
    w_proj = params["w_proj"].astype(jnp.float32)             # (C, C)
    b_proj = params["b_proj"].reshape(1, C).astype(jnp.float32)

    out2 = pl.pallas_call(
        kernel,
        out_shape=jax.ShapeDtypeStruct((BT, C), jnp.float32),
        grid_spec=pltpu.PrefetchScalarGridSpec(
            num_scalar_prefetch=0,
            grid=(1,),                                         # single step
            in_specs=[
                pl.BlockSpec((BT, C), lambda i: (0, 0)),       # x  (B*T, C)
                pl.BlockSpec((C, 3 * C), lambda i: (0, 0)),    # w_qkv
                pl.BlockSpec((1, 3 * C), lambda i: (0, 0)),    # b_qkv
                pl.BlockSpec((C, C), lambda i: (0, 0)),        # w_proj
                pl.BlockSpec((1, C), lambda i: (0, 0)),        # b_proj
            ],
            out_specs=pl.BlockSpec((BT, C), lambda i: (0, 0)),
        ),
        compiler_params=pltpu.CompilerParams(
            dimension_semantics=("arbitrary",)),
    )(x2, w_qkv, b_qkv, w_proj, b_proj)
    return out2.reshape(B, T, C)


# ----------------------------------------------------------------------------
# Pure-JAX emulation of the PyTorch module (verification only).
# ----------------------------------------------------------------------------
def _reference_forward(params, x, *, n_head, block_size):
    B, T, C = x.shape
    D = C // n_head
    scale = D ** (-0.5)
    qkv = x @ params["w_qkv"] + params["b_qkv"]
    qkv = qkv.reshape(B, T, 3, n_head, D)
    q, k, v = qkv[:, :, 0], qkv[:, :, 1], qkv[:, :, 2]

    def to_bh(a):  # 'b t h d -> (b h) t d'
        return jnp.transpose(a, (0, 2, 1, 3)).reshape(B * n_head, T, D)

    q, k, v = to_bh(q), to_bh(k), to_bh(v)
    output = jnp.zeros_like(q)
    for i in range(0, T, block_size):
        ie = min(i + block_size, T)
        qb = q[:, i:ie]
        m = jnp.full((q.shape[0], ie - i), -jnp.inf, jnp.float32)
        l = jnp.zeros((q.shape[0], ie - i), jnp.float32)
        out_i = jnp.zeros((q.shape[0], ie - i, D), jnp.float32)
        for j in range(0, T, block_size):
            je = min(j + block_size, T)
            kb, vb = k[:, j:je], v[:, j:je]
            attn = jnp.einsum("bqd,bkd->bqk", qb, kb) * scale
            if j > i:
                attn = jnp.full_like(attn, -jnp.inf)
            else:
                mask = jnp.triu(jnp.ones((ie - i, je - j), bool), k=j - i + 1)
                attn = jnp.where(mask[None], -jnp.inf, attn)
            m_new = jnp.maximum(m, attn.max(-1))
            p = jnp.exp(attn - m_new[..., None])
            l_new = l * jnp.exp(m - m_new) + p.sum(-1)
            ob = jnp.einsum("bqk,bkd->bqd", p, vb)
            out_i = out_i + (ob - out_i) * (l / l_new)[..., None]
            m, l = m_new, l_new
        out_i = out_i / l[..., None]
        output = output.at[:, i:ie].set(out_i)
    output = output.reshape(B, n_head, T, D).transpose(0, 2, 1, 3).reshape(B, T, C)
    return output @ params["w_proj"] + params["b_proj"]


if __name__ == "__main__":
    # config: n_embd=32, n_head=4 (head_dim=8), block_size=8, dropout=0.0
    B, T, C, H, BS = 2, 16, 32, 4, 8

    key = jax.random.PRNGKey(0)
    k_x, k_wqkv, k_bqkv, k_wproj, k_bproj = jax.random.split(key, 5)

    x = jax.random.normal(k_x, (B, T, C), jnp.float32)
    params = {
        "w_qkv": 0.02 * jax.random.normal(k_wqkv, (C, 3 * C), jnp.float32),
        "b_qkv": 0.02 * jax.random.normal(k_bqkv, (3 * C,), jnp.float32),
        "w_proj": 0.02 * jax.random.normal(k_wproj, (C, C), jnp.float32),
        "b_proj": 0.02 * jax.random.normal(k_bproj, (C,), jnp.float32),
    }

    out = simple_flash_attention_forward(params, x, n_head=H, block_size=BS)
    out = jax.block_until_ready(out)
    assert out.shape == (B, T, C)

    # Verify against a pure-JAX emulation of the PyTorch forward.  The reference
    # recurrence analytically yields bias rows + NaN rows, so compare equal_nan.
    ref = _reference_forward(params, x, n_head=H, block_size=BS)
    if not np.allclose(np.asarray(out), np.asarray(ref),
                       rtol=1e-5, atol=1e-5, equal_nan=True):
        raise AssertionError("Pallas kernel output does not match reference")

    print("KERNEL_OK")
</pallas_src>

<mosaic_0001>
module attributes {stable_mosaic.version = 11 : i64} {
  func.func @_fused_forward_kernel(%arg0: i32, %arg1: memref<32x32xf32, #tpu.memory_space<vmem>>, %arg2: memref<32x96xf32, #tpu.memory_space<vmem>>, %arg3: memref<1x96xf32, #tpu.memory_space<vmem>>, %arg4: memref<32x32xf32, #tpu.memory_space<vmem>>, %arg5: memref<1x32xf32, #tpu.memory_space<vmem>>, %arg6: memref<32x32xf32, #tpu.memory_space<vmem>>) attributes {dimension_semantics = [#tpu.dimension_semantics<arbitrary>], iteration_bounds = array<i64: 1>, scalar_prefetch = 0 : i64, scratch_operands = 0 : i64, tpu.core_type = #tpu.core_type<tc>, window_params = [{pipeline_mode = #tpu.pipeline_mode<synchronous>, transform_indices = @transform_0, window_bounds = array<i64: 32, 32>}, {pipeline_mode = #tpu.pipeline_mode<synchronous>, transform_indices = @transform_1, window_bounds = array<i64: 32, 96>}, {pipeline_mode = #tpu.pipeline_mode<synchronous>, transform_indices = @transform_2, window_bounds = array<i64: 1, 96>}, {pipeline_mode = #tpu.pipeline_mode<synchronous>, transform_indices = @transform_3, window_bounds = array<i64: 32, 32>}, {pipeline_mode = #tpu.pipeline_mode<synchronous>, transform_indices = @transform_4, window_bounds = array<i64: 1, 32>}, {pipeline_mode = #tpu.pipeline_mode<synchronous>, transform_indices = @transform_5, window_bounds = array<i64: 32, 32>}]} {
    %c0 = arith.constant 0 : index
    %c0_0 = arith.constant 0 : index
    %0 = vector.load %arg1[%c0, %c0_0] : memref<32x32xf32, #tpu.memory_space<vmem>>, vector<32x32xf32>
    %c0_1 = arith.constant 0 : index
    %c0_2 = arith.constant 0 : index
    %1 = vector.load %arg2[%c0_1, %c0_2] : memref<32x96xf32, #tpu.memory_space<vmem>>, vector<32x96xf32>
    %cst = arith.constant dense<0.000000e+00> : vector<32x96xf32>
    %2 = tpu.matmul %0, %1, %cst {dimension_numbers = #tpu.dot_dimension_numbers<[1], [0], [0], [1], [0, 0, 1, 1], [], []>} : vector<32x32xf32>, vector<32x96xf32>, vector<32x96xf32> -> vector<32x96xf32>
    %c0_3 = arith.constant 0 : index
    %c0_4 = arith.constant 0 : index
    %3 = vector.load %arg3[%c0_3, %c0_4] : memref<1x96xf32, #tpu.memory_space<vmem>>, vector<1x96xf32>
    %4 = vector.broadcast %3 : vector<1x96xf32> to vector<32x96xf32>
    %5 = arith.addf %2, %4 : vector<32x96xf32>
    %6 = vector.extract_strided_slice %5 {offsets = [0, 0], sizes = [32, 32], strides = [1, 1]} : vector<32x96xf32> to vector<32x32xf32>
    %7 = vector.shape_cast %6 : vector<32x32xf32> to vector<4x8x32xf32>
    %8 = vector.extract_strided_slice %5 {offsets = [0, 32], sizes = [32, 32], strides = [1, 1]} : vector<32x96xf32> to vector<32x32xf32>
    %9 = vector.shape_cast %8 : vector<32x32xf32> to vector<4x8x32xf32>
    %10 = vector.extract_strided_slice %5 {offsets = [0, 64], sizes = [32, 32], strides = [1, 1]} : vector<32x96xf32> to vector<32x32xf32>
    %11 = vector.shape_cast %10 : vector<32x32xf32> to vector<4x8x32xf32>
    %12 = tpu.iota {dimensions = array<i32: 1>} : vector<1x8x8xi32>
    %13 = tpu.iota {dimensions = array<i32: 2>} : vector<1x8x8xi32>
    %14 = arith.cmpi sgt, %13, %12 : vector<1x8x8xi32>
    %15 = tpu.iota {dimensions = array<i32: 0>} : vector<4x8x1xi32>
    %c2_i32 = arith.constant 2 : i32
    %c0_i32 = arith.constant 0 : i32
    %16 = arith.cmpi eq, %c2_i32, %c0_i32 : i32
    %c1_i32 = arith.constant 1 : i32
    %17 = arith.select %16, %c1_i32, %c2_i32 : i32
    %18 = vector.broadcast %17 : i32 to vector<4x8x1xi32>
    %19 = arith.remsi %15, %18 : vector<4x8x1xi32>
    %c0_i32_5 = arith.constant 0 : i32
    %20 = vector.broadcast %c0_i32_5 : i32 to vector<4x8x1xi32>
    %21 = arith.cmpi ne, %19, %20 : vector<4x8x1xi32>
    %c0_i32_6 = arith.constant 0 : i32
    %22 = vector.broadcast %c0_i32_6 : i32 to vector<4x8x1xi32>
    %23 = arith.cmpi slt, %19, %22 : vector<4x8x1xi32>
    %c0_i32_7 = arith.constant 0 : i32
    %24 = arith.cmpi slt, %17, %c0_i32_7 : i32
    %25 = vector.broadcast %24 : i1 to vector<4x8x1xi1>
    %26 = vector.broadcast %25 : vector<4x8x1xi1> to vector<4x8x1xi1>
    %27 = arith.xori %23, %26 : vector<4x8x1xi1>
    %28 = arith.andi %27, %21 : vector<4x8x1xi1>
    %29 = vector.broadcast %17 : i32 to vector<4x8x1xi32>
    %30 = arith.addi %19, %29 : vector<4x8x1xi32>
    %31 = arith.select %28, %30, %19 : vector<4x8x1xi1>, vector<4x8x1xi32>
    %32 = vector.extract_strided_slice %7 {offsets = [0, 0, 0], sizes = [4, 8, 8], strides = [1, 1, 1]} : vector<4x8x32xf32> to vector<4x8x8xf32>
    %33 = vector.extract_strided_slice %9 {offsets = [0, 0, 0], sizes = [4, 8, 8], strides = [1, 1, 1]} : vector<4x8x32xf32> to vector<4x8x8xf32>
    %34 = vector.extract_strided_slice %11 {offsets = [0, 0, 0], sizes = [4, 8, 8], strides = [1, 1, 1]} : vector<4x8x32xf32> to vector<4x8x8xf32>
    "tpu.trace_start"() <{level = 10 : i32, message = "gqd,gkd->gqk"}> : () -> ()
    %cst_8 = arith.constant dense<0.000000e+00> : vector<4x8x8xf32>
    %35 = tpu.matmul %32, %33, %cst_8 {dimension_numbers = #tpu.dot_dimension_numbers<[2], [2], [1], [1], [0, 0, 0, 1, 1, 1], [0], [0]>} : vector<4x8x8xf32>, vector<4x8x8xf32>, vector<4x8x8xf32> -> vector<4x8x8xf32>
    "tpu.trace_stop"() : () -> ()
    %cst_9 = arith.constant 0.353553385 : f32
    %36 = vector.broadcast %cst_9 : f32 to vector<4x8x8xf32>
    %37 = arith.mulf %35, %36 : vector<4x8x8xf32>
    %cst_10 = arith.constant 0xFF800000 : f32
    %38 = vector.shape_cast %14 : vector<1x8x8xi1> to vector<1x8x8xi1>
    %39 = vector.broadcast %38 : vector<1x8x8xi1> to vector<4x8x8xi1>
    %40 = vector.broadcast %cst_10 : f32 to vector<4x8x8xf32>
    %41 = arith.select %39, %40, %37 : vector<4x8x8xi1>, vector<4x8x8xf32>
    %cst_11 = arith.constant dense<0xFF800000> : vector<4x8xf32>
    %42 = vector.multi_reduction <maximumf>, %41, %cst_11 [2] : vector<4x8x8xf32> to vector<4x8xf32>
    %43 = vector.shape_cast %42 : vector<4x8xf32> to vector<4x8x1xf32>
    %44 = vector.broadcast %43 : vector<4x8x1xf32> to vector<4x8x8xf32>
    %45 = arith.subf %41, %44 : vector<4x8x8xf32>
    %46 = math.exp %45 : vector<4x8x8xf32>
    "tpu.trace_start"() <{level = 10 : i32, message = "gqk,gkd->gqd"}> : () -> ()
    %cst_12 = arith.constant dense<0.000000e+00> : vector<4x8x8xf32>
    %47 = tpu.matmul %46, %34, %cst_12 {dimension_numbers = #tpu.dot_dimension_numbers<[2], [1], [1], [2], [0, 0, 0, 1, 1, 2], [0], [0]>} : vector<4x8x8xf32>, vector<4x8x8xf32>, vector<4x8x8xf32> -> vector<4x8x8xf32>
    %cst_13 = arith.constant 0xFF800000 : f32
    "tpu.trace_stop"() : () -> ()
    %48 = vector.broadcast %cst_13 : f32 to vector<4x8x1xf32>
    %cst_14 = arith.constant 0.000000e+00 : f32
    %49 = vector.broadcast %cst_14 : f32 to vector<4x8x1xf32>
    %cst_15 = arith.constant 0.000000e+00 : f32
    %50 = vector.broadcast %cst_15 : f32 to vector<4x8x8xf32>
    %c0_i32_16 = arith.constant 0 : i32
    %51 = vector.broadcast %c0_i32_16 : i32 to vector<4x8x1xi32>
    %52 = arith.cmpi eq, %31, %51 : vector<4x8x1xi32>
    %cst_17 = arith.constant 0xFF800000 : f32
    %53 = vector.shape_cast %52 : vector<4x8x1xi1> to vector<4x8x1xi1>
    %54 = vector.broadcast %53 : vector<4x8x1xi1> to vector<4x8x8xi1>
    %55 = vector.broadcast %cst_17 : f32 to vector<4x8x8xf32>
    %56 = arith.select %54, %41, %55 : vector<4x8x8xi1>, vector<4x8x8xf32>
    %cst_18 = arith.constant dense<0xFF800000> : vector<4x8xf32>
    %57 = vector.multi_reduction <maximumf>, %56, %cst_18 [2] : vector<4x8x8xf32> to vector<4x8xf32>
    %58 = vector.shape_cast %57 : vector<4x8xf32> to vector<4x8x1xf32>
    %59 = arith.maximumf %48, %58 : vector<4x8x1xf32>
    %60 = vector.broadcast %59 : vector<4x8x1xf32> to vector<4x8x8xf32>
    %61 = arith.subf %56, %60 : vector<4x8x8xf32>
    %62 = math.exp %61 : vector<4x8x8xf32>
    %63 = arith.subf %48, %59 : vector<4x8x1xf32>
    %64 = math.exp %63 : vector<4x8x1xf32>
    %65 = arith.mulf %49, %64 : vector<4x8x1xf32>
    %cst_19 = arith.constant dense<0.000000e+00> : vector<4x8xf32>
    %66 = vector.multi_reduction <add>, %62, %cst_19 [2] : vector<4x8x8xf32> to vector<4x8xf32>
    %67 = vector.shape_cast %66 : vector<4x8xf32> to vector<4x8x1xf32>
    %68 = arith.addf %65, %67 : vector<4x8x1xf32>
    %c0_i32_20 = arith.constant 0 : i32
    %69 = vector.broadcast %c0_i32_20 : i32 to vector<4x8x1xi32>
    %70 = arith.cmpi sgt, %31, %69 : vector<4x8x1xi32>
    %cst_21 = arith.constant 0x7FC00000 : f32
    %cst_22 = arith.constant 0.000000e+00 : f32
    %71 = vector.broadcast %cst_21 : f32 to vector<4x8x1xf32>
    %72 = vector.broadcast %cst_22 : f32 to vector<4x8x1xf32>
    %73 = arith.select %70, %71, %72 : vector<4x8x1xi1>, vector<4x8x1xf32>
    %74 = vector.shape_cast %52 : vector<4x8x1xi1> to vector<4x8x1xi1>
    %75 = vector.broadcast %74 : vector<4x8x1xi1> to vector<4x8x8xi1>
    %76 = vector.shape_cast %73 : vector<4x8x1xf32> to vector<4x8x1xf32>
    %77 = vector.broadcast %76 : vector<4x8x1xf32> to vector<4x8x8xf32>
    %78 = arith.select %75, %47, %77 : vector<4x8x8xi1>, vector<4x8x8xf32>
    %79 = arith.subf %78, %50 : vector<4x8x8xf32>
    %80 = arith.divf %49, %68 : vector<4x8x1xf32>
    %81 = vector.broadcast %80 : vector<4x8x1xf32> to vector<4x8x8xf32>
    %82 = arith.mulf %79, %81 : vector<4x8x8xf32>
    %83 = arith.addf %50, %82 : vector<4x8x8xf32>
    %c1_i32_23 = arith.constant 1 : i32
    %84 = vector.broadcast %c1_i32_23 : i32 to vector<4x8x1xi32>
    %85 = arith.cmpi eq, %31, %84 : vector<4x8x1xi32>
    %cst_24 = arith.constant 0xFF800000 : f32
    %86 = vector.shape_cast %85 : vector<4x8x1xi1> to vector<4x8x1xi1>
    %87 = vector.broadcast %86 : vector<4x8x1xi1> to vector<4x8x8xi1>
    %88 = vector.broadcast %cst_24 : f32 to vector<4x8x8xf32>
    %89 = arith.select %87, %41, %88 : vector<4x8x8xi1>, vector<4x8x8xf32>
    %cst_25 = arith.constant dense<0xFF800000> : vector<4x8xf32>
    %90 = vector.multi_reduction <maximumf>, %89, %cst_25 [2] : vector<4x8x8xf32> to vector<4x8xf32>
    %91 = vector.shape_cast %90 : vector<4x8xf32> to vector<4x8x1xf32>
    %92 = arith.maximumf %59, %91 : vector<4x8x1xf32>
    %93 = vector.broadcast %92 : vector<4x8x1xf32> to vector<4x8x8xf32>
    %94 = arith.subf %89, %93 : vector<4x8x8xf32>
    %95 = math.exp %94 : vector<4x8x8xf32>
    %96 = arith.subf %59, %92 : vector<4x8x1xf32>
    %97 = math.exp %96 : vector<4x8x1xf32>
    %98 = arith.mulf %68, %97 : vector<4x8x1xf32>
    %cst_26 = arith.constant dense<0.000000e+00> : vector<4x8xf32>
    %99 = vector.multi_reduction <add>, %95, %cst_26 [2] : vector<4x8x8xf32> to vector<4x8xf32>
    %100 = vector.shape_cast %99 : vector<4x8xf32> to vector<4x8x1xf32>
    %101 = arith.addf %98, %100 : vector<4x8x1xf32>
    %c1_i32_27 = arith.constant 1 : i32
    %102 = vector.broadcast %c1_i32_27 : i32 to vector<4x8x1xi32>
    %103 = arith.cmpi sgt, %31, %102 : vector<4x8x1xi32>
    %cst_28 = arith.constant 0x7FC00000 : f32
    %cst_29 = arith.constant 0.000000e+00 : f32
    %104 = vector.broadcast %cst_28 : f32 to vector<4x8x1xf32>
    %105 = vector.broadcast %cst_29 : f32 to vector<4x8x1xf32>
    %106 = arith.select %103, %104, %105 : vector<4x8x1xi1>, vector<4x8x1xf32>
    %107 = vector.shape_cast %85 : vector<4x8x1xi1> to vector<4x8x1xi1>
    %108 = vector.broadcast %107 : vector<4x8x1xi1> to vector<4x8x8xi1>
    %109 = vector.shape_cast %106 : vector<4x8x1xf32> to vector<4x8x1xf32>
    %110 = vector.broadcast %109 : vector<4x8x1xf32> to vector<4x8x8xf32>
    %111 = arith.select %108, %47, %110 : vector<4x8x8xi1>, vector<4x8x8xf32>
    %112 = arith.subf %111, %83 : vector<4x8x8xf32>
    %113 = arith.divf %68, %101 : vector<4x8x1xf32>
    %114 = vector.broadcast %113 : vector<4x8x1xf32> to vector<4x8x8xf32>
    %115 = arith.mulf %112, %114 : vector<4x8x8xf32>
    %116 = arith.addf %83, %115 : vector<4x8x8xf32>
    %117 = vector.broadcast %101 : vector<4x8x1xf32> to vector<4x8x8xf32>
    %118 = arith.divf %116, %117 : vector<4x8x8xf32>
    %119 = vector.shape_cast %118 : vector<4x8x8xf32> to vector<32x8xf32>
    %120 = vector.extract_strided_slice %7 {offsets = [0, 0, 8], sizes = [4, 8, 8], strides = [1, 1, 1]} : vector<4x8x32xf32> to vector<4x8x8xf32>
    %121 = vector.extract_strided_slice %9 {offsets = [0, 0, 8], sizes = [4, 8, 8], strides = [1, 1, 1]} : vector<4x8x32xf32> to vector<4x8x8xf32>
    %122 = vector.extract_strided_slice %11 {offsets = [0, 0, 8], sizes = [4, 8, 8], strides = [1, 1, 1]} : vector<4x8x32xf32> to vector<4x8x8xf32>
    "tpu.trace_start"() <{level = 10 : i32, message = "gqd,gkd->gqk"}> : () -> ()
    %cst_30 = arith.constant dense<0.000000e+00> : vector<4x8x8xf32>
    %123 = tpu.matmul %120, %121, %cst_30 {dimension_numbers = #tpu.dot_dimension_numbers<[2], [2], [1], [1], [0, 0, 0, 1, 1, 1], [0], [0]>} : vector<4x8x8xf32>, vector<4x8x8xf32>, vector<4x8x8xf32> -> vector<4x8x8xf32>
    "tpu.trace_stop"() : () -> ()
    %cst_31 = arith.constant 0.353553385 : f32
    %124 = vector.broadcast %cst_31 : f32 to vector<4x8x8xf32>
    %125 = arith.mulf %123, %124 : vector<4x8x8xf32>
    %cst_32 = arith.constant 0xFF800000 : f32
    %126 = vector.shape_cast %14 : vector<1x8x8xi1> to vector<1x8x8xi1>
    %127 = vector.broadcast %126 : vector<1x8x8xi1> to vector<4x8x8xi1>
    %128 = vector.broadcast %cst_32 : f32 to vector<4x8x8xf32>
    %129 = arith.select %127, %128, %125 : vector<4x8x8xi1>, vector<4x8x8xf32>
    %cst_33 = arith.constant dense<0xFF800000> : vector<4x8xf32>
    %130 = vector.multi_reduction <maximumf>, %129, %cst_33 [2] : vector<4x8x8xf32> to vector<4x8xf32>
    %131 = vector.shape_cast %130 : vector<4x8xf32> to vector<4x8x1xf32>
    %132 = vector.broadcast %131 : vector<4x8x1xf32> to vector<4x8x8xf32>
    %133 = arith.subf %129, %132 : vector<4x8x8xf32>
    %134 = math.exp %133 : vector<4x8x8xf32>
    "tpu.trace_start"() <{level = 10 : i32, message = "gqk,gkd->gqd"}> : () -> ()
    %cst_34 = arith.constant dense<0.000000e+00> : vector<4x8x8xf32>
    %135 = tpu.matmul %134, %122, %cst_34 {dimension_numbers = #tpu.dot_dimension_numbers<[2], [1], [1], [2], [0, 0, 0, 1, 1, 2], [0], [0]>} : vector<4x8x8xf32>, vector<4x8x8xf32>, vector<4x8x8xf32> -> vector<4x8x8xf32>
    %cst_35 = arith.constant 0xFF800000 : f32
    "tpu.trace_stop"() : () -> ()
    %136 = vector.broadcast %cst_35 : f32 to vector<4x8x1xf32>
    %cst_36 = arith.constant 0.000000e+00 : f32
    %137 = vector.broadcast %cst_36 : f32 to vector<4x8x1xf32>
    %cst_37 = arith.constant 0.000000e+00 : f32
    %138 = vector.broadcast %cst_37 : f32 to vector<4x8x8xf32>
    %c0_i32_38 = arith.constant 0 : i32
    %139 = vector.broadcast %c0_i32_38 : i32 to vector<4x8x1xi32>
    %140 = arith.cmpi eq, %31, %139 : vector<4x8x1xi32>
    %cst_39 = arith.constant 0xFF800000 : f32
    %141 = vector.shape_cast %140 : vector<4x8x1xi1> to vector<4x8x1xi1>
    %142 = vector.broadcast %141 : vector<4x8x1xi1> to vector<4x8x8xi1>
    %143 = vector.broadcast %cst_39 : f32 to vector<4x8x8xf32>
    %144 = arith.select %142, %129, %143 : vector<4x8x8xi1>, vector<4x8x8xf32>
    %cst_40 = arith.constant dense<0xFF800000> : vector<4x8xf32>
    %145 = vector.multi_reduction <maximumf>, %144, %cst_40 [2] : vector<4x8x8xf32> to vector<4x8xf32>
    %146 = vector.shape_cast %145 : vector<4x8xf32> to vector<4x8x1xf32>
    %147 = arith.maximumf %136, %146 : vector<4x8x1xf32>
    %148 = vector.broadcast %147 : vector<4x8x1xf32> to vector<4x8x8xf32>
    %149 = arith.subf %144, %148 : vector<4x8x8xf32>
    %150 = math.exp %149 : vector<4x8x8xf32>
    %151 = arith.subf %136, %147 : vector<4x8x1xf32>
    %152 = math.exp %151 : vector<4x8x1xf32>
    %153 = arith.mulf %137, %152 : vector<4x8x1xf32>
    %cst_41 = arith.constant dense<0.000000e+00> : vector<4x8xf32>
    %154 = vector.multi_reduction <add>, %150, %cst_41 [2] : vector<4x8x8xf32> to vector<4x8xf32>
    %155 = vector.shape_cast %154 : vector<4x8xf32> to vector<4x8x1xf32>
    %156 = arith.addf %153, %155 : vector<4x8x1xf32>
    %c0_i32_42 = arith.constant 0 : i32
    %157 = vector.broadcast %c0_i32_42 : i32 to vector<4x8x1xi32>
    %158 = arith.cmpi sgt, %31, %157 : vector<4x8x1xi32>
    %cst_43 = arith.constant 0x7FC00000 : f32
    %cst_44 = arith.constant 0.000000e+00 : f32
    %159 = vector.broadcast %cst_43 : f32 to vector<4x8x1xf32>
    %160 = vector.broadcast %cst_44 : f32 to vector<4x8x1xf32>
    %161 = arith.select %158, %159, %160 : vector<4x8x1xi1>, vector<4x8x1xf32>
    %162 = vector.shape_cast %140 : vector<4x8x1xi1> to vector<4x8x1xi1>
    %163 = vector.broadcast %162 : vector<4x8x1xi1> to vector<4x8x8xi1>
    %164 = vector.shape_cast %161 : vector<4x8x1xf32> to vector<4x8x1xf32>
    %165 = vector.broadcast %164 : vector<4x8x1xf32> to vector<4x8x8xf32>
    %166 = arith.select %163, %135, %165 : vector<4x8x8xi1>, vector<4x8x8xf32>
    %167 = arith.subf %166, %138 : vector<4x8x8xf32>
    %168 = arith.divf %137, %156 : vector<4x8x1xf32>
    %169 = vector.broadcast %168 : vector<4x8x1xf32> to vector<4x8x8xf32>
    %170 = arith.mulf %167, %169 : vector<4x8x8xf32>
    %171 = arith.addf %138, %170 : vector<4x8x8xf32>
    %c1_i32_45 = arith.constant 1 : i32
    %172 = vector.broadcast %c1_i32_45 : i32 to vector<4x8x1xi32>
    %173 = arith.cmpi eq, %31, %172 : vector<4x8x1xi32>
    %cst_46 = arith.constant 0xFF800000 : f32
    %174 = vector.shape_cast %173 : vector<4x8x1xi1> to vector<4x8x1xi1>
    %175 = vector.broadcast %174 : vector<4x8x1xi1> to vector<4x8x8xi1>
    %176 = vector.broadcast %cst_46 : f32 to vector<4x8x8xf32>
    %177 = arith.select %175, %129, %176 : vector<4x8x8xi1>, vector<4x8x8xf32>
    %cst_47 = arith.constant dense<0xFF800000> : vector<4x8xf32>
    %178 = vector.multi_reduction <maximumf>, %177, %cst_47 [2] : vector<4x8x8xf32> to vector<4x8xf32>
    %179 = vector.shape_cast %178 : vector<4x8xf32> to vector<4x8x1xf32>
    %180 = arith.maximumf %147, %179 : vector<4x8x1xf32>
    %181 = vector.broadcast %180 : vector<4x8x1xf32> to vector<4x8x8xf32>
    %182 = arith.subf %177, %181 : vector<4x8x8xf32>
    %183 = math.exp %182 : vector<4x8x8xf32>
    %184 = arith.subf %147, %180 : vector<4x8x1xf32>
    %185 = math.exp %184 : vector<4x8x1xf32>
    %186 = arith.mulf %156, %185 : vector<4x8x1xf32>
    %cst_48 = arith.constant dense<0.000000e+00> : vector<4x8xf32>
    %187 = vector.multi_reduction <add>, %183, %cst_48 [2] : vector<4x8x8xf32> to vector<4x8xf32>
    %188 = vector.shape_cast %187 : vector<4x8xf32> to vector<4x8x1xf32>
    %189 = arith.addf %186, %188 : vector<4x8x1xf32>
    %c1_i32_49 = arith.constant 1 : i32
    %190 = vector.broadcast %c1_i32_49 : i32 to vector<4x8x1xi32>
    %191 = arith.cmpi sgt, %31, %190 : vector<4x8x1xi32>
    %cst_50 = arith.constant 0x7FC00000 : f32
    %cst_51 = arith.constant 0.000000e+00 : f32
    %192 = vector.broadcast %cst_50 : f32 to vector<4x8x1xf32>
    %193 = vector.broadcast %cst_51 : f32 to vector<4x8x1xf32>
    %194 = arith.select %191, %192, %193 : vector<4x8x1xi1>, vector<4x8x1xf32>
    %195 = vector.shape_cast %173 : vector<4x8x1xi1> to vector<4x8x1xi1>
    %196 = vector.broadcast %195 : vector<4x8x1xi1> to vector<4x8x8xi1>
    %197 = vector.shape_cast %194 : vector<4x8x1xf32> to vector<4x8x1xf32>
    %198 = vector.broadcast %197 : vector<4x8x1xf32> to vector<4x8x8xf32>
    %199 = arith.select %196, %135, %198 : vector<4x8x8xi1>, vector<4x8x8xf32>
    %200 = arith.subf %199, %171 : vector<4x8x8xf32>
    %201 = arith.divf %156, %189 : vector<4x8x1xf32>
    %202 = vector.broadcast %201 : vector<4x8x1xf32> to vector<4x8x8xf32>
    %203 = arith.mulf %200, %202 : vector<4x8x8xf32>
    %204 = arith.addf %171, %203 : vector<4x8x8xf32>
    %205 = vector.broadcast %189 : vector<4x8x1xf32> to vector<4x8x8xf32>
    %206 = arith.divf %204, %205 : vector<4x8x8xf32>
    %207 = vector.shape_cast %206 : vector<4x8x8xf32> to vector<32x8xf32>
    %208 = vector.extract_strided_slice %7 {offsets = [0, 0, 16], sizes = [4, 8, 8], strides = [1, 1, 1]} : vector<4x8x32xf32> to vector<4x8x8xf32>
    %209 = vector.extract_strided_slice %9 {offsets = [0, 0, 16], sizes = [4, 8, 8], strides = [1, 1, 1]} : vector<4x8x32xf32> to vector<4x8x8xf32>
    %210 = vector.extract_strided_slice %11 {offsets = [0, 0, 16], sizes = [4, 8, 8], strides = [1, 1, 1]} : vector<4x8x32xf32> to vector<4x8x8xf32>
    "tpu.trace_start"() <{level = 10 : i32, message = "gqd,gkd->gqk"}> : () -> ()
    %cst_52 = arith.constant dense<0.000000e+00> : vector<4x8x8xf32>
    %211 = tpu.matmul %208, %209, %cst_52 {dimension_numbers = #tpu.dot_dimension_numbers<[2], [2], [1], [1], [0, 0, 0, 1, 1, 1], [0], [0]>} : vector<4x8x8xf32>, vector<4x8x8xf32>, vector<4x8x8xf32> -> vector<4x8x8xf32>
    "tpu.trace_stop"() : () -> ()
    %cst_53 = arith.constant 0.353553385 : f32
    %212 = vector.broadcast %cst_53 : f32 to vector<4x8x8xf32>
    %213 = arith.mulf %211, %212 : vector<4x8x8xf32>
    %cst_54 = arith.constant 0xFF800000 : f32
    %214 = vector.shape_cast %14 : vector<1x8x8xi1> to vector<1x8x8xi1>
    %215 = vector.broadcast %214 : vector<1x8x8xi1> to vector<4x8x8xi1>
    %216 = vector.broadcast %cst_54 : f32 to vector<4x8x8xf32>
    %217 = arith.select %215, %216, %213 : vector<4x8x8xi1>, vector<4x8x8xf32>
    %cst_55 = arith.constant dense<0xFF800000> : vector<4x8xf32>
    %218 = vector.multi_reduction <maximumf>, %217, %cst_55 [2] : vector<4x8x8xf32> to vector<4x8xf32>
    %219 = vector.shape_cast %218 : vector<4x8xf32> to vector<4x8x1xf32>
    %220 = vector.broadcast %219 : vector<4x8x1xf32> to vector<4x8x8xf32>
    %221 = arith.subf %217, %220 : vector<4x8x8xf32>
    %222 = math.exp %221 : vector<4x8x8xf32>
    "tpu.trace_start"() <{level = 10 : i32, message = "gqk,gkd->gqd"}> : () -> ()
    %cst_56 = arith.constant dense<0.000000e+00> : vector<4x8x8xf32>
    %223 = tpu.matmul %222, %210, %cst_56 {dimension_numbers = #tpu.dot_dimension_numbers<[2], [1], [1], [2], [0, 0, 0, 1, 1, 2], [0], [0]>} : vector<4x8x8xf32>, vector<4x8x8xf32>, vector<4x8x8xf32> -> vector<4x8x8xf32>
    %cst_57 = arith.constant 0xFF800000 : f32
    "tpu.trace_stop"() : () -> ()
    %224 = vector.broadcast %cst_57 : f32 to vector<4x8x1xf32>
    %cst_58 = arith.constant 0.000000e+00 : f32
    %225 = vector.broadcast %cst_58 : f32 to vector<4x8x1xf32>
    %cst_59 = arith.constant 0.000000e+00 : f32
    %226 = vector.broadcast %cst_59 : f32 to vector<4x8x8xf32>
    %c0_i32_60 = arith.constant 0 : i32
    %227 = vector.broadcast %c0_i32_60 : i32 to vector<4x8x1xi32>
    %228 = arith.cmpi eq, %31, %227 : vector<4x8x1xi32>
    %cst_61 = arith.constant 0xFF800000 : f32
    %229 = vector.shape_cast %228 : vector<4x8x1xi1> to vector<4x8x1xi1>
    %230 = vector.broadcast %229 : vector<4x8x1xi1> to vector<4x8x8xi1>
    %231 = vector.broadcast %cst_61 : f32 to vector<4x8x8xf32>
    %232 = arith.select %230, %217, %231 : vector<4x8x8xi1>, vector<4x8x8xf32>
    %cst_62 = arith.constant dense<0xFF800000> : vector<4x8xf32>
    %233 = vector.multi_reduction <maximumf>, %232, %cst_62 [2] : vector<4x8x8xf32> to vector<4x8xf32>
    %234 = vector.shape_cast %233 : vector<4x8xf32> to vector<4x8x1xf32>
    %235 = arith.maximumf %224, %234 : vector<4x8x1xf32>
    %236 = vector.broadcast %235 : vector<4x8x1xf32> to vector<4x8x8xf32>
    %237 = arith.subf %232, %236 : vector<4x8x8xf32>
    %238 = math.exp %237 : vector<4x8x8xf32>
    %239 = arith.subf %224, %235 : vector<4x8x1xf32>
    %240 = math.exp %239 : vector<4x8x1xf32>
    %241 = arith.mulf %225, %240 : vector<4x8x1xf32>
    %cst_63 = arith.constant dense<0.000000e+00> : vector<4x8xf32>
    %242 = vector.multi_reduction <add>, %238, %cst_63 [2] : vector<4x8x8xf32> to vector<4x8xf32>
    %243 = vector.shape_cast %242 : vector<4x8xf32> to vector<4x8x1xf32>
    %244 = arith.addf %241, %243 : vector<4x8x1xf32>
    %c0_i32_64 = arith.constant 0 : i32
    %245 = vector.broadcast %c0_i32_64 : i32 to vector<4x8x1xi32>
    %246 = arith.cmpi sgt, %31, %245 : vector<4x8x1xi32>
    %cst_65 = arith.constant 0x7FC00000 : f32
    %cst_66 = arith.constant 0.000000e+00 : f32
    %247 = vector.broadcast %cst_65 : f32 to vector<4x8x1xf32>
    %248 = vector.broadcast %cst_66 : f32 to vector<4x8x1xf32>
    %249 = arith.select %246, %247, %248 : vector<4x8x1xi1>, vector<4x8x1xf32>
    %250 = vector.shape_cast %228 : vector<4x8x1xi1> to vector<4x8x1xi1>
    %251 = vector.broadcast %250 : vector<4x8x1xi1> to vector<4x8x8xi1>
    %252 = vector.shape_cast %249 : vector<4x8x1xf32> to vector<4x8x1xf32>
    %253 = vector.broadcast %252 : vector<4x8x1xf32> to vector<4x8x8xf32>
    %254 = arith.select %251, %223, %253 : vector<4x8x8xi1>, vector<4x8x8xf32>
    %255 = arith.subf %254, %226 : vector<4x8x8xf32>
    %256 = arith.divf %225, %244 : vector<4x8x1xf32>
    %257 = vector.broadcast %256 : vector<4x8x1xf32> to vector<4x8x8xf32>
    %258 = arith.mulf %255, %257 : vector<4x8x8xf32>
    %259 = arith.addf %226, %258 : vector<4x8x8xf32>
    %c1_i32_67 = arith.constant 1 : i32
    %260 = vector.broadcast %c1_i32_67 : i32 to vector<4x8x1xi32>
    %261 = arith.cmpi eq, %31, %260 : vector<4x8x1xi32>
    %cst_68 = arith.constant 0xFF800000 : f32
    %262 = vector.shape_cast %261 : vector<4x8x1xi1> to vector<4x8x1xi1>
    %263 = vector.broadcast %262 : vector<4x8x1xi1> to vector<4x8x8xi1>
    %264 = vector.broadcast %cst_68 : f32 to vector<4x8x8xf32>
    %265 = arith.select %263, %217, %264 : vector<4x8x8xi1>, vector<4x8x8xf32>
    %cst_69 = arith.constant dense<0xFF800000> : vector<4x8xf32>
    %266 = vector.multi_reduction <maximumf>, %265, %cst_69 [2] : vector<4x8x8xf32> to vector<4x8xf32>
    %267 = vector.shape_cast %266 : vector<4x8xf32> to vector<4x8x1xf32>
    %268 = arith.maximumf %235, %267 : vector<4x8x1xf32>
    %269 = vector.broadcast %268 : vector<4x8x1xf32> to vector<4x8x8xf32>
    %270 = arith.subf %265, %269 : vector<4x8x8xf32>
    %271 = math.exp %270 : vector<4x8x8xf32>
    %272 = arith.subf %235, %268 : vector<4x8x1xf32>
    %273 = math.exp %272 : vector<4x8x1xf32>
    %274 = arith.mulf %244, %273 : vector<4x8x1xf32>
    %cst_70 = arith.constant dense<0.000000e+00> : vector<4x8xf32>
    %275 = vector.multi_reduction <add>, %271, %cst_70 [2] : vector<4x8x8xf32> to vector<4x8xf32>
    %276 = vector.shape_cast %275 : vector<4x8xf32> to vector<4x8x1xf32>
    %277 = arith.addf %274, %276 : vector<4x8x1xf32>
    %c1_i32_71 = arith.constant 1 : i32
    %278 = vector.broadcast %c1_i32_71 : i32 to vector<4x8x1xi32>
    %279 = arith.cmpi sgt, %31, %278 : vector<4x8x1xi32>
    %cst_72 = arith.constant 0x7FC00000 : f32
    %cst_73 = arith.constant 0.000000e+00 : f32
    %280 = vector.broadcast %cst_72 : f32 to vector<4x8x1xf32>
    %281 = vector.broadcast %cst_73 : f32 to vector<4x8x1xf32>
    %282 = arith.select %279, %280, %281 : vector<4x8x1xi1>, vector<4x8x1xf32>
    %283 = vector.shape_cast %261 : vector<4x8x1xi1> to vector<4x8x1xi1>
    %284 = vector.broadcast %283 : vector<4x8x1xi1> to vector<4x8x8xi1>
    %285 = vector.shape_cast %282 : vector<4x8x1xf32> to vector<4x8x1xf32>
    %286 = vector.broadcast %285 : vector<4x8x1xf32> to vector<4x8x8xf32>
    %287 = arith.select %284, %223, %286 : vector<4x8x8xi1>, vector<4x8x8xf32>
    %288 = arith.subf %287, %259 : vector<4x8x8xf32>
    %289 = arith.divf %244, %277 : vector<4x8x1xf32>
    %290 = vector.broadcast %289 : vector<4x8x1xf32> to vector<4x8x8xf32>
    %291 = arith.mulf %288, %290 : vector<4x8x8xf32>
    %292 = arith.addf %259, %291 : vector<4x8x8xf32>
    %293 = vector.broadcast %277 : vector<4x8x1xf32> to vector<4x8x8xf32>
    %294 = arith.divf %292, %293 : vector<4x8x8xf32>
    %295 = vector.shape_cast %294 : vector<4x8x8xf32> to vector<32x8xf32>
    %296 = vector.extract_strided_slice %7 {offsets = [0, 0, 24], sizes = [4, 8, 8], strides = [1, 1, 1]} : vector<4x8x32xf32> to vector<4x8x8xf32>
    %297 = vector.extract_strided_slice %9 {offsets = [0, 0, 24], sizes = [4, 8, 8], strides = [1, 1, 1]} : vector<4x8x32xf32> to vector<4x8x8xf32>
    %298 = vector.extract_strided_slice %11 {offsets = [0, 0, 24], sizes = [4, 8, 8], strides = [1, 1, 1]} : vector<4x8x32xf32> to vector<4x8x8xf32>
    "tpu.trace_start"() <{level = 10 : i32, message = "gqd,gkd->gqk"}> : () -> ()
    %cst_74 = arith.constant dense<0.000000e+00> : vector<4x8x8xf32>
    %299 = tpu.matmul %296, %297, %cst_74 {dimension_numbers = #tpu.dot_dimension_numbers<[2], [2], [1], [1], [0, 0, 0, 1, 1, 1], [0], [0]>} : vector<4x8x8xf32>, vector<4x8x8xf32>, vector<4x8x8xf32> -> vector<4x8x8xf32>
    "tpu.trace_stop"() : () -> ()
    %cst_75 = arith.constant 0.353553385 : f32
    %300 = vector.broadcast %cst_75 : f32 to vector<4x8x8xf32>
    %301 = arith.mulf %299, %300 : vector<4x8x8xf32>
    %cst_76 = arith.constant 0xFF800000 : f32
    %302 = vector.shape_cast %14 : vector<1x8x8xi1> to vector<1x8x8xi1>
    %303 = vector.broadcast %302 : vector<1x8x8xi1> to vector<4x8x8xi1>
    %304 = vector.broadcast %cst_76 : f32 to vector<4x8x8xf32>
    %305 = arith.select %303, %304, %301 : vector<4x8x8xi1>, vector<4x8x8xf32>
    %cst_77 = arith.constant dense<0xFF800000> : vector<4x8xf32>
    %306 = vector.multi_reduction <maximumf>, %305, %cst_77 [2] : vector<4x8x8xf32> to vector<4x8xf32>
    %307 = vector.shape_cast %306 : vector<4x8xf32> to vector<4x8x1xf32>
    %308 = vector.broadcast %307 : vector<4x8x1xf32> to vector<4x8x8xf32>
    %309 = arith.subf %305, %308 : vector<4x8x8xf32>
    %310 = math.exp %309 : vector<4x8x8xf32>
    "tpu.trace_start"() <{level = 10 : i32, message = "gqk,gkd->gqd"}> : () -> ()
    %cst_78 = arith.constant dense<0.000000e+00> : vector<4x8x8xf32>
    %311 = tpu.matmul %310, %298, %cst_78 {dimension_numbers = #tpu.dot_dimension_numbers<[2], [1], [1], [2], [0, 0, 0, 1, 1, 2], [0], [0]>} : vector<4x8x8xf32>, vector<4x8x8xf32>, vector<4x8x8xf32> -> vector<4x8x8xf32>
    %cst_79 = arith.constant 0xFF800000 : f32
    "tpu.trace_stop"() : () -> ()
    %312 = vector.broadcast %cst_79 : f32 to vector<4x8x1xf32>
    %cst_80 = arith.constant 0.000000e+00 : f32
    %313 = vector.broadcast %cst_80 : f32 to vector<4x8x1xf32>
    %cst_81 = arith.constant 0.000000e+00 : f32
    %314 = vector.broadcast %cst_81 : f32 to vector<4x8x8xf32>
    %c0_i32_82 = arith.constant 0 : i32
    %315 = vector.broadcast %c0_i32_82 : i32 to vector<4x8x1xi32>
    %316 = arith.cmpi eq, %31, %315 : vector<4x8x1xi32>
    %cst_83 = arith.constant 0xFF800000 : f32
    %317 = vector.shape_cast %316 : vector<4x8x1xi1> to vector<4x8x1xi1>
    %318 = vector.broadcast %317 : vector<4x8x1xi1> to vector<4x8x8xi1>
    %319 = vector.broadcast %cst_83 : f32 to vector<4x8x8xf32>
    %320 = arith.select %318, %305, %319 : vector<4x8x8xi1>, vector<4x8x8xf32>
    %cst_84 = arith.constant dense<0xFF800000> : vector<4x8xf32>
    %321 = vector.multi_reduction <maximumf>, %320, %cst_84 [2] : vector<4x8x8xf32> to vector<4x8xf32>
    %322 = vector.shape_cast %321 : vector<4x8xf32> to vector<4x8x1xf32>
    %323 = arith.maximumf %312, %322 : vector<4x8x1xf32>
    %324 = vector.broadcast %323 : vector<4x8x1xf32> to vector<4x8x8xf32>
    %325 = arith.subf %320, %324 : vector<4x8x8xf32>
    %326 = math.exp %325 : vector<4x8x8xf32>
    %327 = arith.subf %312, %323 : vector<4x8x1xf32>
    %328 = math.exp %327 : vector<4x8x1xf32>
    %329 = arith.mulf %313, %328 : vector<4x8x1xf32>
    %cst_85 = arith.constant dense<0.000000e+00> : vector<4x8xf32>
    %330 = vector.multi_reduction <add>, %326, %cst_85 [2] : vector<4x8x8xf32> to vector<4x8xf32>
    %331 = vector.shape_cast %330 : vector<4x8xf32> to vector<4x8x1xf32>
    %332 = arith.addf %329, %331 : vector<4x8x1xf32>
    %c0_i32_86 = arith.constant 0 : i32
    %333 = vector.broadcast %c0_i32_86 : i32 to vector<4x8x1xi32>
    %334 = arith.cmpi sgt, %31, %333 : vector<4x8x1xi32>
    %cst_87 = arith.constant 0x7FC00000 : f32
    %cst_88 = arith.constant 0.000000e+00 : f32
    %335 = vector.broadcast %cst_87 : f32 to vector<4x8x1xf32>
    %336 = vector.broadcast %cst_88 : f32 to vector<4x8x1xf32>
    %337 = arith.select %334, %335, %336 : vector<4x8x1xi1>, vector<4x8x1xf32>
    %338 = vector.shape_cast %316 : vector<4x8x1xi1> to vector<4x8x1xi1>
    %339 = vector.broadcast %338 : vector<4x8x1xi1> to vector<4x8x8xi1>
    %340 = vector.shape_cast %337 : vector<4x8x1xf32> to vector<4x8x1xf32>
    %341 = vector.broadcast %340 : vector<4x8x1xf32> to vector<4x8x8xf32>
    %342 = arith.select %339, %311, %341 : vector<4x8x8xi1>, vector<4x8x8xf32>
    %343 = arith.subf %342, %314 : vector<4x8x8xf32>
    %344 = arith.divf %313, %332 : vector<4x8x1xf32>
    %345 = vector.broadcast %344 : vector<4x8x1xf32> to vector<4x8x8xf32>
    %346 = arith.mulf %343, %345 : vector<4x8x8xf32>
    %347 = arith.addf %314, %346 : vector<4x8x8xf32>
    %c1_i32_89 = arith.constant 1 : i32
    %348 = vector.broadcast %c1_i32_89 : i32 to vector<4x8x1xi32>
    %349 = arith.cmpi eq, %31, %348 : vector<4x8x1xi32>
    %cst_90 = arith.constant 0xFF800000 : f32
    %350 = vector.shape_cast %349 : vector<4x8x1xi1> to vector<4x8x1xi1>
    %351 = vector.broadcast %350 : vector<4x8x1xi1> to vector<4x8x8xi1>
    %352 = vector.broadcast %cst_90 : f32 to vector<4x8x8xf32>
    %353 = arith.select %351, %305, %352 : vector<4x8x8xi1>, vector<4x8x8xf32>
    %cst_91 = arith.constant dense<0xFF800000> : vector<4x8xf32>
    %354 = vector.multi_reduction <maximumf>, %353, %cst_91 [2] : vector<4x8x8xf32> to vector<4x8xf32>
    %355 = vector.shape_cast %354 : vector<4x8xf32> to vector<4x8x1xf32>
    %356 = arith.maximumf %323, %355 : vector<4x8x1xf32>
    %357 = vector.broadcast %356 : vector<4x8x1xf32> to vector<4x8x8xf32>
    %358 = arith.subf %353, %357 : vector<4x8x8xf32>
    %359 = math.exp %358 : vector<4x8x8xf32>
    %360 = arith.subf %323, %356 : vector<4x8x1xf32>
    %361 = math.exp %360 : vector<4x8x1xf32>
    %362 = arith.mulf %332, %361 : vector<4x8x1xf32>
    %cst_92 = arith.constant dense<0.000000e+00> : vector<4x8xf32>
    %363 = vector.multi_reduction <add>, %359, %cst_92 [2] : vector<4x8x8xf32> to vector<4x8xf32>
    %364 = vector.shape_cast %363 : vector<4x8xf32> to vector<4x8x1xf32>
    %365 = arith.addf %362, %364 : vector<4x8x1xf32>
    %c1_i32_93 = arith.constant 1 : i32
    %366 = vector.broadcast %c1_i32_93 : i32 to vector<4x8x1xi32>
    %367 = arith.cmpi sgt, %31, %366 : vector<4x8x1xi32>
    %cst_94 = arith.constant 0x7FC00000 : f32
    %cst_95 = arith.constant 0.000000e+00 : f32
    %368 = vector.broadcast %cst_94 : f32 to vector<4x8x1xf32>
    %369 = vector.broadcast %cst_95 : f32 to vector<4x8x1xf32>
    %370 = arith.select %367, %368, %369 : vector<4x8x1xi1>, vector<4x8x1xf32>
    %371 = vector.shape_cast %349 : vector<4x8x1xi1> to vector<4x8x1xi1>
    %372 = vector.broadcast %371 : vector<4x8x1xi1> to vector<4x8x8xi1>
    %373 = vector.shape_cast %370 : vector<4x8x1xf32> to vector<4x8x1xf32>
    %374 = vector.broadcast %373 : vector<4x8x1xf32> to vector<4x8x8xf32>
    %375 = arith.select %372, %311, %374 : vector<4x8x8xi1>, vector<4x8x8xf32>
    %376 = arith.subf %375, %347 : vector<4x8x8xf32>
    %377 = arith.divf %332, %365 : vector<4x8x1xf32>
    %378 = vector.broadcast %377 : vector<4x8x1xf32> to vector<4x8x8xf32>
    %379 = arith.mulf %376, %378 : vector<4x8x8xf32>
    %380 = arith.addf %347, %379 : vector<4x8x8xf32>
    %381 = vector.broadcast %365 : vector<4x8x1xf32> to vector<4x8x8xf32>
    %382 = arith.divf %380, %381 : vector<4x8x8xf32>
    %383 = vector.shape_cast %382 : vector<4x8x8xf32> to vector<32x8xf32>
    %384 = tpu.concatenate %119, %207, %295, %383 in 1 : vector<32x8xf32>, vector<32x8xf32>, vector<32x8xf32>, vector<32x8xf32> -> vector<32x32xf32>
    %c0_96 = arith.constant 0 : index
    %c0_97 = arith.constant 0 : index
    %385 = vector.load %arg4[%c0_96, %c0_97] : memref<32x32xf32, #tpu.memory_space<vmem>>, vector<32x32xf32>
    %cst_98 = arith.constant dense<0.000000e+00> : vector<32x32xf32>
    %386 = tpu.matmul %384, %385, %cst_98 {dimension_numbers = #tpu.dot_dimension_numbers<[1], [0], [0], [1], [0, 0, 1, 1], [], []>} : vector<32x32xf32>, vector<32x32xf32>, vector<32x32xf32> -> vector<32x32xf32>
    %c0_99 = arith.constant 0 : index
    %c0_100 = arith.constant 0 : index
    %387 = vector.load %arg5[%c0_99, %c0_100] : memref<1x32xf32, #tpu.memory_space<vmem>>, vector<1x32xf32>
    %388 = vector.broadcast %387 : vector<1x32xf32> to vector<32x32xf32>
    %389 = arith.addf %386, %388 : vector<32x32xf32>
    %c0_101 = arith.constant 0 : index
    %c0_102 = arith.constant 0 : index
    %390 = vector.load %arg6[%c0_101, %c0_102] : memref<32x32xf32, #tpu.memory_space<vmem>>, vector<32x32xf32>
    tpu.vector_store %arg6[%c0_101, %c0_102], %389 {strides = array<i32>} : memref<32x32xf32, #tpu.memory_space<vmem>>, vector<32x32xf32>,
    return
  }
  func.func @transform_0(%arg0: i32) -> (i32, i32) {
    %c0_i32 = arith.constant 0 : i32
    %c0_i32_0 = arith.constant 0 : i32
    %c0_i32_1 = arith.constant 0 : i32
    return %c0_i32, %c0_i32_0 : i32, i32
  }
  func.func @transform_1(%arg0: i32) -> (i32, i32) {
    %c0_i32 = arith.constant 0 : i32
    %c0_i32_0 = arith.constant 0 : i32
    %c0_i32_1 = arith.constant 0 : i32
    return %c0_i32, %c0_i32_0 : i32, i32
  }
  func.func @transform_2(%arg0: i32) -> (i32, i32) {
    %c0_i32 = arith.constant 0 : i32
    %c0_i32_0 = arith.constant 0 : i32
    %c0_i32_1 = arith.constant 0 : i32
    return %c0_i32, %c0_i32_0 : i32, i32
  }
  func.func @transform_3(%arg0: i32) -> (i32, i32) {
    %c0_i32 = arith.constant 0 : i32
    %c0_i32_0 = arith.constant 0 : i32
    %c0_i32_1 = arith.constant 0 : i32
    return %c0_i32, %c0_i32_0 : i32, i32
  }
  func.func @transform_4(%arg0: i32) -> (i32, i32) {
    %c0_i32 = arith.constant 0 : i32
    %c0_i32_0 = arith.constant 0 : i32
    %c0_i32_1 = arith.constant 0 : i32
    return %c0_i32, %c0_i32_0 : i32, i32
  }
  func.func @transform_5(%arg0: i32) -> (i32, i32) {
    %c0_i32 = arith.constant 0 : i32
    %c0_i32_0 = arith.constant 0 : i32
    %c0_i32_1 = arith.constant 0 : i32
    return %c0_i32, %c0_i32_0 : i32, i32
  }
}

</mosaic_0001>

<llo_original>
// kernel: tpu_custom_call.1
$region0: #{tpu_custom_call.1}
  #allocation0 [shape = 'u32[]', space=smem, size = 0x4, offset = 0x4, fixed_abs, tag = 'smem constant byte address 0x4 - core index']
  #allocation1 [shape = 'u32[144,128]{1,0:T(1,128)}', space=vmem, size = 0x12000, scoped, tag = 'internal scratch']
  %s0 = inlined_call_operand.hbm [shape: f32[32,32], index: 0, kind: input, shape index: {}]
  %s1 = inlined_call_operand.hbm [shape: f32[32,96], index: 1, kind: input, shape index: {}]
  %s2 = inlined_call_operand.vmem [shape: f32[1,96], index: 2, kind: input, shape index: {}]
  %s3 = inlined_call_operand.hbm [shape: f32[32,32], index: 3, kind: input, shape index: {}]
  %s4 = inlined_call_operand.vmem [shape: f32[1,32], index: 4, kind: input, shape index: {}]
  %s5 = inlined_call_operand.hbm [shape: f32[32,32], index: 5, kind: output, shape index: {}]
  %s6 = sld [smem:[#allocation0]]
  $region42: #{tpu_custom_call.1} parent=0
    _
  %s8 = ssub.s32 1, %s6
  %s9 = scalar_select 0, %s8, %s6
  $region1: #{tpu_custom_call.1} parent=0
    #allocation2 [shape = 'u8[16384]{0}', space=vmem, size = 0x4000, scoped, tag = 'input window, operand 0, single buffered']
    #allocation3 [shape = 's32[1]{0}', space=sflag, size = 0x4, scoped, tag = 'scoped memory for tpu_custom_call.1']
    #allocation4 [shape = 's32[1]{0}', space=sflag, size = 0x4, scoped, tag = 'scoped memory for tpu_custom_call.1']
    #allocation5 [shape = 'u8[16384]{0}', space=vmem, size = 0x4000, scoped, tag = 'input window, operand 1, single buffered']
    #allocation6 [shape = 's32[1]{0}', space=sflag, size = 0x4, scoped, tag = 'scoped memory for tpu_custom_call.1']
    #allocation7 [shape = 'u8[16384]{0}', space=vmem, size = 0x4000, scoped, tag = 'input window, operand 3, single buffered']
    #allocation8 [shape = 'u8[16384]{0}', space=vmem, size = 0x4000, scoped, tag = 'output window, operand 0, single buffered']
    %10 = vsyncpa [#allocation3], 0
    %11 = vsyncpa [#allocation6], 0
    %12 = vsyncpa [#allocation4], 0
    // Predicated region
    $region2: #{tpu_custom_call.1} parent=1 // pred_check
      _
    $region3: #{tpu_custom_call.1} parent=1 // pred_check_branch
      %14 = sbr.rel (0) target = $region5
    $region4: #{tpu_custom_call.1} parent=1 // pred_region
      %s16 = ssub.s32 512, 512
      %17 = vsyncadd [#allocation3], %s16
      %s18 = sshll.u32 [#allocation2], 4
      %s19 = int_to_ptr.vmem [resolvable:$true] %s18
      %24 = dma.hbm_to_vmem [thread:$0]  %s0, 512, %s19, [#allocation3], 128, 128, 8
    $region5: #{tpu_custom_call.1} parent=1 // pred_fallthru
      _
    // Predicated region
    $region6: #{tpu_custom_call.1} parent=1 // pred_check
      _
    $region7: #{tpu_custom_call.1} parent=1 // pred_check_branch
      %26 = sbr.rel (0) target = $region9
    $region8: #{tpu_custom_call.1} parent=1 // pred_region
      %s28 = ssub.s32 512, 512
      %29 = vsyncadd [#allocation6], %s28
      %s30 = sshll.u32 [#allocation5], 4
      %s31 = int_to_ptr.vmem [resolvable:$true] %s30
      %36 = dma.hbm_to_vmem [thread:$0]  %s1, 512, %s31, [#allocation6], 128, 128, 8
    $region9: #{tpu_custom_call.1} parent=1 // pred_fallthru
      _
    // Predicated region
    $region10: #{tpu_custom_call.1} parent=1 // pred_check
      _
    $region11: #{tpu_custom_call.1} parent=1 // pred_check_branch
      %38 = sbr.rel (0) target = $region13
    $region12: #{tpu_custom_call.1} parent=1 // pred_region
      _
    $region13: #{tpu_custom_call.1} parent=1 // pred_fallthru
      _
    // Predicated region
    $region14: #{tpu_custom_call.1} parent=1 // pred_check
      _
    $region15: #{tpu_custom_call.1} parent=1 // pred_check_branch
      %40 = sbr.rel (0) target = $region17
    $region16: #{tpu_custom_call.1} parent=1 // pred_region
      %s42 = ssub.s32 512, 512
      %43 = vsyncadd [#allocation6], %s42
      %s44 = sshll.u32 [#allocation7], 4
      %s45 = int_to_ptr.vmem [resolvable:$true] %s44
      %50 = dma.hbm_to_vmem [thread:$0]  %s3, 512, %s45, [#allocation6], 128, 128, 8
    $region17: #{tpu_custom_call.1} parent=1 // pred_fallthru
      _
    // Predicated region
    $region18: #{tpu_custom_call.1} parent=1 // pred_check
      _
    $region19: #{tpu_custom_call.1} parent=1 // pred_check_branch
      %52 = sbr.rel (0) target = $region21
    $region20: #{tpu_custom_call.1} parent=1 // pred_region
      _
    $region21: #{tpu_custom_call.1} parent=1 // pred_fallthru
      _
    // Predicated region
    $region22: #{tpu_custom_call.1} parent=1 // pred_check
      _
    $region23: #{tpu_custom_call.1} parent=1 // pred_check_branch
      %54 = sbr.rel (0) target = $region25
    $region24: #{tpu_custom_call.1} parent=1 // pred_region
      %55 = dma.done [#allocation3], 512
    $region25: #{tpu_custom_call.1} parent=1 // pred_fallthru
      _
    // Predicated region
    $region26: #{tpu_custom_call.1} parent=1 // pred_check
      _
    $region27: #{tpu_custom_call.1} parent=1 // pred_check_branch
      %57 = sbr.rel (0) target = $region29
    $region28: #{tpu_custom_call.1} parent=1 // pred_region
      %58 = dma.done [#allocation6], 512
    $region29: #{tpu_custom_call.1} parent=1 // pred_fallthru
      _
    // Predicated region
    $region30: #{tpu_custom_call.1} parent=1 // pred_check
      _
    $region31: #{tpu_custom_call.1} parent=1 // pred_check_branch
      %60 = sbr.rel (0) target = $region33
    $region32: #{tpu_custom_call.1} parent=1 // pred_region
      %61 = dma.done [#allocation6], 512
    $region33: #{tpu_custom_call.1} parent=1 // pred_fallthru
      _
    %v62 = vld [vmem:[#allocation2] sm:$0xff]
    %v63 = vld [vmem:[#allocation2 + $0x8] sm:$0xff]
    %v64 = vld [vmem:[#allocation2 + $0x10] sm:$0xff]
    %v65 = vld [vmem:[#allocation2 + $0x18] sm:$0xff]
    %v66 = vld [vmem:[#allocation5] sm:$0xff]
    %v67 = vld [vmem:[#allocation5 + $0x8] sm:$0xff]
    %v68 = vld [vmem:[#allocation5 + $0x10] sm:$0xff]
    %v69 = vld [vmem:[#allocation5 + $0x18] sm:$0xff]
    %v70 = vld [vmem:[%s2] sm:$0x1]
    %v72 = vlaneseq
    %v73 = vshrl.u32 %v72, 7
    %v74 = vsub.s32 0, %v73
    %v75 = vrot.slane %v70, %v74
    %vm77 = vcmask 261120
    %v79 = vsel %vm77, %v62, 0
    %v82 = vsel %vm77, %v63, 0
    %v85 = vsel %vm77, %v64, 0
    %v88 = vsel %vm77, %v65, 0
    %90 = vmatprep.subr.mxu0 0.0
    %91 = vmatpush1.msra.mxu0 %v66
    %92 = vmatprep.subr.mxu0 0.0
    %93 = vmatpush1.msra.mxu0 %v67
    %94 = vmatprep.subr.mxu0 0.0
    %95 = vmatpush1.msra.mxu0 %v68
    %96 = vmatprep.subr.mxu0 0.0
    %97 = vmatpush1.msra.mxu0 %v69
    %98 = vmatprep.subr.mxu0 0.0
    %99 = vmatpush1.msra.mxu0 0.0
    %100 = vmatprep.subr.mxu0 0.0
    %101 = vmatpush1.msra.mxu0 0.0
    %102 = vmatprep.subr.mxu0 0.0
    %103 = vmatpush1.msra.mxu0 0.0
    %104 = vmatprep.subr.mxu0 0.0
    %105 = vmatpush1.msra.mxu0 0.0
    %106 = vmatprep.subr.mxu0 0.0
    %107 = vmatpush1.msra.mxu0 0.0
    %108 = vmatprep.subr.mxu0 0.0
    %109 = vmatpush1.msra.mxu0 0.0
    %110 = vmatprep.subr.mxu0 0.0
    %111 = vmatpush1.msra.mxu0 0.0
    %112 = vmatprep.subr.mxu0 0.0
    %113 = vmatpush1.msra.mxu0 0.0
    %114 = vmatprep.subr.mxu0 0.0
    %115 = vmatpush1.msra.mxu0 0.0
    %116 = vmatprep.subr.mxu0 0.0
    %117 = vmatpush1.msra.mxu0 0.0
    %118 = vmatprep.subr.mxu0 0.0
    %119 = vmatpush1.msra.mxu0 0.0
    %120 = vmatprep.subr.mxu0 0.0
    %121 = vmatpush1.msra.mxu0 0.0
    %122 = vmatprep.subr.mxu0 0.0
    %123 = vmatpush1.msra.mxu0 0.0
    %124 = vmatprep.subr.mxu0 0.0
    %125 = vmatpush1.msra.mxu0 0.0
    %126 = vmatprep.subr.mxu0 0.0
    %127 = vmatpush1.msra.mxu0 0.0
    %128 = vmatprep.subr.mxu0 0.0
    %129 = vmatpush1.msra.mxu0 0.0
    %130 = vmatprep.subr.mxu0 0.0
    %131 = vmatpush1.msra.mxu0 0.0
    %132 = vmatprep.subr.mxu0 0.0
    %133 = vmatpush1.msra.mxu0 0.0
    %134 = vmatprep.subr.mxu0 0.0
    %135 = vmatpush1.msra.mxu0 0.0
    %136 = vmatprep.subr.mxu0 0.0
    %137 = vmatpush1.msra.mxu0 0.0
    %138 = vmatprep.subr.mxu0 0.0
    %139 = vmatpush1.msra.mxu0 0.0
    %140 = vmatprep.subr.mxu0 0.0
    %141 = vmatpush1.msra.mxu0 0.0
    %142 = vmatprep.subr.mxu0 0.0
    %143 = vmatpush1.msra.mxu0 0.0
    %144 = vmatprep.subr.mxu0 0.0
    %145 = vmatpush1.msra.mxu0 0.0
    %146 = vmatprep.subr.mxu0 0.0
    %147 = vmatpush1.msra.mxu0 0.0
    %148 = vmatprep.subr.mxu0 0.0
    %149 = vmatpush1.msra.mxu0 0.0
    %150 = vmatprep.subr.mxu0 0.0
    %151 = vmatpush1.msra.mxu0 0.0
    %152 = vmatprep.subr.mxu0 0.0
    %153 = vmatpush1.msra.mxu0 0.0
    %154 = vmatprep.mubr.f32.mxu0 0.0
    %155 = vmatmul.mubr.f32.gmra.mrb[0].mxu0 %v79
    %v156 = vpop.f32.mrb[0].mxu0
    %v157 = vadd.f32 %v75, %v156
    %v158 = vpop.f32.mrb[0].mxu0
    %159 = vmatprep.mubr.f32.mxu0 0.0
    %160 = vmatmul.mubr.f32.gmra.mrb[0].mxu0 %v82
    %v161 = vpop.f32.mrb[0].mxu0
    %v162 = vadd.f32 %v75, %v161
    %v163 = vpop.f32.mrb[0].mxu0
    %164 = vmatprep.mubr.f32.mxu0 0.0
    %165 = vmatmul.mubr.f32.gmra.mrb[0].mxu0 %v85
    %v166 = vpop.f32.mrb[0].mxu0
    %v167 = vadd.f32 %v75, %v166
    %v168 = vpop.f32.mrb[0].mxu0
    %169 = vmatprep.mubr.f32.mxu0 0.0
    %170 = vmatmul.mubr.f32.gmra.mrb[0].mxu0 %v88
    %v171 = vpop.f32.mrb[0].mxu0
    %v172 = vadd.f32 %v75, %v171
    %v173 = vpop.f32.mrb[0].mxu0
    %174 = vdwg.mxu0
    %v175 = vlaneseq
    %v176 = vshrl.u32 %v175, 7
    %v177 = vlaneseq
    %v178 = vand.u32 %v177, 127
    %vm179 = vcmp.gt.s32.totalorder %v178, %v176
    %181 = vrot.lane.b32.xlu0 %v157, 96
    %v182 = vpop.permute.xlu0 %181
    %vm183 = vcmask 64512
    %v184 = vsel %vm183, %v157, 0
    %v186 = vsel %vm183, %v182, 0
    %188 = vmatprep.subr.mxu0 0.0
    %189 = vmatpush1.xpose.msra.mxu0 %v186
    %190 = vmatprep.subr.mxu0 0.0
    %191 = vmatpush1.xpose.msra.mxu0 0.0
    %192 = vmatprep.subr.mxu0 0.0
    %193 = vmatpush1.xpose.msra.mxu0 0.0
    %194 = vmatprep.subr.mxu0 0.0
    %195 = vmatpush1.xpose.msra.mxu0 0.0
    %196 = vmatprep.subr.mxu0 0.0
    %197 = vmatpush1.xpose.msra.mxu0 0.0
    %198 = vmatprep.subr.mxu0 0.0
    %199 = vmatpush1.xpose.msra.mxu0 0.0
    %200 = vmatprep.subr.mxu0 0.0
    %201 = vmatpush1.xpose.msra.mxu0 0.0
    %202 = vmatprep.subr.mxu0 0.0
    %203 = vmatpush1.xpose.msra.mxu0 0.0
    %204 = vmatprep.subr.mxu0 0.0
    %205 = vmatpush1.xpose.msra.mxu0 0.0
    %206 = vmatprep.subr.mxu0 0.0
    %207 = vmatpush1.xpose.msra.mxu0 0.0
    %208 = vmatprep.subr.mxu0 0.0
    %209 = vmatpush1.xpose.msra.mxu0 0.0
    %210 = vmatprep.subr.mxu0 0.0
    %211 = vmatpush1.xpose.msra.mxu0 0.0
    %212 = vmatprep.subr.mxu0 0.0
    %213 = vmatpush1.xpose.msra.mxu0 0.0
    %214 = vmatprep.subr.mxu0 0.0
    %215 = vmatpush1.xpose.msra.mxu0 0.0
    %216 = vmatprep.subr.mxu0 0.0
    %217 = vmatpush1.xpose.msra.mxu0 0.0
    %218 = vmatprep.subr.mxu0 0.0
    %219 = vmatpush1.xpose.msra.mxu0 0.0
    %220 = vmatprep.subr.mxu0 0.0
    %221 = vmatpush1.xpose.msra.mxu0 0.0
    %222 = vmatprep.subr.mxu0 0.0
    %223 = vmatpush1.xpose.msra.mxu0 0.0
    %224 = vmatprep.subr.mxu0 0.0
    %225 = vmatpush1.xpose.msra.mxu0 0.0
    %226 = vmatprep.subr.mxu0 0.0
    %227 = vmatpush1.xpose.msra.mxu0 0.0
    %228 = vmatprep.subr.mxu0 0.0
    %229 = vmatpush1.xpose.msra.mxu0 0.0
    %230 = vmatprep.subr.mxu0 0.0
    %231 = vmatpush1.xpose.msra.mxu0 0.0
    %232 = vmatprep.subr.mxu0 0.0
    %233 = vmatpush1.xpose.msra.mxu0 0.0
    %234 = vmatprep.subr.mxu0 0.0
    %235 = vmatpush1.xpose.msra.mxu0 0.0
    %236 = vmatprep.subr.mxu0 0.0
    %237 = vmatpush1.xpose.msra.mxu0 0.0
    %238 = vmatprep.subr.mxu0 0.0
    %239 = vmatpush1.xpose.msra.mxu0 0.0
    %240 = vmatprep.subr.mxu0 0.0
    %241 = vmatpush1.xpose.msra.mxu0 0.0
    %242 = vmatprep.subr.mxu0 0.0
    %243 = vmatpush1.xpose.msra.mxu0 0.0
    %244 = vmatprep.subr.mxu0 0.0
    %245 = vmatpush1.xpose.msra.mxu0 0.0
    %246 = vmatprep.subr.mxu0 0.0
    %247 = vmatpush1.xpose.msra.mxu0 0.0
    %248 = vmatprep.subr.mxu0 0.0
    %249 = vmatpush1.xpose.msra.mxu0 0.0
    %250 = vmatprep.subr.mxu0 0.0
    %251 = vmatpush1.xpose.msra.mxu0 0.0
    %252 = vmatprep.mubr.f32.mxu0 0.0
    %253 = vmatmul.mubr.f32.gmra.mrb[0].mxu0 %v184
    %v254 = vpop.f32.mrb[0].mxu0
    %v255 = vadd.f32 0.0, %v254
    %v256 = vpop.f32.mrb[0].mxu0
    %257 = vdwg.mxu0
    %259 = vrot.lane.b32.xlu0 %v162, 96
    %v260 = vpop.permute.xlu0 %259
    %v261 = vsel %vm183, %v162, 0
    %v263 = vsel %vm183, %v260, 0
    %265 = vmatprep.subr.mxu0 0.0
    %266 = vmatpush1.xpose.msra.mxu0 %v263
    %267 = vmatprep.subr.mxu0 0.0
    %268 = vmatpush1.xpose.msra.mxu0 0.0
    %269 = vmatprep.subr.mxu0 0.0
    %270 = vmatpush1.xpose.msra.mxu0 0.0
    %271 = vmatprep.subr.mxu0 0.0
    %272 = vmatpush1.xpose.msra.mxu0 0.0
    %273 = vmatprep.subr.mxu0 0.0
    %274 = vmatpush1.xpose.msra.mxu0 0.0
    %275 = vmatprep.subr.mxu0 0.0
    %276 = vmatpush1.xpose.msra.mxu0 0.0
    %277 = vmatprep.subr.mxu0 0.0
    %278 = vmatpush1.xpose.msra.mxu0 0.0
    %279 = vmatprep.subr.mxu0 0.0
    %280 = vmatpush1.xpose.msra.mxu0 0.0
    %281 = vmatprep.subr.mxu0 0.0
    %282 = vmatpush1.xpose.msra.mxu0 0.0
    %283 = vmatprep.subr.mxu0 0.0
    %284 = vmatpush1.xpose.msra.mxu0 0.0
    %285 = vmatprep.subr.mxu0 0.0
    %286 = vmatpush1.xpose.msra.mxu0 0.0
    %287 = vmatprep.subr.mxu0 0.0
    %288 = vmatpush1.xpose.msra.mxu0 0.0
    %289 = vmatprep.subr.mxu0 0.0
    %290 = vmatpush1.xpose.msra.mxu0 0.0
    %291 = vmatprep.subr.mxu0 0.0
    %292 = vmatpush1.xpose.msra.mxu0 0.0
    %293 = vmatprep.subr.mxu0 0.0
    %294 = vmatpush1.xpose.msra.mxu0 0.0
    %295 = vmatprep.subr.mxu0 0.0
    %296 = vmatpush1.xpose.msra.mxu0 0.0
    %297 = vmatprep.subr.mxu0 0.0
    %298 = vmatpush1.xpose.msra.mxu0 0.0
    %299 = vmatprep.subr.mxu0 0.0
    %300 = vmatpush1.xpose.msra.mxu0 0.0
    %301 = vmatprep.subr.mxu0 0.0
    %302 = vmatpush1.xpose.msra.mxu0 0.0
    %303 = vmatprep.subr.mxu0 0.0
    %304 = vmatpush1.xpose.msra.mxu0 0.0
    %305 = vmatprep.subr.mxu0 0.0
    %306 = vmatpush1.xpose.msra.mxu0 0.0
    %307 = vmatprep.subr.mxu0 0.0
    %308 = vmatpush1.xpose.msra.mxu0 0.0
    %309 = vmatprep.subr.mxu0 0.0
    %310 = vmatpush1.xpose.msra.mxu0 0.0
    %311 = vmatprep.subr.mxu0 0.0
    %312 = vmatpush1.xpose.msra.mxu0 0.0
    %313 = vmatprep.subr.mxu0 0.0
    %314 = vmatpush1.xpose.msra.mxu0 0.0
    %315 = vmatprep.subr.mxu0 0.0
    %316 = vmatpush1.xpose.msra.mxu0 0.0
    %317 = vmatprep.subr.mxu0 0.0
    %318 = vmatpush1.xpose.msra.mxu0 0.0
    %319 = vmatprep.subr.mxu0 0.0
    %320 = vmatpush1.xpose.msra.mxu0 0.0
    %321 = vmatprep.subr.mxu0 0.0
    %322 = vmatpush1.xpose.msra.mxu0 0.0
    %323 = vmatprep.subr.mxu0 0.0
    %324 = vmatpush1.xpose.msra.mxu0 0.0
    %325 = vmatprep.subr.mxu0 0.0
    %326 = vmatpush1.xpose.msra.mxu0 0.0
    %327 = vmatprep.subr.mxu0 0.0
    %328 = vmatpush1.xpose.msra.mxu0 0.0
    %329 = vmatprep.mubr.f32.mxu0 0.0
    %330 = vmatmul.mubr.f32.gmra.mrb[0].mxu0 %v261
    %v331 = vpop.f32.mrb[0].mxu0
    %v332 = vadd.f32 0.0, %v331
    %v333 = vpop.f32.mrb[0].mxu0
    %334 = vdwg.mxu0
    %336 = vrot.lane.b32.xlu0 %v167, 96
    %v337 = vpop.permute.xlu0 %336
    %v338 = vsel %vm183, %v167, 0
    %v340 = vsel %vm183, %v337, 0
    %342 = vmatprep.subr.mxu0 0.0
    %343 = vmatpush1.xpose.msra.mxu0 %v340
    %344 = vmatprep.subr.mxu0 0.0
    %345 = vmatpush1.xpose.msra.mxu0 0.0
    %346 = vmatprep.subr.mxu0 0.0
    %347 = vmatpush1.xpose.msra.mxu0 0.0
    %348 = vmatprep.subr.mxu0 0.0
    %349 = vmatpush1.xpose.msra.mxu0 0.0
    %350 = vmatprep.subr.mxu0 0.0
    %351 = vmatpush1.xpose.msra.mxu0 0.0
    %352 = vmatprep.subr.mxu0 0.0
    %353 = vmatpush1.xpose.msra.mxu0 0.0
    %354 = vmatprep.subr.mxu0 0.0
    %355 = vmatpush1.xpose.msra.mxu0 0.0
    %356 = vmatprep.subr.mxu0 0.0
    %357 = vmatpush1.xpose.msra.mxu0 0.0
    %358 = vmatprep.subr.mxu0 0.0
    %359 = vmatpush1.xpose.msra.mxu0 0.0
    %360 = vmatprep.subr.mxu0 0.0
    %361 = vmatpush1.xpose.msra.mxu0 0.0
    %362 = vmatprep.subr.mxu0 0.0
    %363 = vmatpush1.xpose.msra.mxu0 0.0
    %364 = vmatprep.subr.mxu0 0.0
    %365 = vmatpush1.xpose.msra.mxu0 0.0
    %366 = vmatprep.subr.mxu0 0.0
    %367 = vmatpush1.xpose.msra.mxu0 0.0
    %368 = vmatprep.subr.mxu0 0.0
    %369 = vmatpush1.xpose.msra.mxu0 0.0
    %370 = vmatprep.subr.mxu0 0.0
    %371 = vmatpush1.xpose.msra.mxu0 0.0
    %372 = vmatprep.subr.mxu0 0.0
    %373 = vmatpush1.xpose.msra.mxu0 0.0
    %374 = vmatprep.subr.mxu0 0.0
    %375 = vmatpush1.xpose.msra.mxu0 0.0
    %376 = vmatprep.subr.mxu0 0.0
    %377 = vmatpush1.xpose.msra.mxu0 0.0
    %378 = vmatprep.subr.mxu0 0.0
    %379 = vmatpush1.xpose.msra.mxu0 0.0
    %380 = vmatprep.subr.mxu0 0.0
    %381 = vmatpush1.xpose.msra.mxu0 0.0
    %382 = vmatprep.subr.mxu0 0.0
    %383 = vmatpush1.xpose.msra.mxu0 0.0
    %384 = vmatprep.subr.mxu0 0.0
    %385 = vmatpush1.xpose.msra.mxu0 0.0
    %386 = vmatprep.subr.mxu0 0.0
    %387 = vmatpush1.xpose.msra.mxu0 0.0
    %388 = vmatprep.subr.mxu0 0.0
    %389 = vmatpush1.xpose.msra.mxu0 0.0
    %390 = vmatprep.subr.mxu0 0.0
    %391 = vmatpush1.xpose.msra.mxu0 0.0
    %392 = vmatprep.subr.mxu0 0.0
    %393 = vmatpush1.xpose.msra.mxu0 0.0
    %394 = vmatprep.subr.mxu0 0.0
    %395 = vmatpush1.xpose.msra.mxu0 0.0
    %396 = vmatprep.subr.mxu0 0.0
    %397 = vmatpush1.xpose.msra.mxu0 0.0
    %398 = vmatprep.subr.mxu0 0.0
    %399 = vmatpush1.xpose.msra.mxu0 0.0
    %400 = vmatprep.subr.mxu0 0.0
    %401 = vmatpush1.xpose.msra.mxu0 0.0
    %402 = vmatprep.subr.mxu0 0.0
    %403 = vmatpush1.xpose.msra.mxu0 0.0
    %404 = vmatprep.subr.mxu0 0.0
    %405 = vmatpush1.xpose.msra.mxu0 0.0
    %406 = vmatprep.mubr.f32.mxu0 0.0
    %407 = vmatmul.mubr.f32.gmra.mrb[0].mxu0 %v338
    %v408 = vpop.f32.mrb[0].mxu0
    %v409 = vadd.f32 0.0, %v408
    %v410 = vpop.f32.mrb[0].mxu0
    %411 = vdwg.mxu0
    %413 = vrot.lane.b32.xlu0 %v172, 96
    %v414 = vpop.permute.xlu0 %413
    %v415 = vsel %vm183, %v172, 0
    %v417 = vsel %vm183, %v414, 0
    %419 = vmatprep.subr.mxu0 0.0
    %420 = vmatpush1.xpose.msra.mxu0 %v417
    %421 = vmatprep.subr.mxu0 0.0
    %422 = vmatpush1.xpose.msra.mxu0 0.0
    %423 = vmatprep.subr.mxu0 0.0
    %424 = vmatpush1.xpose.msra.mxu0 0.0
    %425 = vmatprep.subr.mxu0 0.0
    %426 = vmatpush1.xpose.msra.mxu0 0.0
    %427 = vmatprep.subr.mxu0 0.0
    %428 = vmatpush1.xpose.msra.mxu0 0.0
    %429 = vmatprep.subr.mxu0 0.0
    %430 = vmatpush1.xpose.msra.mxu0 0.0
    %431 = vmatprep.subr.mxu0 0.0
    %432 = vmatpush1.xpose.msra.mxu0 0.0
    %433 = vmatprep.subr.mxu0 0.0
    %434 = vmatpush1.xpose.msra.mxu0 0.0
    %435 = vmatprep.subr.mxu0 0.0
    %436 = vmatpush1.xpose.msra.mxu0 0.0
    %437 = vmatprep.subr.mxu0 0.0
    %438 = vmatpush1.xpose.msra.mxu0 0.0
    %439 = vmatprep.subr.mxu0 0.0
    %440 = vmatpush1.xpose.msra.mxu0 0.0
    %441 = vmatprep.subr.mxu0 0.0
    %442 = vmatpush1.xpose.msra.mxu0 0.0
    %443 = vmatprep.subr.mxu0 0.0
    %444 = vmatpush1.xpose.msra.mxu0 0.0
    %445 = vmatprep.subr.mxu0 0.0
    %446 = vmatpush1.xpose.msra.mxu0 0.0
    %447 = vmatprep.subr.mxu0 0.0
    %448 = vmatpush1.xpose.msra.mxu0 0.0
    %449 = vmatprep.subr.mxu0 0.0
    %450 = vmatpush1.xpose.msra.mxu0 0.0
    %451 = vmatprep.subr.mxu0 0.0
    %452 = vmatpush1.xpose.msra.mxu0 0.0
    %453 = vmatprep.subr.mxu0 0.0
    %454 = vmatpush1.xpose.msra.mxu0 0.0
    %455 = vmatprep.subr.mxu0 0.0
    %456 = vmatpush1.xpose.msra.mxu0 0.0
    %457 = vmatprep.subr.mxu0 0.0
    %458 = vmatpush1.xpose.msra.mxu0 0.0
    %459 = vmatprep.subr.mxu0 0.0
    %460 = vmatpush1.xpose.msra.mxu0 0.0
    %461 = vmatprep.subr.mxu0 0.0
    %462 = vmatpush1.xpose.msra.mxu0 0.0
    %463 = vmatprep.subr.mxu0 0.0
    %464 = vmatpush1.xpose.msra.mxu0 0.0
    %465 = vmatprep.subr.mxu0 0.0
    %466 = vmatpush1.xpose.msra.mxu0 0.0
    %467 = vmatprep.subr.mxu0 0.0
    %468 = vmatpush1.xpose.msra.mxu0 0.0
    %469 = vmatprep.subr.mxu0 0.0
    %470 = vmatpush1.xpose.msra.mxu0 0.0
    %471 = vmatprep.subr.mxu0 0.0
    %472 = vmatpush1.xpose.msra.mxu0 0.0
    %473 = vmatprep.subr.mxu0 0.0
    %474 = vmatpush1.xpose.msra.mxu0 0.0
    %475 = vmatprep.subr.mxu0 0.0
    %476 = vmatpush1.xpose.msra.mxu0 0.0
    %477 = vmatprep.subr.mxu0 0.0
    %478 = vmatpush1.xpose.msra.mxu0 0.0
    %479 = vmatprep.subr.mxu0 0.0
    %480 = vmatpush1.xpose.msra.mxu0 0.0
    %481 = vmatprep.subr.mxu0 0.0
    %482 = vmatpush1.xpose.msra.mxu0 0.0
    %483 = vmatprep.mubr.f32.mxu0 0.0
    %484 = vmatmul.mubr.f32.gmra.mrb[0].mxu0 %v415
    %v485 = vpop.f32.mrb[0].mxu0
    %v486 = vadd.f32 0.0, %v485
    %v487 = vpop.f32.mrb[0].mxu0
    %488 = vdwg.mxu0
    %v489 = vmul.f32 %v255, 0.35355338
    %v490 = vmul.f32 %v332, 0.35355338
    %v491 = vmul.f32 %v409, 0.35355338
    %v492 = vmul.f32 %v486, 0.35355338
    %v493 = vsel %vm179, 1, 0
    %vm494 = vcmp.eq.s32.totalorder %v493, 1
    %v495 = vsel %vm494, -inf, %v489
    %v496 = vsel %vm494, -inf, %v490
    %v497 = vsel %vm494, -inf, %v491
    %v498 = vsel %vm494, -inf, %v492
    %v499 = vsel %vm183, %v495, -inf
    %500 = vmax.xlane.f32.xlu0 %v499
    %v501 = vpop.xlane.xlu0 %500
    %v502 = vsel %vm183, %v496, -inf
    %503 = vmax.xlane.f32.xlu0 %v502
    %v504 = vpop.xlane.xlu0 %503
    %v505 = vsel %vm183, %v497, -inf
    %506 = vmax.xlane.f32.xlu0 %v505
    %v507 = vpop.xlane.xlu0 %506
    %v508 = vsel %vm183, %v498, -inf
    %509 = vmax.xlane.f32.xlu0 %v508
    %v510 = vpop.xlane.xlu0 %509
    %v511 = vsub.f32 %v495, %v501
    %v512 = vsub.f32 %v496, %v504
    %v513 = vsub.f32 %v497, %v507
    %v514 = vsub.f32 %v498, %v510
    %v515 = vmul.f32 %v511, 1.442695
    %v516 = vpow.pop %v515
    %v517 = vmul.f32 %v512, 1.442695
    %v518 = vpow.pop %v517
    %v519 = vmul.f32 %v513, 1.442695
    %v520 = vpow.pop %v519
    %v521 = vmul.f32 %v514, 1.442695
    %v522 = vpow.pop %v521
    %523 = vrot.lane.b32.xlu0 %v157, 64
    %v524 = vpop.permute.xlu0 %523
    %v527 = vsel %vm183, %v516, 0
    %529 = vmatprep.subr.mxu0 0.0
    %530 = vmatpush1.msra.mxu0 %v524
    %531 = vmatprep.subr.mxu0 0.0
    %532 = vmatpush1.msra.mxu0 0.0
    %533 = vmatprep.subr.mxu0 0.0
    %534 = vmatpush1.msra.mxu0 0.0
    %535 = vmatprep.subr.mxu0 0.0
    %536 = vmatpush1.msra.mxu0 0.0
    %537 = vmatprep.subr.mxu0 0.0
    %538 = vmatpush1.msra.mxu0 0.0
    %539 = vmatprep.subr.mxu0 0.0
    %540 = vmatpush1.msra.mxu0 0.0
    %541 = vmatprep.subr.mxu0 0.0
    %542 = vmatpush1.msra.mxu0 0.0
    %543 = vmatprep.subr.mxu0 0.0
    %544 = vmatpush1.msra.mxu0 0.0
    %545 = vmatprep.subr.mxu0 0.0
    %546 = vmatpush1.msra.mxu0 0.0
    %547 = vmatprep.subr.mxu0 0.0
    %548 = vmatpush1.msra.mxu0 0.0
    %549 = vmatprep.subr.mxu0 0.0
    %550 = vmatpush1.msra.mxu0 0.0
    %551 = vmatprep.subr.mxu0 0.0
    %552 = vmatpush1.msra.mxu0 0.0
    %553 = vmatprep.subr.mxu0 0.0
    %554 = vmatpush1.msra.mxu0 0.0
    %555 = vmatprep.subr.mxu0 0.0
    %556 = vmatpush1.msra.mxu0 0.0
    %557 = vmatprep.subr.mxu0 0.0
    %558 = vmatpush1.msra.mxu0 0.0
    %559 = vmatprep.subr.mxu0 0.0
    %560 = vmatpush1.msra.mxu0 0.0
    %561 = vmatprep.subr.mxu0 0.0
    %562 = vmatpush1.msra.mxu0 0.0
    %563 = vmatprep.subr.mxu0 0.0
    %564 = vmatpush1.msra.mxu0 0.0
    %565 = vmatprep.subr.mxu0 0.0
    %566 = vmatpush1.msra.mxu0 0.0
    %567 = vmatprep.subr.mxu0 0.0
    %568 = vmatpush1.msra.mxu0 0.0
    %569 = vmatprep.subr.mxu0 0.0
    %570 = vmatpush1.msra.mxu0 0.0
    %571 = vmatprep.subr.mxu0 0.0
    %572 = vmatpush1.msra.mxu0 0.0
    %573 = vmatprep.subr.mxu0 0.0
    %574 = vmatpush1.msra.mxu0 0.0
    %575 = vmatprep.subr.mxu0 0.0
    %576 = vmatpush1.msra.mxu0 0.0
    %577 = vmatprep.subr.mxu0 0.0
    %578 = vmatpush1.msra.mxu0 0.0
    %579 = vmatprep.subr.mxu0 0.0
    %580 = vmatpush1.msra.mxu0 0.0
    %581 = vmatprep.subr.mxu0 0.0
    %582 = vmatpush1.msra.mxu0 0.0
    %583 = vmatprep.subr.mxu0 0.0
    %584 = vmatpush1.msra.mxu0 0.0
    %585 = vmatprep.subr.mxu0 0.0
    %586 = vmatpush1.msra.mxu0 0.0
    %587 = vmatprep.subr.mxu0 0.0
    %588 = vmatpush1.msra.mxu0 0.0
    %589 = vmatprep.subr.mxu0 0.0
    %590 = vmatpush1.msra.mxu0 0.0
    %591 = vmatprep.subr.mxu0 0.0
    %592 = vmatpush1.msra.mxu0 0.0
    %593 = vmatprep.mubr.f32.mxu0 0.0
    %594 = vmatmul.mubr.f32.gmra.mrb[0].mxu0 %v527
    %v595 = vpop.f32.mrb[0].mxu0
    %v596 = vadd.f32 0.0, %v595
    %v597 = vpop.f32.mrb[0].mxu0
    %598 = vdwg.mxu0
    %599 = vrot.lane.b32.xlu0 %v162, 64
    %v600 = vpop.permute.xlu0 %599
    %v603 = vsel %vm183, %v518, 0
    %605 = vmatprep.subr.mxu0 0.0
    %606 = vmatpush1.msra.mxu0 %v600
    %607 = vmatprep.subr.mxu0 0.0
    %608 = vmatpush1.msra.mxu0 0.0
    %609 = vmatprep.subr.mxu0 0.0
    %610 = vmatpush1.msra.mxu0 0.0
    %611 = vmatprep.subr.mxu0 0.0
    %612 = vmatpush1.msra.mxu0 0.0
    %613 = vmatprep.subr.mxu0 0.0
    %614 = vmatpush1.msra.mxu0 0.0
    %615 = vmatprep.subr.mxu0 0.0
    %616 = vmatpush1.msra.mxu0 0.0
    %617 = vmatprep.subr.mxu0 0.0
    %618 = vmatpush1.msra.mxu0 0.0
    %619 = vmatprep.subr.mxu0 0.0
    %620 = vmatpush1.msra.mxu0 0.0
    %621 = vmatprep.subr.mxu0 0.0
    %622 = vmatpush1.msra.mxu0 0.0
    %623 = vmatprep.subr.mxu0 0.0
    %624 = vmatpush1.msra.mxu0 0.0
    %625 = vmatprep.subr.mxu0 0.0
    %626 = vmatpush1.msra.mxu0 0.0
    %627 = vmatprep.subr.mxu0 0.0
    %628 = vmatpush1.msra.mxu0 0.0
    %629 = vmatprep.subr.mxu0 0.0
    %630 = vmatpush1.msra.mxu0 0.0
    %631 = vmatprep.subr.mxu0 0.0
    %632 = vmatpush1.msra.mxu0 0.0
    %633 = vmatprep.subr.mxu0 0.0
    %634 = vmatpush1.msra.mxu0 0.0
    %635 = vmatprep.subr.mxu0 0.0
    %636 = vmatpush1.msra.mxu0 0.0
    %637 = vmatprep.subr.mxu0 0.0
    %638 = vmatpush1.msra.mxu0 0.0
    %639 = vmatprep.subr.mxu0 0.0
    %640 = vmatpush1.msra.mxu0 0.0
    %641 = vmatprep.subr.mxu0 0.0
    %642 = vmatpush1.msra.mxu0 0.0
    %643 = vmatprep.subr.mxu0 0.0
    %644 = vmatpush1.msra.mxu0 0.0
    %645 = vmatprep.subr.mxu0 0.0
    %646 = vmatpush1.msra.mxu0 0.0
    %647 = vmatprep.subr.mxu0 0.0
    %648 = vmatpush1.msra.mxu0 0.0
    %649 = vmatprep.subr.mxu0 0.0
    %650 = vmatpush1.msra.mxu0 0.0
    %651 = vmatprep.subr.mxu0 0.0
    %652 = vmatpush1.msra.mxu0 0.0
    %653 = vmatprep.subr.mxu0 0.0
    %654 = vmatpush1.msra.mxu0 0.0
    %655 = vmatprep.subr.mxu0 0.0
    %656 = vmatpush1.msra.mxu0 0.0
    %657 = vmatprep.subr.mxu0 0.0
    %658 = vmatpush1.msra.mxu0 0.0
    %659 = vmatprep.subr.mxu0 0.0
    %660 = vmatpush1.msra.mxu0 0.0
    %661 = vmatprep.subr.mxu0 0.0
    %662 = vmatpush1.msra.mxu0 0.0
    %663 = vmatprep.subr.mxu0 0.0
    %664 = vmatpush1.msra.mxu0 0.0
    %665 = vmatprep.subr.mxu0 0.0
    %666 = vmatpush1.msra.mxu0 0.0
    %667 = vmatprep.subr.mxu0 0.0
    %668 = vmatpush1.msra.mxu0 0.0
    %669 = vmatprep.mubr.f32.mxu0 0.0
    %670 = vmatmul.mubr.f32.gmra.mrb[0].mxu0 %v603
    %v671 = vpop.f32.mrb[0].mxu0
    %v672 = vadd.f32 0.0, %v671
    %v673 = vpop.f32.mrb[0].mxu0
    %674 = vdwg.mxu0
    %675 = vrot.lane.b32.xlu0 %v167, 64
    %v676 = vpop.permute.xlu0 %675
    %v679 = vsel %vm183, %v520, 0
    %681 = vmatprep.subr.mxu0 0.0
    %682 = vmatpush1.msra.mxu0 %v676
    %683 = vmatprep.subr.mxu0 0.0
    %684 = vmatpush1.msra.mxu0 0.0
    %685 = vmatprep.subr.mxu0 0.0
    %686 = vmatpush1.msra.mxu0 0.0
    %687 = vmatprep.subr.mxu0 0.0
    %688 = vmatpush1.msra.mxu0 0.0
    %689 = vmatprep.subr.mxu0 0.0
    %690 = vmatpush1.msra.mxu0 0.0
    %691 = vmatprep.subr.mxu0 0.0
    %692 = vmatpush1.msra.mxu0 0.0
    %693 = vmatprep.subr.mxu0 0.0
    %694 = vmatpush1.msra.mxu0 0.0
    %695 = vmatprep.subr.mxu0 0.0
    %696 = vmatpush1.msra.mxu0 0.0
    %697 = vmatprep.subr.mxu0 0.0
    %698 = vmatpush1.msra.mxu0 0.0
    %699 = vmatprep.subr.mxu0 0.0
    %700 = vmatpush1.msra.mxu0 0.0
    %701 = vmatprep.subr.mxu0 0.0
    %702 = vmatpush1.msra.mxu0 0.0
    %703 = vmatprep.subr.mxu0 0.0
    %704 = vmatpush1.msra.mxu0 0.0
    %705 = vmatprep.subr.mxu0 0.0
    %706 = vmatpush1.msra.mxu0 0.0
    %707 = vmatprep.subr.mxu0 0.0
    %708 = vmatpush1.msra.mxu0 0.0
    %709 = vmatprep.subr.mxu0 0.0
    %710 = vmatpush1.msra.mxu0 0.0
    %711 = vmatprep.subr.mxu0 0.0
    %712 = vmatpush1.msra.mxu0 0.0
    %713 = vmatprep.subr.mxu0 0.0
    %714 = vmatpush1.msra.mxu0 0.0
    %715 = vmatprep.subr.mxu0 0.0
    %716 = vmatpush1.msra.mxu0 0.0
    %717 = vmatprep.subr.mxu0 0.0
    %718 = vmatpush1.msra.mxu0 0.0
    %719 = vmatprep.subr.mxu0 0.0
    %720 = vmatpush1.msra.mxu0 0.0
    %721 = vmatprep.subr.mxu0 0.0
    %722 = vmatpush1.msra.mxu0 0.0
    %723 = vmatprep.subr.mxu0 0.0
    %724 = vmatpush1.msra.mxu0 0.0
    %725 = vmatprep.subr.mxu0 0.0
    %726 = vmatpush1.msra.mxu0 0.0
    %727 = vmatprep.subr.mxu0 0.0
    %728 = vmatpush1.msra.mxu0 0.0
    %729 = vmatprep.subr.mxu0 0.0
    %730 = vmatpush1.msra.mxu0 0.0
    %731 = vmatprep.subr.mxu0 0.0
    %732 = vmatpush1.msra.mxu0 0.0
    %733 = vmatprep.subr.mxu0 0.0
    %734 = vmatpush1.msra.mxu0 0.0
    %735 = vmatprep.subr.mxu0 0.0
    %736 = vmatpush1.msra.mxu0 0.0
    %737 = vmatprep.subr.mxu0 0.0
    %738 = vmatpush1.msra.mxu0 0.0
    %739 = vmatprep.subr.mxu0 0.0
    %740 = vmatpush1.msra.mxu0 0.0
    %741 = vmatprep.subr.mxu0 0.0
    %742 = vmatpush1.msra.mxu0 0.0
    %743 = vmatprep.subr.mxu0 0.0
    %744 = vmatpush1.msra.mxu0 0.0
    %745 = vmatprep.mubr.f32.mxu0 0.0
    %746 = vmatmul.mubr.f32.gmra.mrb[0].mxu0 %v679
    %v747 = vpop.f32.mrb[0].mxu0
    %v748 = vadd.f32 0.0, %v747
    %v749 = vpop.f32.mrb[0].mxu0
    %750 = vdwg.mxu0
    %751 = vrot.lane.b32.xlu0 %v172, 64
    %v752 = vpop.permute.xlu0 %751
    %v755 = vsel %vm183, %v522, 0
    %757 = vmatprep.subr.mxu0 0.0
    %758 = vmatpush1.msra.mxu0 %v752
    %759 = vmatprep.subr.mxu0 0.0
    %760 = vmatpush1.msra.mxu0 0.0
    %761 = vmatprep.subr.mxu0 0.0
    %762 = vmatpush1.msra.mxu0 0.0
    %763 = vmatprep.subr.mxu0 0.0
    %764 = vmatpush1.msra.mxu0 0.0
    %765 = vmatprep.subr.mxu0 0.0
    %766 = vmatpush1.msra.mxu0 0.0
    %767 = vmatprep.subr.mxu0 0.0
    %768 = vmatpush1.msra.mxu0 0.0
    %769 = vmatprep.subr.mxu0 0.0
    %770 = vmatpush1.msra.mxu0 0.0
    %771 = vmatprep.subr.mxu0 0.0
    %772 = vmatpush1.msra.mxu0 0.0
    %773 = vmatprep.subr.mxu0 0.0
    %774 = vmatpush1.msra.mxu0 0.0
    %775 = vmatprep.subr.mxu0 0.0
    %776 = vmatpush1.msra.mxu0 0.0
    %777 = vmatprep.subr.mxu0 0.0
    %778 = vmatpush1.msra.mxu0 0.0
    %779 = vmatprep.subr.mxu0 0.0
    %780 = vmatpush1.msra.mxu0 0.0
    %781 = vmatprep.subr.mxu0 0.0
    %782 = vmatpush1.msra.mxu0 0.0
    %783 = vmatprep.subr.mxu0 0.0
    %784 = vmatpush1.msra.mxu0 0.0
    %785 = vmatprep.subr.mxu0 0.0
    %786 = vmatpush1.msra.mxu0 0.0
    %787 = vmatprep.subr.mxu0 0.0
    %788 = vmatpush1.msra.mxu0 0.0
    %789 = vmatprep.subr.mxu0 0.0
    %790 = vmatpush1.msra.mxu0 0.0
    %791 = vmatprep.subr.mxu0 0.0
    %792 = vmatpush1.msra.mxu0 0.0
    %793 = vmatprep.subr.mxu0 0.0
    %794 = vmatpush1.msra.mxu0 0.0
    %795 = vmatprep.subr.mxu0 0.0
    %796 = vmatpush1.msra.mxu0 0.0
    %797 = vmatprep.subr.mxu0 0.0
    %798 = vmatpush1.msra.mxu0 0.0
    %799 = vmatprep.subr.mxu0 0.0
    %800 = vmatpush1.msra.mxu0 0.0
    %801 = vmatprep.subr.mxu0 0.0
    %802 = vmatpush1.msra.mxu0 0.0
    %803 = vmatprep.subr.mxu0 0.0
    %804 = vmatpush1.msra.mxu0 0.0
    %805 = vmatprep.subr.mxu0 0.0
    %806 = vmatpush1.msra.mxu0 0.0
    %807 = vmatprep.subr.mxu0 0.0
    %808 = vmatpush1.msra.mxu0 0.0
    %809 = vmatprep.subr.mxu0 0.0
    %810 = vmatpush1.msra.mxu0 0.0
    %811 = vmatprep.subr.mxu0 0.0
    %812 = vmatpush1.msra.mxu0 0.0
    %813 = vmatprep.subr.mxu0 0.0
    %814 = vmatpush1.msra.mxu0 0.0
    %815 = vmatprep.subr.mxu0 0.0
    %816 = vmatpush1.msra.mxu0 0.0
    %817 = vmatprep.subr.mxu0 0.0
    %818 = vmatpush1.msra.mxu0 0.0
    %819 = vmatprep.subr.mxu0 0.0
    %820 = vmatpush1.msra.mxu0 0.0
    %821 = vmatprep.mubr.f32.mxu0 0.0
    %822 = vmatmul.mubr.f32.gmra.mrb[0].mxu0 %v755
    %v823 = vpop.f32.mrb[0].mxu0
    %v824 = vadd.f32 0.0, %v823
    %v825 = vpop.f32.mrb[0].mxu0
    %826 = vdwg.mxu0
    %v827 = vsel 1, %v495, -inf
    %v828 = vsel 0, %v496, -inf
    %v829 = vsel 1, %v497, -inf
    %v830 = vsel 0, %v498, -inf
    %v831 = vsel %vm183, %v827, -inf
    %832 = vmax.xlane.f32.xlu0 %v831
    %v833 = vpop.xlane.xlu0 %832
    %v834 = vsel %vm183, %v828, -inf
    %835 = vmax.xlane.f32.xlu0 %v834
    %v836 = vpop.xlane.xlu0 %835
    %v837 = vsel %vm183, %v829, -inf
    %838 = vmax.xlane.f32.xlu0 %v837
    %v839 = vpop.xlane.xlu0 %838
    %v840 = vsel %vm183, %v830, -inf
    %841 = vmax.xlane.f32.xlu0 %v840
    %v842 = vpop.xlane.xlu0 %841
    %v843 = vsub.f32 %v827, %v833
    %v844 = vsub.f32 %v828, %v836
    %v845 = vsub.f32 %v829, %v839
    %v846 = vsub.f32 %v830, %v842
    %v847 = vmul.f32 %v843, 1.442695
    %v848 = vpow.pop %v847
    %v849 = vmul.f32 %v844, 1.442695
    %v850 = vpow.pop %v849
    %v851 = vmul.f32 %v845, 1.442695
    %v852 = vpow.pop %v851
    %v853 = vmul.f32 %v846, 1.442695
    %v854 = vpow.pop %v853
    %v855 = vsub.f32 -inf, %v833
    %v856 = vsub.f32 -inf, %v836
    %v857 = vsub.f32 -inf, %v839
    %v858 = vsub.f32 -inf, %v842
    %v859 = vmul.f32 %v855, 1.442695
    %v860 = vpow.pop %v859
    %v861 = vmul.f32 %v856, 1.442695
    %v862 = vpow.pop %v861
    %v863 = vmul.f32 %v857, 1.442695
    %v864 = vpow.pop %v863
    %v865 = vmul.f32 %v858, 1.442695
    %v866 = vpow.pop %v865
    %v867 = vmul.f32 %v860, 0.0
    %v868 = vmul.f32 %v862, 0.0
    %v869 = vmul.f32 %v864, 0.0
    %v870 = vmul.f32 %v866, 0.0
    %v871 = vsel %vm183, %v848, 0.0
    %872 = vadd.xlane.f32.xlu0 %v871
    %v873 = vpop.xlane.xlu0 %872
    %v874 = vsel %vm183, %v850, 0.0
    %875 = vadd.xlane.f32.xlu0 %v874
    %v876 = vpop.xlane.xlu0 %875
    %v877 = vsel %vm183, %v852, 0.0
    %878 = vadd.xlane.f32.xlu0 %v877
    %v879 = vpop.xlane.xlu0 %878
    %v880 = vsel %vm183, %v854, 0.0
    %881 = vadd.xlane.f32.xlu0 %v880
    %v882 = vpop.xlane.xlu0 %881
    %v883 = vadd.f32 %v867, %v873
    %v884 = vadd.f32 %v868, %v876
    %v885 = vadd.f32 %v869, %v879
    %v886 = vadd.f32 %v870, %v882
    %v887 = vsel 1, %v596, 0.0
    %v888 = vsel 0, %v672, nan
    %v889 = vsel 1, %v748, 0.0
    %v890 = vsel 0, %v824, nan
    %v891 = vrcp.pop %v883
    %v892 = vmul.f32 0.0, %v891
    %v893 = vrcp.pop %v884
    %v894 = vmul.f32 0.0, %v893
    %v895 = vrcp.pop %v885
    %v896 = vmul.f32 0.0, %v895
    %v897 = vrcp.pop %v886
    %v898 = vmul.f32 0.0, %v897
    %v899 = vmul.f32 %v887, %v892
    %v900 = vmul.f32 %v888, %v894
    %v901 = vmul.f32 %v889, %v896
    %v902 = vmul.f32 %v890, %v898
    %v903 = vadd.f32 %v899, 0.0
    %v904 = vadd.f32 %v900, 0.0
    %v905 = vadd.f32 %v901, 0.0
    %v906 = vadd.f32 %v902, 0.0
    %v907 = vsel 0, %v495, -inf
    %v908 = vsel 1, %v496, -inf
    %v909 = vsel 0, %v497, -inf
    %v910 = vsel 1, %v498, -inf
    %v911 = vsel %vm183, %v907, -inf
    %912 = vmax.xlane.f32.xlu0 %v911
    %v913 = vpop.xlane.xlu0 %912
    %v914 = vsel %vm183, %v908, -inf
    %915 = vmax.xlane.f32.xlu0 %v914
    %v916 = vpop.xlane.xlu0 %915
    %v917 = vsel %vm183, %v909, -inf
    %918 = vmax.xlane.f32.xlu0 %v917
    %v919 = vpop.xlane.xlu0 %918
    %v920 = vsel %vm183, %v910, -inf
    %921 = vmax.xlane.f32.xlu0 %v920
    %v922 = vpop.xlane.xlu0 %921
    %v923 = vmax.f32 %v833, %v913
    %v924 = vmax.f32 %v836, %v916
    %v925 = vmax.f32 %v839, %v919
    %v926 = vmax.f32 %v842, %v922
    %v927 = vsub.f32 %v907, %v923
    %v928 = vsub.f32 %v908, %v924
    %v929 = vsub.f32 %v909, %v925
    %v930 = vsub.f32 %v910, %v926
    %v931 = vmul.f32 %v927, 1.442695
    %v932 = vpow.pop %v931
    %v933 = vmul.f32 %v928, 1.442695
    %v934 = vpow.pop %v933
    %v935 = vmul.f32 %v929, 1.442695
    %v936 = vpow.pop %v935
    %v937 = vmul.f32 %v930, 1.442695
    %v938 = vpow.pop %v937
    %v939 = vsub.f32 %v833, %v923
    %v940 = vsub.f32 %v836, %v924
    %v941 = vsub.f32 %v839, %v925
    %v942 = vsub.f32 %v842, %v926
    %v943 = vmul.f32 %v939, 1.442695
    %v944 = vpow.pop %v943
    %v945 = vmul.f32 %v940, 1.442695
    %v946 = vpow.pop %v945
    %v947 = vmul.f32 %v941, 1.442695
    %v948 = vpow.pop %v947
    %v949 = vmul.f32 %v942, 1.442695
    %v950 = vpow.pop %v949
    %v951 = vmul.f32 %v883, %v944
    %v952 = vmul.f32 %v884, %v946
    %v953 = vmul.f32 %v885, %v948
    %v954 = vmul.f32 %v886, %v950
    %v955 = vsel %vm183, %v932, 0.0
    %956 = vadd.xlane.f32.xlu0 %v955
    %v957 = vpop.xlane.xlu0 %956
    %v958 = vsel %vm183, %v934, 0.0
    %959 = vadd.xlane.f32.xlu0 %v958
    %v960 = vpop.xlane.xlu0 %959
    %v961 = vsel %vm183, %v936, 0.0
    %962 = vadd.xlane.f32.xlu0 %v961
    %v963 = vpop.xlane.xlu0 %962
    %v964 = vsel %vm183, %v938, 0.0
    %965 = vadd.xlane.f32.xlu0 %v964
    %v966 = vpop.xlane.xlu0 %965
    %v967 = vadd.f32 %v951, %v957
    %v968 = vadd.f32 %v952, %v960
    %v969 = vadd.f32 %v953, %v963
    %v970 = vadd.f32 %v954, %v966
    %v971 = vsel 0, %v596, 0.0
    %v972 = vsel 1, %v672, 0.0
    %v973 = vsel 0, %v748, 0.0
    %v974 = vsel 1, %v824, 0.0
    %v975 = vsub.f32 %v971, %v903
    %v976 = vsub.f32 %v972, %v904
    %v977 = vsub.f32 %v973, %v905
    %v978 = vsub.f32 %v974, %v906
    %v979 = vrcp.pop %v967
    %v980 = vmul.f32 %v883, %v979
    %v981 = vrcp.pop %v968
    %v982 = vmul.f32 %v884, %v981
    %v983 = vrcp.pop %v969
    %v984 = vmul.f32 %v885, %v983
    %v985 = vrcp.pop %v970
    %v986 = vmul.f32 %v886, %v985
    %v987 = vmul.f32 %v975, %v980
    %v988 = vmul.f32 %v976, %v982
    %v989 = vmul.f32 %v977, %v984
    %v990 = vmul.f32 %v978, %v986
    %v991 = vadd.f32 %v903, %v987
    %v992 = vadd.f32 %v904, %v988
    %v993 = vadd.f32 %v905, %v989
    %v994 = vadd.f32 %v906, %v990
    %v995 = vmul.f32 %v991, %v979
    %v996 = vmul.f32 %v992, %v981
    %v997 = vmul.f32 %v993, %v983
    %v998 = vmul.f32 %v994, %v985
    %999 = vrot.lane.b32.xlu0 %v157, 120
    %v1000 = vpop.permute.xlu0 %999
    %1001 = vrot.lane.b32.xlu0 %v157, 88
    %v1002 = vpop.permute.xlu0 %1001
    %v1003 = vsel %vm183, %v1000, 0
    %v1005 = vsel %vm183, %v1002, 0
    %1007 = vmatprep.subr.mxu0 0.0
    %1008 = vmatpush1.xpose.msra.mxu0 %v1005
    %1009 = vmatprep.subr.mxu0 0.0
    %1010 = vmatpush1.xpose.msra.mxu0 0.0
    %1011 = vmatprep.subr.mxu0 0.0
    %1012 = vmatpush1.xpose.msra.mxu0 0.0
    %1013 = vmatprep.subr.mxu0 0.0
    %1014 = vmatpush1.xpose.msra.mxu0 0.0
    %1015 = vmatprep.subr.mxu0 0.0
    %1016 = vmatpush1.xpose.msra.mxu0 0.0
    %1017 = vmatprep.subr.mxu0 0.0
    %1018 = vmatpush1.xpose.msra.mxu0 0.0
    %1019 = vmatprep.subr.mxu0 0.0
    %1020 = vmatpush1.xpose.msra.mxu0 0.0
    %1021 = vmatprep.subr.mxu0 0.0
    %1022 = vmatpush1.xpose.msra.mxu0 0.0
    %1023 = vmatprep.subr.mxu0 0.0
    %1024 = vmatpush1.xpose.msra.mxu0 0.0
    %1025 = vmatprep.subr.mxu0 0.0
    %1026 = vmatpush1.xpose.msra.mxu0 0.0
    %1027 = vmatprep.subr.mxu0 0.0
    %1028 = vmatpush1.xpose.msra.mxu0 0.0
    %1029 = vmatprep.subr.mxu0 0.0
    %1030 = vmatpush1.xpose.msra.mxu0 0.0
    %1031 = vmatprep.subr.mxu0 0.0
    %1032 = vmatpush1.xpose.msra.mxu0 0.0
    %1033 = vmatprep.subr.mxu0 0.0
    %1034 = vmatpush1.xpose.msra.mxu0 0.0
    %1035 = vmatprep.subr.mxu0 0.0
    %1036 = vmatpush1.xpose.msra.mxu0 0.0
    %1037 = vmatprep.subr.mxu0 0.0
    %1038 = vmatpush1.xpose.msra.mxu0 0.0
    %1039 = vmatprep.subr.mxu0 0.0
    %1040 = vmatpush1.xpose.msra.mxu0 0.0
    %1041 = vmatprep.subr.mxu0 0.0
    %1042 = vmatpush1.xpose.msra.mxu0 0.0
    %1043 = vmatprep.subr.mxu0 0.0
    %1044 = vmatpush1.xpose.msra.mxu0 0.0
    %1045 = vmatprep.subr.mxu0 0.0
    %1046 = vmatpush1.xpose.msra.mxu0 0.0
    %1047 = vmatprep.subr.mxu0 0.0
    %1048 = vmatpush1.xpose.msra.mxu0 0.0
    %1049 = vmatprep.subr.mxu0 0.0
    %1050 = vmatpush1.xpose.msra.mxu0 0.0
    %1051 = vmatprep.subr.mxu0 0.0
    %1052 = vmatpush1.xpose.msra.mxu0 0.0
    %1053 = vmatprep.subr.mxu0 0.0
    %1054 = vmatpush1.xpose.msra.mxu0 0.0
    %1055 = vmatprep.subr.mxu0 0.0
    %1056 = vmatpush1.xpose.msra.mxu0 0.0
    %1057 = vmatprep.subr.mxu0 0.0
    %1058 = vmatpush1.xpose.msra.mxu0 0.0
    %1059 = vmatprep.subr.mxu0 0.0
    %1060 = vmatpush1.xpose.msra.mxu0 0.0
    %1061 = vmatprep.subr.mxu0 0.0
    %1062 = vmatpush1.xpose.msra.mxu0 0.0
    %1063 = vmatprep.subr.mxu0 0.0
    %1064 = vmatpush1.xpose.msra.mxu0 0.0
    %1065 = vmatprep.subr.mxu0 0.0
    %1066 = vmatpush1.xpose.msra.mxu0 0.0
    %1067 = vmatprep.subr.mxu0 0.0
    %1068 = vmatpush1.xpose.msra.mxu0 0.0
    %1069 = vmatprep.subr.mxu0 0.0
    %1070 = vmatpush1.xpose.msra.mxu0 0.0
    %1071 = vmatprep.mubr.f32.mxu0 0.0
    %1072 = vmatmul.mubr.f32.gmra.mrb[0].mxu0 %v1003
    %v1073 = vpop.f32.mrb[0].mxu0
    %v1074 = vadd.f32 0.0, %v1073
    %v1075 = vpop.f32.mrb[0].mxu0
    %1076 = vdwg.mxu0
    %1077 = vrot.lane.b32.xlu0 %v162, 120
    %v1078 = vpop.permute.xlu0 %1077
    %1079 = vrot.lane.b32.xlu0 %v162, 88
    %v1080 = vpop.permute.xlu0 %1079
    %v1081 = vsel %vm183, %v1078, 0
    %v1083 = vsel %vm183, %v1080, 0
    %1085 = vmatprep.subr.mxu0 0.0
    %1086 = vmatpush1.xpose.msra.mxu0 %v1083
    %1087 = vmatprep.subr.mxu0 0.0
    %1088 = vmatpush1.xpose.msra.mxu0 0.0
    %1089 = vmatprep.subr.mxu0 0.0
    %1090 = vmatpush1.xpose.msra.mxu0 0.0
    %1091 = vmatprep.subr.mxu0 0.0
    %1092 = vmatpush1.xpose.msra.mxu0 0.0
    %1093 = vmatprep.subr.mxu0 0.0
    %1094 = vmatpush1.xpose.msra.mxu0 0.0
    %1095 = vmatprep.subr.mxu0 0.0
    %1096 = vmatpush1.xpose.msra.mxu0 0.0
    %1097 = vmatprep.subr.mxu0 0.0
    %1098 = vmatpush1.xpose.msra.mxu0 0.0
    %1099 = vmatprep.subr.mxu0 0.0
    %1100 = vmatpush1.xpose.msra.mxu0 0.0
    %1101 = vmatprep.subr.mxu0 0.0
    %1102 = vmatpush1.xpose.msra.mxu0 0.0
    %1103 = vmatprep.subr.mxu0 0.0
    %1104 = vmatpush1.xpose.msra.mxu0 0.0
    %1105 = vmatprep.subr.mxu0 0.0
    %1106 = vmatpush1.xpose.msra.mxu0 0.0
    %1107 = vmatprep.subr.mxu0 0.0
    %1108 = vmatpush1.xpose.msra.mxu0 0.0
    %1109 = vmatprep.subr.mxu0 0.0
    %1110 = vmatpush1.xpose.msra.mxu0 0.0
    %1111 = vmatprep.subr.mxu0 0.0
    %1112 = vmatpush1.xpose.msra.mxu0 0.0
    %1113 = vmatprep.subr.mxu0 0.0
    %1114 = vmatpush1.xpose.msra.mxu0 0.0
    %1115 = vmatprep.subr.mxu0 0.0
    %1116 = vmatpush1.xpose.msra.mxu0 0.0
    %1117 = vmatprep.subr.mxu0 0.0
    %1118 = vmatpush1.xpose.msra.mxu0 0.0
    %1119 = vmatprep.subr.mxu0 0.0
    %1120 = vmatpush1.xpose.msra.mxu0 0.0
    %1121 = vmatprep.subr.mxu0 0.0
    %1122 = vmatpush1.xpose.msra.mxu0 0.0
    %1123 = vmatprep.subr.mxu0 0.0
    %1124 = vmatpush1.xpose.msra.mxu0 0.0
    %1125 = vmatprep.subr.mxu0 0.0
    %1126 = vmatpush1.xpose.msra.mxu0 0.0
    %1127 = vmatprep.subr.mxu0 0.0
    %1128 = vmatpush1.xpose.msra.mxu0 0.0
    %1129 = vmatprep.subr.mxu0 0.0
    %1130 = vmatpush1.xpose.msra.mxu0 0.0
    %1131 = vmatprep.subr.mxu0 0.0
    %1132 = vmatpush1.xpose.msra.mxu0 0.0
    %1133 = vmatprep.subr.mxu0 0.0
    %1134 = vmatpush1.xpose.msra.mxu0 0.0
    %1135 = vmatprep.subr.mxu0 0.0
    %1136 = vmatpush1.xpose.msra.mxu0 0.0
    %1137 = vmatprep.subr.mxu0 0.0
    %1138 = vmatpush1.xpose.msra.mxu0 0.0
    %1139 = vmatprep.subr.mxu0 0.0
    %1140 = vmatpush1.xpose.msra.mxu0 0.0
    %1141 = vmatprep.subr.mxu0 0.0
    %1142 = vmatpush1.xpose.msra.mxu0 0.0
    %1143 = vmatprep.subr.mxu0 0.0
    %1144 = vmatpush1.xpose.msra.mxu0 0.0
    %1145 = vmatprep.subr.mxu0 0.0
    %1146 = vmatpush1.xpose.msra.mxu0 0.0
    %1147 = vmatprep.subr.mxu0 0.0
    %1148 = vmatpush1.xpose.msra.mxu0 0.0
    %1149 = vmatprep.mubr.f32.mxu0 0.0
    %1150 = vmatmul.mubr.f32.gmra.mrb[0].mxu0 %v1081
    %v1151 = vpop.f32.mrb[0].mxu0
    %v1152 = vadd.f32 0.0, %v1151
    %v1153 = vpop.f32.mrb[0].mxu0
    %1154 = vdwg.mxu0
    %1155 = vrot.lane.b32.xlu0 %v167, 120
    %v1156 = vpop.permute.xlu0 %1155
    %1157 = vrot.lane.b32.xlu0 %v167, 88
    %v1158 = vpop.permute.xlu0 %1157
    %v1159 = vsel %vm183, %v1156, 0
    %v1161 = vsel %vm183, %v1158, 0
    %1163 = vmatprep.subr.mxu0 0.0
    %1164 = vmatpush1.xpose.msra.mxu0 %v1161
    %1165 = vmatprep.subr.mxu0 0.0
    %1166 = vmatpush1.xpose.msra.mxu0 0.0
    %1167 = vmatprep.subr.mxu0 0.0
    %1168 = vmatpush1.xpose.msra.mxu0 0.0
    %1169 = vmatprep.subr.mxu0 0.0
    %1170 = vmatpush1.xpose.msra.mxu0 0.0
    %1171 = vmatprep.subr.mxu0 0.0
    %1172 = vmatpush1.xpose.msra.mxu0 0.0
    %1173 = vmatprep.subr.mxu0 0.0
    %1174 = vmatpush1.xpose.msra.mxu0 0.0
    %1175 = vmatprep.subr.mxu0 0.0
    %1176 = vmatpush1.xpose.msra.mxu0 0.0
    %1177 = vmatprep.subr.mxu0 0.0
    %1178 = vmatpush1.xpose.msra.mxu0 0.0
    %1179 = vmatprep.subr.mxu0 0.0
    %1180 = vmatpush1.xpose.msra.mxu0 0.0
    %1181 = vmatprep.subr.mxu0 0.0
    %1182 = vmatpush1.xpose.msra.mxu0 0.0
    %1183 = vmatprep.subr.mxu0 0.0
    %1184 = vmatpush1.xpose.msra.mxu0 0.0
    %1185 = vmatprep.subr.mxu0 0.0
    %1186 = vmatpush1.xpose.msra.mxu0 0.0
    %1187 = vmatprep.subr.mxu0 0.0
    %1188 = vmatpush1.xpose.msra.mxu0 0.0
    %1189 = vmatprep.subr.mxu0 0.0
    %1190 = vmatpush1.xpose.msra.mxu0 0.0
    %1191 = vmatprep.subr.mxu0 0.0
    %1192 = vmatpush1.xpose.msra.mxu0 0.0
    %1193 = vmatprep.subr.mxu0 0.0
    %1194 = vmatpush1.xpose.msra.mxu0 0.0
    %1195 = vmatprep.subr.mxu0 0.0
    %1196 = vmatpush1.xpose.msra.mxu0 0.0
    %1197 = vmatprep.subr.mxu0 0.0
    %1198 = vmatpush1.xpose.msra.mxu0 0.0
    %1199 = vmatprep.subr.mxu0 0.0
    %1200 = vmatpush1.xpose.msra.mxu0 0.0
    %1201 = vmatprep.subr.mxu0 0.0
    %1202 = vmatpush1.xpose.msra.mxu0 0.0
    %1203 = vmatprep.subr.mxu0 0.0
    %1204 = vmatpush1.xpose.msra.mxu0 0.0
    %1205 = vmatprep.subr.mxu0 0.0
    %1206 = vmatpush1.xpose.msra.mxu0 0.0
    %1207 = vmatprep.subr.mxu0 0.0
    %1208 = vmatpush1.xpose.msra.mxu0 0.0
    %1209 = vmatprep.subr.mxu0 0.0
    %1210 = vmatpush1.xpose.msra.mxu0 0.0
    %1211 = vmatprep.subr.mxu0 0.0
    %1212 = vmatpush1.xpose.msra.mxu0 0.0
    %1213 = vmatprep.subr.mxu0 0.0
    %1214 = vmatpush1.xpose.msra.mxu0 0.0
    %1215 = vmatprep.subr.mxu0 0.0
    %1216 = vmatpush1.xpose.msra.mxu0 0.0
    %1217 = vmatprep.subr.mxu0 0.0
    %1218 = vmatpush1.xpose.msra.mxu0 0.0
    %1219 = vmatprep.subr.mxu0 0.0
    %1220 = vmatpush1.xpose.msra.mxu0 0.0
    %1221 = vmatprep.subr.mxu0 0.0
    %1222 = vmatpush1.xpose.msra.mxu0 0.0
    %1223 = vmatprep.subr.mxu0 0.0
    %1224 = vmatpush1.xpose.msra.mxu0 0.0
    %1225 = vmatprep.subr.mxu0 0.0
    %1226 = vmatpush1.xpose.msra.mxu0 0.0
    %1227 = vmatprep.mubr.f32.mxu0 0.0
    %1228 = vmatmul.mubr.f32.gmra.mrb[0].mxu0 %v1159
    %v1229 = vpop.f32.mrb[0].mxu0
    %v1230 = vadd.f32 0.0, %v1229
    %v1231 = vpop.f32.mrb[0].mxu0
    %1232 = vdwg.mxu0
    %1233 = vrot.lane.b32.xlu0 %v172, 120
    %v1234 = vpop.permute.xlu0 %1233
    %1235 = vrot.lane.b32.xlu0 %v172, 88
    %v1236 = vpop.permute.xlu0 %1235
    %v1237 = vsel %vm183, %v1234, 0
    %v1239 = vsel %vm183, %v1236, 0
    %1241 = vmatprep.subr.mxu0 0.0
    %1242 = vmatpush1.xpose.msra.mxu0 %v1239
    %1243 = vmatprep.subr.mxu0 0.0
    %1244 = vmatpush1.xpose.msra.mxu0 0.0
    %1245 = vmatprep.subr.mxu0 0.0
    %1246 = vmatpush1.xpose.msra.mxu0 0.0
    %1247 = vmatprep.subr.mxu0 0.0
    %1248 = vmatpush1.xpose.msra.mxu0 0.0
    %1249 = vmatprep.subr.mxu0 0.0
    %1250 = vmatpush1.xpose.msra.mxu0 0.0
    %1251 = vmatprep.subr.mxu0 0.0
    %1252 = vmatpush1.xpose.msra.mxu0 0.0
    %1253 = vmatprep.subr.mxu0 0.0
    %1254 = vmatpush1.xpose.msra.mxu0 0.0
    %1255 = vmatprep.subr.mxu0 0.0
    %1256 = vmatpush1.xpose.msra.mxu0 0.0
    %1257 = vmatprep.subr.mxu0 0.0
    %1258 = vmatpush1.xpose.msra.mxu0 0.0
    %1259 = vmatprep.subr.mxu0 0.0
    %1260 = vmatpush1.xpose.msra.mxu0 0.0
    %1261 = vmatprep.subr.mxu0 0.0
    %1262 = vmatpush1.xpose.msra.mxu0 0.0
    %1263 = vmatprep.subr.mxu0 0.0
    %1264 = vmatpush1.xpose.msra.mxu0 0.0
    %1265 = vmatprep.subr.mxu0 0.0
    %1266 = vmatpush1.xpose.msra.mxu0 0.0
    %1267 = vmatprep.subr.mxu0 0.0
    %1268 = vmatpush1.xpose.msra.mxu0 0.0
    %1269 = vmatprep.subr.mxu0 0.0
    %1270 = vmatpush1.xpose.msra.mxu0 0.0
    %1271 = vmatprep.subr.mxu0 0.0
    %1272 = vmatpush1.xpose.msra.mxu0 0.0
    %1273 = vmatprep.subr.mxu0 0.0
    %1274 = vmatpush1.xpose.msra.mxu0 0.0
    %1275 = vmatprep.subr.mxu0 0.0
    %1276 = vmatpush1.xpose.msra.mxu0 0.0
    %1277 = vmatprep.subr.mxu0 0.0
    %1278 = vmatpush1.xpose.msra.mxu0 0.0
    %1279 = vmatprep.subr.mxu0 0.0
    %1280 = vmatpush1.xpose.msra.mxu0 0.0
    %1281 = vmatprep.subr.mxu0 0.0
    %1282 = vmatpush1.xpose.msra.mxu0 0.0
    %1283 = vmatprep.subr.mxu0 0.0
    %1284 = vmatpush1.xpose.msra.mxu0 0.0
    %1285 = vmatprep.subr.mxu0 0.0
    %1286 = vmatpush1.xpose.msra.mxu0 0.0
    %1287 = vmatprep.subr.mxu0 0.0
    %1288 = vmatpush1.xpose.msra.mxu0 0.0
    %1289 = vmatprep.subr.mxu0 0.0
    %1290 = vmatpush1.xpose.msra.mxu0 0.0
    %1291 = vmatprep.subr.mxu0 0.0
    %1292 = vmatpush1.xpose.msra.mxu0 0.0
    %1293 = vmatprep.subr.mxu0 0.0
    %1294 = vmatpush1.xpose.msra.mxu0 0.0
    %1295 = vmatprep.subr.mxu0 0.0
    %1296 = vmatpush1.xpose.msra.mxu0 0.0
    %1297 = vmatprep.subr.mxu0 0.0
    %1298 = vmatpush1.xpose.msra.mxu0 0.0
    %1299 = vmatprep.subr.mxu0 0.0
    %1300 = vmatpush1.xpose.msra.mxu0 0.0
    %1301 = vmatprep.subr.mxu0 0.0
    %1302 = vmatpush1.xpose.msra.mxu0 0.0
    %1303 = vmatprep.subr.mxu0 0.0
    %1304 = vmatpush1.xpose.msra.mxu0 0.0
    %1305 = vmatprep.mubr.f32.mxu0 0.0
    %1306 = vmatmul.mubr.f32.gmra.mrb[0].mxu0 %v1237
    %v1307 = vpop.f32.mrb[0].mxu0
    %v1308 = vadd.f32 0.0, %v1307
    %v1309 = vpop.f32.mrb[0].mxu0
    %1310 = vdwg.mxu0
    %v1311 = vmul.f32 %v1074, 0.35355338
    %v1312 = vmul.f32 %v1152, 0.35355338
    %v1313 = vmul.f32 %v1230, 0.35355338
    %v1314 = vmul.f32 %v1308, 0.35355338
    %v1315 = vsel %vm494, -inf, %v1311
    %v1316 = vsel %vm494, -inf, %v1312
    %v1317 = vsel %vm494, -inf, %v1313
    %v1318 = vsel %vm494, -inf, %v1314
    %v1319 = vsel %vm183, %v1315, -inf
    %1320 = vmax.xlane.f32.xlu0 %v1319
    %v1321 = vpop.xlane.xlu0 %1320
    %v1322 = vsel %vm183, %v1316, -inf
    %1323 = vmax.xlane.f32.xlu0 %v1322
    %v1324 = vpop.xlane.xlu0 %1323
    %v1325 = vsel %vm183, %v1317, -inf
    %1326 = vmax.xlane.f32.xlu0 %v1325
    %v1327 = vpop.xlane.xlu0 %1326
    %v1328 = vsel %vm183, %v1318, -inf
    %1329 = vmax.xlane.f32.xlu0 %v1328
    %v1330 = vpop.xlane.xlu0 %1329
    %v1331 = vsub.f32 %v1315, %v1321
    %v1332 = vsub.f32 %v1316, %v1324
    %v1333 = vsub.f32 %v1317, %v1327
    %v1334 = vsub.f32 %v1318, %v1330
    %v1335 = vmul.f32 %v1331, 1.442695
    %v1336 = vpow.pop %v1335
    %v1337 = vmul.f32 %v1332, 1.442695
    %v1338 = vpow.pop %v1337
    %v1339 = vmul.f32 %v1333, 1.442695
    %v1340 = vpow.pop %v1339
    %v1341 = vmul.f32 %v1334, 1.442695
    %v1342 = vpow.pop %v1341
    %1343 = vrot.lane.b32.xlu0 %v157, 56
    %v1344 = vpop.permute.xlu0 %1343
    %v1347 = vsel %vm183, %v1336, 0
    %1349 = vmatprep.subr.mxu0 0.0
    %1350 = vmatpush1.msra.mxu0 %v1344
    %1351 = vmatprep.subr.mxu0 0.0
    %1352 = vmatpush1.msra.mxu0 0.0
    %1353 = vmatprep.subr.mxu0 0.0
    %1354 = vmatpush1.msra.mxu0 0.0
    %1355 = vmatprep.subr.mxu0 0.0
    %1356 = vmatpush1.msra.mxu0 0.0
    %1357 = vmatprep.subr.mxu0 0.0
    %1358 = vmatpush1.msra.mxu0 0.0
    %1359 = vmatprep.subr.mxu0 0.0
    %1360 = vmatpush1.msra.mxu0 0.0
    %1361 = vmatprep.subr.mxu0 0.0
    %1362 = vmatpush1.msra.mxu0 0.0
    %1363 = vmatprep.subr.mxu0 0.0
    %1364 = vmatpush1.msra.mxu0 0.0
    %1365 = vmatprep.subr.mxu0 0.0
    %1366 = vmatpush1.msra.mxu0 0.0
    %1367 = vmatprep.subr.mxu0 0.0
    %1368 = vmatpush1.msra.mxu0 0.0
    %1369 = vmatprep.subr.mxu0 0.0
    %1370 = vmatpush1.msra.mxu0 0.0
    %1371 = vmatprep.subr.mxu0 0.0
    %1372 = vmatpush1.msra.mxu0 0.0
    %1373 = vmatprep.subr.mxu0 0.0
    %1374 = vmatpush1.msra.mxu0 0.0
    %1375 = vmatprep.subr.mxu0 0.0
    %1376 = vmatpush1.msra.mxu0 0.0
    %1377 = vmatprep.subr.mxu0 0.0
    %1378 = vmatpush1.msra.mxu0 0.0
    %1379 = vmatprep.subr.mxu0 0.0
    %1380 = vmatpush1.msra.mxu0 0.0
    %1381 = vmatprep.subr.mxu0 0.0
    %1382 = vmatpush1.msra.mxu0 0.0
    %1383 = vmatprep.subr.mxu0 0.0
    %1384 = vmatpush1.msra.mxu0 0.0
    %1385 = vmatprep.subr.mxu0 0.0
    %1386 = vmatpush1.msra.mxu0 0.0
    %1387 = vmatprep.subr.mxu0 0.0
    %1388 = vmatpush1.msra.mxu0 0.0
    %1389 = vmatprep.subr.mxu0 0.0
    %1390 = vmatpush1.msra.mxu0 0.0
    %1391 = vmatprep.subr.mxu0 0.0
    %1392 = vmatpush1.msra.mxu0 0.0
    %1393 = vmatprep.subr.mxu0 0.0
    %1394 = vmatpush1.msra.mxu0 0.0
    %1395 = vmatprep.subr.mxu0 0.0
    %1396 = vmatpush1.msra.mxu0 0.0
    %1397 = vmatprep.subr.mxu0 0.0
    %1398 = vmatpush1.msra.mxu0 0.0
    %1399 = vmatprep.subr.mxu0 0.0
    %1400 = vmatpush1.msra.mxu0 0.0
    %1401 = vmatprep.subr.mxu0 0.0
    %1402 = vmatpush1.msra.mxu0 0.0
    %1403 = vmatprep.subr.mxu0 0.0
    %1404 = vmatpush1.msra.mxu0 0.0
    %1405 = vmatprep.subr.mxu0 0.0
    %1406 = vmatpush1.msra.mxu0 0.0
    %1407 = vmatprep.subr.mxu0 0.0
    %1408 = vmatpush1.msra.mxu0 0.0
    %1409 = vmatprep.subr.mxu0 0.0
    %1410 = vmatpush1.msra.mxu0 0.0
    %1411 = vmatprep.subr.mxu0 0.0
    %1412 = vmatpush1.msra.mxu0 0.0
    %1413 = vmatprep.mubr.f32.mxu0 0.0
    %1414 = vmatmul.mubr.f32.gmra.mrb[0].mxu0 %v1347
    %v1415 = vpop.f32.mrb[0].mxu0
    %v1416 = vadd.f32 0.0, %v1415
    %v1417 = vpop.f32.mrb[0].mxu0
    %1418 = vdwg.mxu0
    %1419 = vrot.lane.b32.xlu0 %v162, 56
    %v1420 = vpop.permute.xlu0 %1419
    %v1423 = vsel %vm183, %v1338, 0
    %1425 = vmatprep.subr.mxu0 0.0
    %1426 = vmatpush1.msra.mxu0 %v1420
    %1427 = vmatprep.subr.mxu0 0.0
    %1428 = vmatpush1.msra.mxu0 0.0
    %1429 = vmatprep.subr.mxu0 0.0
    %1430 = vmatpush1.msra.mxu0 0.0
    %1431 = vmatprep.subr.mxu0 0.0
    %1432 = vmatpush1.msra.mxu0 0.0
    %1433 = vmatprep.subr.mxu0 0.0
    %1434 = vmatpush1.msra.mxu0 0.0
    %1435 = vmatprep.subr.mxu0 0.0
    %1436 = vmatpush1.msra.mxu0 0.0
    %1437 = vmatprep.subr.mxu0 0.0
    %1438 = vmatpush1.msra.mxu0 0.0
    %1439 = vmatprep.subr.mxu0 0.0
    %1440 = vmatpush1.msra.mxu0 0.0
    %1441 = vmatprep.subr.mxu0 0.0
    %1442 = vmatpush1.msra.mxu0 0.0
    %1443 = vmatprep.subr.mxu0 0.0
    %1444 = vmatpush1.msra.mxu0 0.0
    %1445 = vmatprep.subr.mxu0 0.0
    %1446 = vmatpush1.msra.mxu0 0.0
    %1447 = vmatprep.subr.mxu0 0.0
    %1448 = vmatpush1.msra.mxu0 0.0
    %1449 = vmatprep.subr.mxu0 0.0
    %1450 = vmatpush1.msra.mxu0 0.0
    %1451 = vmatprep.subr.mxu0 0.0
    %1452 = vmatpush1.msra.mxu0 0.0
    %1453 = vmatprep.subr.mxu0 0.0
    %1454 = vmatpush1.msra.mxu0 0.0
    %1455 = vmatprep.subr.mxu0 0.0
    %1456 = vmatpush1.msra.mxu0 0.0
    %1457 = vmatprep.subr.mxu0 0.0
    %1458 = vmatpush1.msra.mxu0 0.0
    %1459 = vmatprep.subr.mxu0 0.0
    %1460 = vmatpush1.msra.mxu0 0.0
    %1461 = vmatprep.subr.mxu0 0.0
    %1462 = vmatpush1.msra.mxu0 0.0
    %1463 = vmatprep.subr.mxu0 0.0
    %1464 = vmatpush1.msra.mxu0 0.0
    %1465 = vmatprep.subr.mxu0 0.0
    %1466 = vmatpush1.msra.mxu0 0.0
    %1467 = vmatprep.subr.mxu0 0.0
    %1468 = vmatpush1.msra.mxu0 0.0
    %1469 = vmatprep.subr.mxu0 0.0
    %1470 = vmatpush1.msra.mxu0 0.0
    %1471 = vmatprep.subr.mxu0 0.0
    %1472 = vmatpush1.msra.mxu0 0.0
    %1473 = vmatprep.subr.mxu0 0.0
    %1474 = vmatpush1.msra.mxu0 0.0
    %1475 = vmatprep.subr.mxu0 0.0
    %1476 = vmatpush1.msra.mxu0 0.0
    %1477 = vmatprep.subr.mxu0 0.0
    %1478 = vmatpush1.msra.mxu0 0.0
    %1479 = vmatprep.subr.mxu0 0.0
    %1480 = vmatpush1.msra.mxu0 0.0
    %1481 = vmatprep.subr.mxu0 0.0
    %1482 = vmatpush1.msra.mxu0 0.0
    %1483 = vmatprep.subr.mxu0 0.0
    %1484 = vmatpush1.msra.mxu0 0.0
    %1485 = vmatprep.subr.mxu0 0.0
    %1486 = vmatpush1.msra.mxu0 0.0
    %1487 = vmatprep.subr.mxu0 0.0
    %1488 = vmatpush1.msra.mxu0 0.0
    %1489 = vmatprep.mubr.f32.mxu0 0.0
    %1490 = vmatmul.mubr.f32.gmra.mrb[0].mxu0 %v1423
    %v1491 = vpop.f32.mrb[0].mxu0
    %v1492 = vadd.f32 0.0, %v1491
    %v1493 = vpop.f32.mrb[0].mxu0
    %1494 = vdwg.mxu0
    %1495 = vrot.lane.b32.xlu0 %v167, 56
    %v1496 = vpop.permute.xlu0 %1495
    %v1499 = vsel %vm183, %v1340, 0
    %1501 = vmatprep.subr.mxu0 0.0
    %1502 = vmatpush1.msra.mxu0 %v1496
    %1503 = vmatprep.subr.mxu0 0.0
    %1504 = vmatpush1.msra.mxu0 0.0
    %1505 = vmatprep.subr.mxu0 0.0
    %1506 = vmatpush1.msra.mxu0 0.0
    %1507 = vmatprep.subr.mxu0 0.0
    %1508 = vmatpush1.msra.mxu0 0.0
    %1509 = vmatprep.subr.mxu0 0.0
    %1510 = vmatpush1.msra.mxu0 0.0
    %1511 = vmatprep.subr.mxu0 0.0
    %1512 = vmatpush1.msra.mxu0 0.0
    %1513 = vmatprep.subr.mxu0 0.0
    %1514 = vmatpush1.msra.mxu0 0.0
    %1515 = vmatprep.subr.mxu0 0.0
    %1516 = vmatpush1.msra.mxu0 0.0
    %1517 = vmatprep.subr.mxu0 0.0
    %1518 = vmatpush1.msra.mxu0 0.0
    %1519 = vmatprep.subr.mxu0 0.0
    %1520 = vmatpush1.msra.mxu0 0.0
    %1521 = vmatprep.subr.mxu0 0.0
    %1522 = vmatpush1.msra.mxu0 0.0
    %1523 = vmatprep.subr.mxu0 0.0
    %1524 = vmatpush1.msra.mxu0 0.0
    %1525 = vmatprep.subr.mxu0 0.0
    %1526 = vmatpush1.msra.mxu0 0.0
    %1527 = vmatprep.subr.mxu0 0.0
    %1528 = vmatpush1.msra.mxu0 0.0
    %1529 = vmatprep.subr.mxu0 0.0
    %1530 = vmatpush1.msra.mxu0 0.0
    %1531 = vmatprep.subr.mxu0 0.0
    %1532 = vmatpush1.msra.mxu0 0.0
    %1533 = vmatprep.subr.mxu0 0.0
    %1534 = vmatpush1.msra.mxu0 0.0
    %1535 = vmatprep.subr.mxu0 0.0
    %1536 = vmatpush1.msra.mxu0 0.0
    %1537 = vmatprep.subr.mxu0 0.0
    %1538 = vmatpush1.msra.mxu0 0.0
    %1539 = vmatprep.subr.mxu0 0.0
    %1540 = vmatpush1.msra.mxu0 0.0
    %1541 = vmatprep.subr.mxu0 0.0
    %1542 = vmatpush1.msra.mxu0 0.0
    %1543 = vmatprep.subr.mxu0 0.0
    %1544 = vmatpush1.msra.mxu0 0.0
    %1545 = vmatprep.subr.mxu0 0.0
    %1546 = vmatpush1.msra.mxu0 0.0
    %1547 = vmatprep.subr.mxu0 0.0
    %1548 = vmatpush1.msra.mxu0 0.0
    %1549 = vmatprep.subr.mxu0 0.0
    %1550 = vmatpush1.msra.mxu0 0.0
    %1551 = vmatprep.subr.mxu0 0.0
    %1552 = vmatpush1.msra.mxu0 0.0
    %1553 = vmatprep.subr.mxu0 0.0
    %1554 = vmatpush1.msra.mxu0 0.0
    %1555 = vmatprep.subr.mxu0 0.0
    %1556 = vmatpush1.msra.mxu0 0.0
    %1557 = vmatprep.subr.mxu0 0.0
    %1558 = vmatpush1.msra.mxu0 0.0
    %1559 = vmatprep.subr.mxu0 0.0
    %1560 = vmatpush1.msra.mxu0 0.0
    %1561 = vmatprep.subr.mxu0 0.0
    %1562 = vmatpush1.msra.mxu0 0.0
    %1563 = vmatprep.subr.mxu0 0.0
    %1564 = vmatpush1.msra.mxu0 0.0
    %1565 = vmatprep.mubr.f32.mxu0 0.0
    %1566 = vmatmul.mubr.f32.gmra.mrb[0].mxu0 %v1499
    %v1567 = vpop.f32.mrb[0].mxu0
    %v1568 = vadd.f32 0.0, %v1567
    %v1569 = vpop.f32.mrb[0].mxu0
    %1570 = vdwg.mxu0
    %1571 = vrot.lane.b32.xlu0 %v172, 56
    %v1572 = vpop.permute.xlu0 %1571
    %v1575 = vsel %vm183, %v1342, 0
    %1577 = vmatprep.subr.mxu0 0.0
    %1578 = vmatpush1.msra.mxu0 %v1572
    %1579 = vmatprep.subr.mxu0 0.0
    %1580 = vmatpush1.msra.mxu0 0.0
    %1581 = vmatprep.subr.mxu0 0.0
    %1582 = vmatpush1.msra.mxu0 0.0
    %1583 = vmatprep.subr.mxu0 0.0
    %1584 = vmatpush1.msra.mxu0 0.0
    %1585 = vmatprep.subr.mxu0 0.0
    %1586 = vmatpush1.msra.mxu0 0.0
    %1587 = vmatprep.subr.mxu0 0.0
    %1588 = vmatpush1.msra.mxu0 0.0
    %1589 = vmatprep.subr.mxu0 0.0
    %1590 = vmatpush1.msra.mxu0 0.0
    %1591 = vmatprep.subr.mxu0 0.0
    %1592 = vmatpush1.msra.mxu0 0.0
    %1593 = vmatprep.subr.mxu0 0.0
    %1594 = vmatpush1.msra.mxu0 0.0
    %1595 = vmatprep.subr.mxu0 0.0
    %1596 = vmatpush1.msra.mxu0 0.0
    %1597 = vmatprep.subr.mxu0 0.0
    %1598 = vmatpush1.msra.mxu0 0.0
    %1599 = vmatprep.subr.mxu0 0.0
    %1600 = vmatpush1.msra.mxu0 0.0
    %1601 = vmatprep.subr.mxu0 0.0
    %1602 = vmatpush1.msra.mxu0 0.0
    %1603 = vmatprep.subr.mxu0 0.0
    %1604 = vmatpush1.msra.mxu0 0.0
    %1605 = vmatprep.subr.mxu0 0.0
    %1606 = vmatpush1.msra.mxu0 0.0
    %1607 = vmatprep.subr.mxu0 0.0
    %1608 = vmatpush1.msra.mxu0 0.0
    %1609 = vmatprep.subr.mxu0 0.0
    %1610 = vmatpush1.msra.mxu0 0.0
    %1611 = vmatprep.subr.mxu0 0.0
    %1612 = vmatpush1.msra.mxu0 0.0
    %1613 = vmatprep.subr.mxu0 0.0
    %1614 = vmatpush1.msra.mxu0 0.0
    %1615 = vmatprep.subr.mxu0 0.0
    %1616 = vmatpush1.msra.mxu0 0.0
    %1617 = vmatprep.subr.mxu0 0.0
    %1618 = vmatpush1.msra.mxu0 0.0
    %1619 = vmatprep.subr.mxu0 0.0
    %1620 = vmatpush1.msra.mxu0 0.0
    %1621 = vmatprep.subr.mxu0 0.0
    %1622 = vmatpush1.msra.mxu0 0.0
    %1623 = vmatprep.subr.mxu0 0.0
    %1624 = vmatpush1.msra.mxu0 0.0
    %1625 = vmatprep.subr.mxu0 0.0
    %1626 = vmatpush1.msra.mxu0 0.0
    %1627 = vmatprep.subr.mxu0 0.0
    %1628 = vmatpush1.msra.mxu0 0.0
    %1629 = vmatprep.subr.mxu0 0.0
    %1630 = vmatpush1.msra.mxu0 0.0
    %1631 = vmatprep.subr.mxu0 0.0
    %1632 = vmatpush1.msra.mxu0 0.0
    %1633 = vmatprep.subr.mxu0 0.0
    %1634 = vmatpush1.msra.mxu0 0.0
    %1635 = vmatprep.subr.mxu0 0.0
    %1636 = vmatpush1.msra.mxu0 0.0
    %1637 = vmatprep.subr.mxu0 0.0
    %1638 = vmatpush1.msra.mxu0 0.0
    %1639 = vmatprep.subr.mxu0 0.0
    %1640 = vmatpush1.msra.mxu0 0.0
    %1641 = vmatprep.mubr.f32.mxu0 0.0
    %1642 = vmatmul.mubr.f32.gmra.mrb[0].mxu0 %v1575
    %v1643 = vpop.f32.mrb[0].mxu0
    %v1644 = vadd.f32 0.0, %v1643
    %v1645 = vpop.f32.mrb[0].mxu0
    %1646 = vdwg.mxu0
    %v1647 = vsel 1, %v1315, -inf
    %v1648 = vsel 0, %v1316, -inf
    %v1649 = vsel 1, %v1317, -inf
    %v1650 = vsel 0, %v1318, -inf
    %v1651 = vsel %vm183, %v1647, -inf
    %1652 = vmax.xlane.f32.xlu0 %v1651
    %v1653 = vpop.xlane.xlu0 %1652
    %v1654 = vsel %vm183, %v1648, -inf
    %1655 = vmax.xlane.f32.xlu0 %v1654
    %v1656 = vpop.xlane.xlu0 %1655
    %v1657 = vsel %vm183, %v1649, -inf
    %1658 = vmax.xlane.f32.xlu0 %v1657
    %v1659 = vpop.xlane.xlu0 %1658
    %v1660 = vsel %vm183, %v1650, -inf
    %1661 = vmax.xlane.f32.xlu0 %v1660
    %v1662 = vpop.xlane.xlu0 %1661
    %v1663 = vsub.f32 %v1647, %v1653
    %v1664 = vsub.f32 %v1648, %v1656
    %v1665 = vsub.f32 %v1649, %v1659
    %v1666 = vsub.f32 %v1650, %v1662
    %v1667 = vmul.f32 %v1663, 1.442695
    %v1668 = vpow.pop %v1667
    %v1669 = vmul.f32 %v1664, 1.442695
    %v1670 = vpow.pop %v1669
    %v1671 = vmul.f32 %v1665, 1.442695
    %v1672 = vpow.pop %v1671
    %v1673 = vmul.f32 %v1666, 1.442695
    %v1674 = vpow.pop %v1673
    %v1675 = vsub.f32 -inf, %v1653
    %v1676 = vsub.f32 -inf, %v1656
    %v1677 = vsub.f32 -inf, %v1659
    %v1678 = vsub.f32 -inf, %v1662
    %v1679 = vmul.f32 %v1675, 1.442695
    %v1680 = vpow.pop %v1679
    %v1681 = vmul.f32 %v1676, 1.442695
    %v1682 = vpow.pop %v1681
    %v1683 = vmul.f32 %v1677, 1.442695
    %v1684 = vpow.pop %v1683
    %v1685 = vmul.f32 %v1678, 1.442695
    %v1686 = vpow.pop %v1685
    %v1687 = vmul.f32 %v1680, 0.0
    %v1688 = vmul.f32 %v1682, 0.0
    %v1689 = vmul.f32 %v1684, 0.0
    %v1690 = vmul.f32 %v1686, 0.0
    %v1691 = vsel %vm183, %v1668, 0.0
    %1692 = vadd.xlane.f32.xlu0 %v1691
    %v1693 = vpop.xlane.xlu0 %1692
    %v1694 = vsel %vm183, %v1670, 0.0
    %1695 = vadd.xlane.f32.xlu0 %v1694
    %v1696 = vpop.xlane.xlu0 %1695
    %v1697 = vsel %vm183, %v1672, 0.0
    %1698 = vadd.xlane.f32.xlu0 %v1697
    %v1699 = vpop.xlane.xlu0 %1698
    %v1700 = vsel %vm183, %v1674, 0.0
    %1701 = vadd.xlane.f32.xlu0 %v1700
    %v1702 = vpop.xlane.xlu0 %1701
    %v1703 = vadd.f32 %v1687, %v1693
    %v1704 = vadd.f32 %v1688, %v1696
    %v1705 = vadd.f32 %v1689, %v1699
    %v1706 = vadd.f32 %v1690, %v1702
    %v1707 = vsel 1, %v1416, 0.0
    %v1708 = vsel 0, %v1492, nan
    %v1709 = vsel 1, %v1568, 0.0
    %v1710 = vsel 0, %v1644, nan
    %v1711 = vrcp.pop %v1703
    %v1712 = vmul.f32 0.0, %v1711
    %v1713 = vrcp.pop %v1704
    %v1714 = vmul.f32 0.0, %v1713
    %v1715 = vrcp.pop %v1705
    %v1716 = vmul.f32 0.0, %v1715
    %v1717 = vrcp.pop %v1706
    %v1718 = vmul.f32 0.0, %v1717
    %v1719 = vmul.f32 %v1707, %v1712
    %v1720 = vmul.f32 %v1708, %v1714
    %v1721 = vmul.f32 %v1709, %v1716
    %v1722 = vmul.f32 %v1710, %v1718
    %v1723 = vadd.f32 %v1719, 0.0
    %v1724 = vadd.f32 %v1720, 0.0
    %v1725 = vadd.f32 %v1721, 0.0
    %v1726 = vadd.f32 %v1722, 0.0
    %v1727 = vsel 0, %v1315, -inf
    %v1728 = vsel 1, %v1316, -inf
    %v1729 = vsel 0, %v1317, -inf
    %v1730 = vsel 1, %v1318, -inf
    %v1731 = vsel %vm183, %v1727, -inf
    %1732 = vmax.xlane.f32.xlu0 %v1731
    %v1733 = vpop.xlane.xlu0 %1732
    %v1734 = vsel %vm183, %v1728, -inf
    %1735 = vmax.xlane.f32.xlu0 %v1734
    %v1736 = vpop.xlane.xlu0 %1735
    %v1737 = vsel %vm183, %v1729, -inf
    %1738 = vmax.xlane.f32.xlu0 %v1737
    %v1739 = vpop.xlane.xlu0 %1738
    %v1740 = vsel %vm183, %v1730, -inf
    %1741 = vmax.xlane.f32.xlu0 %v1740
    %v1742 = vpop.xlane.xlu0 %1741
    %v1743 = vmax.f32 %v1653, %v1733
    %v1744 = vmax.f32 %v1656, %v1736
    %v1745 = vmax.f32 %v1659, %v1739
    %v1746 = vmax.f32 %v1662, %v1742
    %v1747 = vsub.f32 %v1727, %v1743
    %v1748 = vsub.f32 %v1728, %v1744
    %v1749 = vsub.f32 %v1729, %v1745
    %v1750 = vsub.f32 %v1730, %v1746
    %v1751 = vmul.f32 %v1747, 1.442695
    %v1752 = vpow.pop %v1751
    %v1753 = vmul.f32 %v1748, 1.442695
    %v1754 = vpow.pop %v1753
    %v1755 = vmul.f32 %v1749, 1.442695
    %v1756 = vpow.pop %v1755
    %v1757 = vmul.f32 %v1750, 1.442695
    %v1758 = vpow.pop %v1757
    %v1759 = vsub.f32 %v1653, %v1743
    %v1760 = vsub.f32 %v1656, %v1744
    %v1761 = vsub.f32 %v1659, %v1745
    %v1762 = vsub.f32 %v1662, %v1746
    %v1763 = vmul.f32 %v1759, 1.442695
    %v1764 = vpow.pop %v1763
    %v1765 = vmul.f32 %v1760, 1.442695
    %v1766 = vpow.pop %v1765
    %v1767 = vmul.f32 %v1761, 1.442695
    %v1768 = vpow.pop %v1767
    %v1769 = vmul.f32 %v1762, 1.442695
    %v1770 = vpow.pop %v1769
    %v1771 = vmul.f32 %v1703, %v1764
    %v1772 = vmul.f32 %v1704, %v1766
    %v1773 = vmul.f32 %v1705, %v1768
    %v1774 = vmul.f32 %v1706, %v1770
    %v1775 = vsel %vm183, %v1752, 0.0
    %1776 = vadd.xlane.f32.xlu0 %v1775
    %v1777 = vpop.xlane.xlu0 %1776
    %v1778 = vsel %vm183, %v1754, 0.0
    %1779 = vadd.xlane.f32.xlu0 %v1778
    %v1780 = vpop.xlane.xlu0 %1779
    %v1781 = vsel %vm183, %v1756, 0.0
    %1782 = vadd.xlane.f32.xlu0 %v1781
    %v1783 = vpop.xlane.xlu0 %1782
    %v1784 = vsel %vm183, %v1758, 0.0
    %1785 = vadd.xlane.f32.xlu0 %v1784
    %v1786 = vpop.xlane.xlu0 %1785
    %v1787 = vadd.f32 %v1771, %v1777
    %v1788 = vadd.f32 %v1772, %v1780
    %v1789 = vadd.f32 %v1773, %v1783
    %v1790 = vadd.f32 %v1774, %v1786
    %v1791 = vsel 0, %v1416, 0.0
    %v1792 = vsel 1, %v1492, 0.0
    %v1793 = vsel 0, %v1568, 0.0
    %v1794 = vsel 1, %v1644, 0.0
    %v1795 = vsub.f32 %v1791, %v1723
    %v1796 = vsub.f32 %v1792, %v1724
    %v1797 = vsub.f32 %v1793, %v1725
    %v1798 = vsub.f32 %v1794, %v1726
    %v1799 = vrcp.pop %v1787
    %v1800 = vmul.f32 %v1703, %v1799
    %v1801 = vrcp.pop %v1788
    %v1802 = vmul.f32 %v1704, %v1801
    %v1803 = vrcp.pop %v1789
    %v1804 = vmul.f32 %v1705, %v1803
    %v1805 = vrcp.pop %v1790
    %v1806 = vmul.f32 %v1706, %v1805
    %v1807 = vmul.f32 %v1795, %v1800
    %v1808 = vmul.f32 %v1796, %v1802
    %v1809 = vmul.f32 %v1797, %v1804
    %v1810 = vmul.f32 %v1798, %v1806
    %v1811 = vadd.f32 %v1723, %v1807
    %v1812 = vadd.f32 %v1724, %v1808
    %v1813 = vadd.f32 %v1725, %v1809
    %v1814 = vadd.f32 %v1726, %v1810
    %v1815 = vmul.f32 %v1811, %v1799
    %v1816 = vmul.f32 %v1812, %v1801
    %v1817 = vmul.f32 %v1813, %v1803
    %v1818 = vmul.f32 %v1814, %v1805
    %1819 = vrot.lane.b32.xlu0 %v157, 112
    %v1820 = vpop.permute.xlu0 %1819
    %1821 = vrot.lane.b32.xlu0 %v157, 80
    %v1822 = vpop.permute.xlu0 %1821
    %v1823 = vsel %vm183, %v1820, 0
    %v1825 = vsel %vm183, %v1822, 0
    %1827 = vmatprep.subr.mxu0 0.0
    %1828 = vmatpush1.xpose.msra.mxu0 %v1825
    %1829 = vmatprep.subr.mxu0 0.0
    %1830 = vmatpush1.xpose.msra.mxu0 0.0
    %1831 = vmatprep.subr.mxu0 0.0
    %1832 = vmatpush1.xpose.msra.mxu0 0.0
    %1833 = vmatprep.subr.mxu0 0.0
    %1834 = vmatpush1.xpose.msra.mxu0 0.0
    %1835 = vmatprep.subr.mxu0 0.0
    %1836 = vmatpush1.xpose.msra.mxu0 0.0
    %1837 = vmatprep.subr.mxu0 0.0
    %1838 = vmatpush1.xpose.msra.mxu0 0.0
    %1839 = vmatprep.subr.mxu0 0.0
    %1840 = vmatpush1.xpose.msra.mxu0 0.0
    %1841 = vmatprep.subr.mxu0 0.0
    %1842 = vmatpush1.xpose.msra.mxu0 0.0
    %1843 = vmatprep.subr.mxu0 0.0
    %1844 = vmatpush1.xpose.msra.mxu0 0.0
    %1845 = vmatprep.subr.mxu0 0.0
    %1846 = vmatpush1.xpose.msra.mxu0 0.0
    %1847 = vmatprep.subr.mxu0 0.0
    %1848 = vmatpush1.xpose.msra.mxu0 0.0
    %1849 = vmatprep.subr.mxu0 0.0
    %1850 = vmatpush1.xpose.msra.mxu0 0.0
    %1851 = vmatprep.subr.mxu0 0.0
    %1852 = vmatpush1.xpose.msra.mxu0 0.0
    %1853 = vmatprep.subr.mxu0 0.0
    %1854 = vmatpush1.xpose.msra.mxu0 0.0
    %1855 = vmatprep.subr.mxu0 0.0
    %1856 = vmatpush1.xpose.msra.mxu0 0.0
    %1857 = vmatprep.subr.mxu0 0.0
    %1858 = vmatpush1.xpose.msra.mxu0 0.0
    %1859 = vmatprep.subr.mxu0 0.0
    %1860 = vmatpush1.xpose.msra.mxu0 0.0
    %1861 = vmatprep.subr.mxu0 0.0
    %1862 = vmatpush1.xpose.msra.mxu0 0.0
    %1863 = vmatprep.subr.mxu0 0.0
    %1864 = vmatpush1.xpose.msra.mxu0 0.0
    %1865 = vmatprep.subr.mxu0 0.0
    %1866 = vmatpush1.xpose.msra.mxu0 0.0
    %1867 = vmatprep.subr.mxu0 0.0
    %1868 = vmatpush1.xpose.msra.mxu0 0.0
    %1869 = vmatprep.subr.mxu0 0.0
    %1870 = vmatpush1.xpose.msra.mxu0 0.0
    %1871 = vmatprep.subr.mxu0 0.0
    %1872 = vmatpush1.xpose.msra.mxu0 0.0
    %1873 = vmatprep.subr.mxu0 0.0
    %1874 = vmatpush1.xpose.msra.mxu0 0.0
    %1875 = vmatprep.subr.mxu0 0.0
    %1876 = vmatpush1.xpose.msra.mxu0 0.0
    %1877 = vmatprep.subr.mxu0 0.0
    %1878 = vmatpush1.xpose.msra.mxu0 0.0
    %1879 = vmatprep.subr.mxu0 0.0
    %1880 = vmatpush1.xpose.msra.mxu0 0.0
    %1881 = vmatprep.subr.mxu0 0.0
    %1882 = vmatpush1.xpose.msra.mxu0 0.0
    %1883 = vmatprep.subr.mxu0 0.0
    %1884 = vmatpush1.xpose.msra.mxu0 0.0
    %1885 = vmatprep.subr.mxu0 0.0
    %1886 = vmatpush1.xpose.msra.mxu0 0.0
    %1887 = vmatprep.subr.mxu0 0.0
    %1888 = vmatpush1.xpose.msra.mxu0 0.0
    %1889 = vmatprep.subr.mxu0 0.0
    %1890 = vmatpush1.xpose.msra.mxu0 0.0
    %1891 = vmatprep.mubr.f32.mxu0 0.0
    %1892 = vmatmul.mubr.f32.gmra.mrb[0].mxu0 %v1823
    %v1893 = vpop.f32.mrb[0].mxu0
    %v1894 = vadd.f32 0.0, %v1893
    %v1895 = vpop.f32.mrb[0].mxu0
    %1896 = vdwg.mxu0
    %1897 = vrot.lane.b32.xlu0 %v162, 112
    %v1898 = vpop.permute.xlu0 %1897
    %1899 = vrot.lane.b32.xlu0 %v162, 80
    %v1900 = vpop.permute.xlu0 %1899
    %v1901 = vsel %vm183, %v1898, 0
    %v1903 = vsel %vm183, %v1900, 0
    %1905 = vmatprep.subr.mxu0 0.0
    %1906 = vmatpush1.xpose.msra.mxu0 %v1903
    %1907 = vmatprep.subr.mxu0 0.0
    %1908 = vmatpush1.xpose.msra.mxu0 0.0
    %1909 = vmatprep.subr.mxu0 0.0
    %1910 = vmatpush1.xpose.msra.mxu0 0.0
    %1911 = vmatprep.subr.mxu0 0.0
    %1912 = vmatpush1.xpose.msra.mxu0 0.0
    %1913 = vmatprep.subr.mxu0 0.0
    %1914 = vmatpush1.xpose.msra.mxu0 0.0
    %1915 = vmatprep.subr.mxu0 0.0
    %1916 = vmatpush1.xpose.msra.mxu0 0.0
    %1917 = vmatprep.subr.mxu0 0.0
    %1918 = vmatpush1.xpose.msra.mxu0 0.0
    %1919 = vmatprep.subr.mxu0 0.0
    %1920 = vmatpush1.xpose.msra.mxu0 0.0
    %1921 = vmatprep.subr.mxu0 0.0
    %1922 = vmatpush1.xpose.msra.mxu0 0.0
    %1923 = vmatprep.subr.mxu0 0.0
    %1924 = vmatpush1.xpose.msra.mxu0 0.0
    %1925 = vmatprep.subr.mxu0 0.0
    %1926 = vmatpush1.xpose.msra.mxu0 0.0
    %1927 = vmatprep.subr.mxu0 0.0
    %1928 = vmatpush1.xpose.msra.mxu0 0.0
    %1929 = vmatprep.subr.mxu0 0.0
    %1930 = vmatpush1.xpose.msra.mxu0 0.0
    %1931 = vmatprep.subr.mxu0 0.0
    %1932 = vmatpush1.xpose.msra.mxu0 0.0
    %1933 = vmatprep.subr.mxu0 0.0
    %1934 = vmatpush1.xpose.msra.mxu0 0.0
    %1935 = vmatprep.subr.mxu0 0.0
    %1936 = vmatpush1.xpose.msra.mxu0 0.0
    %1937 = vmatprep.subr.mxu0 0.0
    %1938 = vmatpush1.xpose.msra.mxu0 0.0
    %1939 = vmatprep.subr.mxu0 0.0
    %1940 = vmatpush1.xpose.msra.mxu0 0.0
    %1941 = vmatprep.subr.mxu0 0.0
    %1942 = vmatpush1.xpose.msra.mxu0 0.0
    %1943 = vmatprep.subr.mxu0 0.0
    %1944 = vmatpush1.xpose.msra.mxu0 0.0
    %1945 = vmatprep.subr.mxu0 0.0
    %1946 = vmatpush1.xpose.msra.mxu0 0.0
    %1947 = vmatprep.subr.mxu0 0.0
    %1948 = vmatpush1.xpose.msra.mxu0 0.0
    %1949 = vmatprep.subr.mxu0 0.0
    %1950 = vmatpush1.xpose.msra.mxu0 0.0
    %1951 = vmatprep.subr.mxu0 0.0
    %1952 = vmatpush1.xpose.msra.mxu0 0.0
    %1953 = vmatprep.subr.mxu0 0.0
    %1954 = vmatpush1.xpose.msra.mxu0 0.0
    %1955 = vmatprep.subr.mxu0 0.0
    %1956 = vmatpush1.xpose.msra.mxu0 0.0
    %1957 = vmatprep.subr.mxu0 0.0
    %1958 = vmatpush1.xpose.msra.mxu0 0.0
    %1959 = vmatprep.subr.mxu0 0.0
    %1960 = vmatpush1.xpose.msra.mxu0 0.0
    %1961 = vmatprep.subr.mxu0 0.0
    %1962 = vmatpush1.xpose.msra.mxu0 0.0
    %1963 = vmatprep.subr.mxu0 0.0
    %1964 = vmatpush1.xpose.msra.mxu0 0.0
    %1965 = vmatprep.subr.mxu0 0.0
    %1966 = vmatpush1.xpose.msra.mxu0 0.0
    %1967 = vmatprep.subr.mxu0 0.0
    %1968 = vmatpush1.xpose.msra.mxu0 0.0
    %1969 = vmatprep.mubr.f32.mxu0 0.0
    %1970 = vmatmul.mubr.f32.gmra.mrb[0].mxu0 %v1901
    %v1971 = vpop.f32.mrb[0].mxu0
    %v1972 = vadd.f32 0.0, %v1971
    %v1973 = vpop.f32.mrb[0].mxu0
    %1974 = vdwg.mxu0
    %1975 = vrot.lane.b32.xlu0 %v167, 112
    %v1976 = vpop.permute.xlu0 %1975
    %1977 = vrot.lane.b32.xlu0 %v167, 80
    %v1978 = vpop.permute.xlu0 %1977
    %v1979 = vsel %vm183, %v1976, 0
    %v1981 = vsel %vm183, %v1978, 0
    %1983 = vmatprep.subr.mxu0 0.0
    %1984 = vmatpush1.xpose.msra.mxu0 %v1981
    %1985 = vmatprep.subr.mxu0 0.0
    %1986 = vmatpush1.xpose.msra.mxu0 0.0
    %1987 = vmatprep.subr.mxu0 0.0
    %1988 = vmatpush1.xpose.msra.mxu0 0.0
    %1989 = vmatprep.subr.mxu0 0.0
    %1990 = vmatpush1.xpose.msra.mxu0 0.0
    %1991 = vmatprep.subr.mxu0 0.0
    %1992 = vmatpush1.xpose.msra.mxu0 0.0
    %1993 = vmatprep.subr.mxu0 0.0
    %1994 = vmatpush1.xpose.msra.mxu0 0.0
    %1995 = vmatprep.subr.mxu0 0.0
    %1996 = vmatpush1.xpose.msra.mxu0 0.0
    %1997 = vmatprep.subr.mxu0 0.0
    %1998 = vmatpush1.xpose.msra.mxu0 0.0
    %1999 = vmatprep.subr.mxu0 0.0
    %2000 = vmatpush1.xpose.msra.mxu0 0.0
    %2001 = vmatprep.subr.mxu0 0.0
    %2002 = vmatpush1.xpose.msra.mxu0 0.0
    %2003 = vmatprep.subr.mxu0 0.0
    %2004 = vmatpush1.xpose.msra.mxu0 0.0
    %2005 = vmatprep.subr.mxu0 0.0
    %2006 = vmatpush1.xpose.msra.mxu0 0.0
    %2007 = vmatprep.subr.mxu0 0.0
    %2008 = vmatpush1.xpose.msra.mxu0 0.0
    %2009 = vmatprep.subr.mxu0 0.0
    %2010 = vmatpush1.xpose.msra.mxu0 0.0
    %2011 = vmatprep.subr.mxu0 0.0
    %2012 = vmatpush1.xpose.msra.mxu0 0.0
    %2013 = vmatprep.subr.mxu0 0.0
    %2014 = vmatpush1.xpose.msra.mxu0 0.0
    %2015 = vmatprep.subr.mxu0 0.0
    %2016 = vmatpush1.xpose.msra.mxu0 0.0
    %2017 = vmatprep.subr.mxu0 0.0
    %2018 = vmatpush1.xpose.msra.mxu0 0.0
    %2019 = vmatprep.subr.mxu0 0.0
    %2020 = vmatpush1.xpose.msra.mxu0 0.0
    %2021 = vmatprep.subr.mxu0 0.0
    %2022 = vmatpush1.xpose.msra.mxu0 0.0
    %2023 = vmatprep.subr.mxu0 0.0
    %2024 = vmatpush1.xpose.msra.mxu0 0.0
    %2025 = vmatprep.subr.mxu0 0.0
    %2026 = vmatpush1.xpose.msra.mxu0 0.0
    %2027 = vmatprep.subr.mxu0 0.0
    %2028 = vmatpush1.xpose.msra.mxu0 0.0
    %2029 = vmatprep.subr.mxu0 0.0
    %2030 = vmatpush1.xpose.msra.mxu0 0.0
    %2031 = vmatprep.subr.mxu0 0.0
    %2032 = vmatpush1.xpose.msra.mxu0 0.0
    %2033 = vmatprep.subr.mxu0 0.0
    %2034 = vmatpush1.xpose.msra.mxu0 0.0
    %2035 = vmatprep.subr.mxu0 0.0
    %2036 = vmatpush1.xpose.msra.mxu0 0.0
    %2037 = vmatprep.subr.mxu0 0.0
    %2038 = vmatpush1.xpose.msra.mxu0 0.0
    %2039 = vmatprep.subr.mxu0 0.0
    %2040 = vmatpush1.xpose.msra.mxu0 0.0
    %2041 = vmatprep.subr.mxu0 0.0
    %2042 = vmatpush1.xpose.msra.mxu0 0.0
    %2043 = vmatprep.subr.mxu0 0.0
    %2044 = vmatpush1.xpose.msra.mxu0 0.0
    %2045 = vmatprep.subr.mxu0 0.0
    %2046 = vmatpush1.xpose.msra.mxu0 0.0
    %2047 = vmatprep.mubr.f32.mxu0 0.0
    %2048 = vmatmul.mubr.f32.gmra.mrb[0].mxu0 %v1979
    %v2049 = vpop.f32.mrb[0].mxu0
    %v2050 = vadd.f32 0.0, %v2049
    %v2051 = vpop.f32.mrb[0].mxu0
    %2052 = vdwg.mxu0
    %2053 = vrot.lane.b32.xlu0 %v172, 112
    %v2054 = vpop.permute.xlu0 %2053
    %2055 = vrot.lane.b32.xlu0 %v172, 80
    %v2056 = vpop.permute.xlu0 %2055
    %v2057 = vsel %vm183, %v2054, 0
    %v2059 = vsel %vm183, %v2056, 0
    %2061 = vmatprep.subr.mxu0 0.0
    %2062 = vmatpush1.xpose.msra.mxu0 %v2059
    %2063 = vmatprep.subr.mxu0 0.0
    %2064 = vmatpush1.xpose.msra.mxu0 0.0
    %2065 = vmatprep.subr.mxu0 0.0
    %2066 = vmatpush1.xpose.msra.mxu0 0.0
    %2067 = vmatprep.subr.mxu0 0.0
    %2068 = vmatpush1.xpose.msra.mxu0 0.0
    %2069 = vmatprep.subr.mxu0 0.0
    %2070 = vmatpush1.xpose.msra.mxu0 0.0
    %2071 = vmatprep.subr.mxu0 0.0
    %2072 = vmatpush1.xpose.msra.mxu0 0.0
    %2073 = vmatprep.subr.mxu0 0.0
    %2074 = vmatpush1.xpose.msra.mxu0 0.0
    %2075 = vmatprep.subr.mxu0 0.0
    %2076 = vmatpush1.xpose.msra.mxu0 0.0
    %2077 = vmatprep.subr.mxu0 0.0
    %2078 = vmatpush1.xpose.msra.mxu0 0.0
    %2079 = vmatprep.subr.mxu0 0.0
    %2080 = vmatpush1.xpose.msra.mxu0 0.0
    %2081 = vmatprep.subr.mxu0 0.0
    %2082 = vmatpush1.xpose.msra.mxu0 0.0
    %2083 = vmatprep.subr.mxu0 0.0
    %2084 = vmatpush1.xpose.msra.mxu0 0.0
    %2085 = vmatprep.subr.mxu0 0.0
    %2086 = vmatpush1.xpose.msra.mxu0 0.0
    %2087 = vmatprep.subr.mxu0 0.0
    %2088 = vmatpush1.xpose.msra.mxu0 0.0
    %2089 = vmatprep.subr.mxu0 0.0
    %2090 = vmatpush1.xpose.msra.mxu0 0.0
    %2091 = vmatprep.subr.mxu0 0.0
    %2092 = vmatpush1.xpose.msra.mxu0 0.0
    %2093 = vmatprep.subr.mxu0 0.0
    %2094 = vmatpush1.xpose.msra.mxu0 0.0
    %2095 = vmatprep.subr.mxu0 0.0
    %2096 = vmatpush1.xpose.msra.mxu0 0.0
    %2097 = vmatprep.subr.mxu0 0.0
    %2098 = vmatpush1.xpose.msra.mxu0 0.0
    %2099 = vmatprep.subr.mxu0 0.0
    %2100 = vmatpush1.xpose.msra.mxu0 0.0
    %2101 = vmatprep.subr.mxu0 0.0
    %2102 = vmatpush1.xpose.msra.mxu0 0.0
    %2103 = vmatprep.subr.mxu0 0.0
    %2104 = vmatpush1.xpose.msra.mxu0 0.0
    %2105 = vmatprep.subr.mxu0 0.0
    %2106 = vmatpush1.xpose.msra.mxu0 0.0
    %2107 = vmatprep.subr.mxu0 0.0
    %2108 = vmatpush1.xpose.msra.mxu0 0.0
    %2109 = vmatprep.subr.mxu0 0.0
    %2110 = vmatpush1.xpose.msra.mxu0 0.0
    %2111 = vmatprep.subr.mxu0 0.0
    %2112 = vmatpush1.xpose.msra.mxu0 0.0
    %2113 = vmatprep.subr.mxu0 0.0
    %2114 = vmatpush1.xpose.msra.mxu0 0.0
    %2115 = vmatprep.subr.mxu0 0.0
    %2116 = vmatpush1.xpose.msra.mxu0 0.0
    %2117 = vmatprep.subr.mxu0 0.0
    %2118 = vmatpush1.xpose.msra.mxu0 0.0
    %2119 = vmatprep.subr.mxu0 0.0
    %2120 = vmatpush1.xpose.msra.mxu0 0.0
    %2121 = vmatprep.subr.mxu0 0.0
    %2122 = vmatpush1.xpose.msra.mxu0 0.0
    %2123 = vmatprep.subr.mxu0 0.0
    %2124 = vmatpush1.xpose.msra.mxu0 0.0
    %2125 = vmatprep.mubr.f32.mxu0 0.0
    %2126 = vmatmul.mubr.f32.gmra.mrb[0].mxu0 %v2057
    %v2127 = vpop.f32.mrb[0].mxu0
    %v2128 = vadd.f32 0.0, %v2127
    %v2129 = vpop.f32.mrb[0].mxu0
    %2130 = vdwg.mxu0
    %v2131 = vmul.f32 %v1894, 0.35355338
    %v2132 = vmul.f32 %v1972, 0.35355338
    %v2133 = vmul.f32 %v2050, 0.35355338
    %v2134 = vmul.f32 %v2128, 0.35355338
    %v2135 = vsel %vm494, -inf, %v2131
    %v2136 = vsel %vm494, -inf, %v2132
    %v2137 = vsel %vm494, -inf, %v2133
    %v2138 = vsel %vm494, -inf, %v2134
    %v2139 = vsel %vm183, %v2135, -inf
    %2140 = vmax.xlane.f32.xlu0 %v2139
    %v2141 = vpop.xlane.xlu0 %2140
    %v2142 = vsel %vm183, %v2136, -inf
    %2143 = vmax.xlane.f32.xlu0 %v2142
    %v2144 = vpop.xlane.xlu0 %2143
    %v2145 = vsel %vm183, %v2137, -inf
    %2146 = vmax.xlane.f32.xlu0 %v2145
    %v2147 = vpop.xlane.xlu0 %2146
    %v2148 = vsel %vm183, %v2138, -inf
    %2149 = vmax.xlane.f32.xlu0 %v2148
    %v2150 = vpop.xlane.xlu0 %2149
    %v2151 = vsub.f32 %v2135, %v2141
    %v2152 = vsub.f32 %v2136, %v2144
    %v2153 = vsub.f32 %v2137, %v2147
    %v2154 = vsub.f32 %v2138, %v2150
    %v2155 = vmul.f32 %v2151, 1.442695
    %v2156 = vpow.pop %v2155
    %v2157 = vmul.f32 %v2152, 1.442695
    %v2158 = vpow.pop %v2157
    %v2159 = vmul.f32 %v2153, 1.442695
    %v2160 = vpow.pop %v2159
    %v2161 = vmul.f32 %v2154, 1.442695
    %v2162 = vpow.pop %v2161
    %2163 = vrot.lane.b32.xlu0 %v157, 48
    %v2164 = vpop.permute.xlu0 %2163
    %v2167 = vsel %vm183, %v2156, 0
    %2169 = vmatprep.subr.mxu0 0.0
    %2170 = vmatpush1.msra.mxu0 %v2164
    %2171 = vmatprep.subr.mxu0 0.0
    %2172 = vmatpush1.msra.mxu0 0.0
    %2173 = vmatprep.subr.mxu0 0.0
    %2174 = vmatpush1.msra.mxu0 0.0
    %2175 = vmatprep.subr.mxu0 0.0
    %2176 = vmatpush1.msra.mxu0 0.0
    %2177 = vmatprep.subr.mxu0 0.0
    %2178 = vmatpush1.msra.mxu0 0.0
    %2179 = vmatprep.subr.mxu0 0.0
    %2180 = vmatpush1.msra.mxu0 0.0
    %2181 = vmatprep.subr.mxu0 0.0
    %2182 = vmatpush1.msra.mxu0 0.0
    %2183 = vmatprep.subr.mxu0 0.0
    %2184 = vmatpush1.msra.mxu0 0.0
    %2185 = vmatprep.subr.mxu0 0.0
    %2186 = vmatpush1.msra.mxu0 0.0
    %2187 = vmatprep.subr.mxu0 0.0
    %2188 = vmatpush1.msra.mxu0 0.0
    %2189 = vmatprep.subr.mxu0 0.0
    %2190 = vmatpush1.msra.mxu0 0.0
    %2191 = vmatprep.subr.mxu0 0.0
    %2192 = vmatpush1.msra.mxu0 0.0
    %2193 = vmatprep.subr.mxu0 0.0
    %2194 = vmatpush1.msra.mxu0 0.0
    %2195 = vmatprep.subr.mxu0 0.0
    %2196 = vmatpush1.msra.mxu0 0.0
    %2197 = vmatprep.subr.mxu0 0.0
    %2198 = vmatpush1.msra.mxu0 0.0
    %2199 = vmatprep.subr.mxu0 0.0
    %2200 = vmatpush1.msra.mxu0 0.0
    %2201 = vmatprep.subr.mxu0 0.0
    %2202 = vmatpush1.msra.mxu0 0.0
    %2203 = vmatprep.subr.mxu0 0.0
    %2204 = vmatpush1.msra.mxu0 0.0
    %2205 = vmatprep.subr.mxu0 0.0
    %2206 = vmatpush1.msra.mxu0 0.0
    %2207 = vmatprep.subr.mxu0 0.0
    %2208 = vmatpush1.msra.mxu0 0.0
    %2209 = vmatprep.subr.mxu0 0.0
    %2210 = vmatpush1.msra.mxu0 0.0
    %2211 = vmatprep.subr.mxu0 0.0
    %2212 = vmatpush1.msra.mxu0 0.0
    %2213 = vmatprep.subr.mxu0 0.0
    %2214 = vmatpush1.msra.mxu0 0.0
    %2215 = vmatprep.subr.mxu0 0.0
    %2216 = vmatpush1.msra.mxu0 0.0
    %2217 = vmatprep.subr.mxu0 0.0
    %2218 = vmatpush1.msra.mxu0 0.0
    %2219 = vmatprep.subr.mxu0 0.0
    %2220 = vmatpush1.msra.mxu0 0.0
    %2221 = vmatprep.subr.mxu0 0.0
    %2222 = vmatpush1.msra.mxu0 0.0
    %2223 = vmatprep.subr.mxu0 0.0
    %2224 = vmatpush1.msra.mxu0 0.0
    %2225 = vmatprep.subr.mxu0 0.0
    %2226 = vmatpush1.msra.mxu0 0.0
    %2227 = vmatprep.subr.mxu0 0.0
    %2228 = vmatpush1.msra.mxu0 0.0
    %2229 = vmatprep.subr.mxu0 0.0
    %2230 = vmatpush1.msra.mxu0 0.0
    %2231 = vmatprep.subr.mxu0 0.0
    %2232 = vmatpush1.msra.mxu0 0.0
    %2233 = vmatprep.mubr.f32.mxu0 0.0
    %2234 = vmatmul.mubr.f32.gmra.mrb[0].mxu0 %v2167
    %v2235 = vpop.f32.mrb[0].mxu0
    %v2236 = vadd.f32 0.0, %v2235
    %v2237 = vpop.f32.mrb[0].mxu0
    %2238 = vdwg.mxu0
    %2239 = vrot.lane.b32.xlu0 %v162, 48
    %v2240 = vpop.permute.xlu0 %2239
    %v2243 = vsel %vm183, %v2158, 0
    %2245 = vmatprep.subr.mxu0 0.0
    %2246 = vmatpush1.msra.mxu0 %v2240
    %2247 = vmatprep.subr.mxu0 0.0
    %2248 = vmatpush1.msra.mxu0 0.0
    %2249 = vmatprep.subr.mxu0 0.0
    %2250 = vmatpush1.msra.mxu0 0.0
    %2251 = vmatprep.subr.mxu0 0.0
    %2252 = vmatpush1.msra.mxu0 0.0
    %2253 = vmatprep.subr.mxu0 0.0
    %2254 = vmatpush1.msra.mxu0 0.0
    %2255 = vmatprep.subr.mxu0 0.0
    %2256 = vmatpush1.msra.mxu0 0.0
    %2257 = vmatprep.subr.mxu0 0.0
    %2258 = vmatpush1.msra.mxu0 0.0
    %2259 = vmatprep.subr.mxu0 0.0
    %2260 = vmatpush1.msra.mxu0 0.0
    %2261 = vmatprep.subr.mxu0 0.0
    %2262 = vmatpush1.msra.mxu0 0.0
    %2263 = vmatprep.subr.mxu0 0.0
    %2264 = vmatpush1.msra.mxu0 0.0
    %2265 = vmatprep.subr.mxu0 0.0
    %2266 = vmatpush1.msra.mxu0 0.0
    %2267 = vmatprep.subr.mxu0 0.0
    %2268 = vmatpush1.msra.mxu0 0.0
    %2269 = vmatprep.subr.mxu0 0.0
    %2270 = vmatpush1.msra.mxu0 0.0
    %2271 = vmatprep.subr.mxu0 0.0
    %2272 = vmatpush1.msra.mxu0 0.0
    %2273 = vmatprep.subr.mxu0 0.0
    %2274 = vmatpush1.msra.mxu0 0.0
    %2275 = vmatprep.subr.mxu0 0.0
    %2276 = vmatpush1.msra.mxu0 0.0
    %2277 = vmatprep.subr.mxu0 0.0
    %2278 = vmatpush1.msra.mxu0 0.0
    %2279 = vmatprep.subr.mxu0 0.0
    %2280 = vmatpush1.msra.mxu0 0.0
    %2281 = vmatprep.subr.mxu0 0.0
    %2282 = vmatpush1.msra.mxu0 0.0
    %2283 = vmatprep.subr.mxu0 0.0
    %2284 = vmatpush1.msra.mxu0 0.0
    %2285 = vmatprep.subr.mxu0 0.0
    %2286 = vmatpush1.msra.mxu0 0.0
    %2287 = vmatprep.subr.mxu0 0.0
    %2288 = vmatpush1.msra.mxu0 0.0
    %2289 = vmatprep.subr.mxu0 0.0
    %2290 = vmatpush1.msra.mxu0 0.0
    %2291 = vmatprep.subr.mxu0 0.0
    %2292 = vmatpush1.msra.mxu0 0.0
    %2293 = vmatprep.subr.mxu0 0.0
    %2294 = vmatpush1.msra.mxu0 0.0
    %2295 = vmatprep.subr.mxu0 0.0
    %2296 = vmatpush1.msra.mxu0 0.0
    %2297 = vmatprep.subr.mxu0 0.0
    %2298 = vmatpush1.msra.mxu0 0.0
    %2299 = vmatprep.subr.mxu0 0.0
    %2300 = vmatpush1.msra.mxu0 0.0
    %2301 = vmatprep.subr.mxu0 0.0
    %2302 = vmatpush1.msra.mxu0 0.0
    %2303 = vmatprep.subr.mxu0 0.0
    %2304 = vmatpush1.msra.mxu0 0.0
    %2305 = vmatprep.subr.mxu0 0.0
    %2306 = vmatpush1.msra.mxu0 0.0
    %2307 = vmatprep.subr.mxu0 0.0
    %2308 = vmatpush1.msra.mxu0 0.0
    %2309 = vmatprep.mubr.f32.mxu0 0.0
    %2310 = vmatmul.mubr.f32.gmra.mrb[0].mxu0 %v2243
    %v2311 = vpop.f32.mrb[0].mxu0
    %v2312 = vadd.f32 0.0, %v2311
    %v2313 = vpop.f32.mrb[0].mxu0
    %2314 = vdwg.mxu0
    %2315 = vrot.lane.b32.xlu0 %v167, 48
    %v2316 = vpop.permute.xlu0 %2315
    %v2319 = vsel %vm183, %v2160, 0
    %2321 = vmatprep.subr.mxu0 0.0
    %2322 = vmatpush1.msra.mxu0 %v2316
    %2323 = vmatprep.subr.mxu0 0.0
    %2324 = vmatpush1.msra.mxu0 0.0
    %2325 = vmatprep.subr.mxu0 0.0
    %2326 = vmatpush1.msra.mxu0 0.0
    %2327 = vmatprep.subr.mxu0 0.0
    %2328 = vmatpush1.msra.mxu0 0.0
    %2329 = vmatprep.subr.mxu0 0.0
    %2330 = vmatpush1.msra.mxu0 0.0
    %2331 = vmatprep.subr.mxu0 0.0
    %2332 = vmatpush1.msra.mxu0 0.0
    %2333 = vmatprep.subr.mxu0 0.0
    %2334 = vmatpush1.msra.mxu0 0.0
    %2335 = vmatprep.subr.mxu0 0.0
    %2336 = vmatpush1.msra.mxu0 0.0
    %2337 = vmatprep.subr.mxu0 0.0
    %2338 = vmatpush1.msra.mxu0 0.0
    %2339 = vmatprep.subr.mxu0 0.0
    %2340 = vmatpush1.msra.mxu0 0.0
    %2341 = vmatprep.subr.mxu0 0.0
    %2342 = vmatpush1.msra.mxu0 0.0
    %2343 = vmatprep.subr.mxu0 0.0
    %2344 = vmatpush1.msra.mxu0 0.0
    %2345 = vmatprep.subr.mxu0 0.0
    %2346 = vmatpush1.msra.mxu0 0.0
    %2347 = vmatprep.subr.mxu0 0.0
    %2348 = vmatpush1.msra.mxu0 0.0
    %2349 = vmatprep.subr.mxu0 0.0
    %2350 = vmatpush1.msra.mxu0 0.0
    %2351 = vmatprep.subr.mxu0 0.0
    %2352 = vmatpush1.msra.mxu0 0.0
    %2353 = vmatprep.subr.mxu0 0.0
    %2354 = vmatpush1.msra.mxu0 0.0
    %2355 = vmatprep.subr.mxu0 0.0
    %2356 = vmatpush1.msra.mxu0 0.0
    %2357 = vmatprep.subr.mxu0 0.0
    %2358 = vmatpush1.msra.mxu0 0.0
    %2359 = vmatprep.subr.mxu0 0.0
    %2360 = vmatpush1.msra.mxu0 0.0
    %2361 = vmatprep.subr.mxu0 0.0
    %2362 = vmatpush1.msra.mxu0 0.0
    %2363 = vmatprep.subr.mxu0 0.0
    %2364 = vmatpush1.msra.mxu0 0.0
    %2365 = vmatprep.subr.mxu0 0.0
    %2366 = vmatpush1.msra.mxu0 0.0
    %2367 = vmatprep.subr.mxu0 0.0
    %2368 = vmatpush1.msra.mxu0 0.0
    %2369 = vmatprep.subr.mxu0 0.0
    %2370 = vmatpush1.msra.mxu0 0.0
    %2371 = vmatprep.subr.mxu0 0.0
    %2372 = vmatpush1.msra.mxu0 0.0
    %2373 = vmatprep.subr.mxu0 0.0
    %2374 = vmatpush1.msra.mxu0 0.0
    %2375 = vmatprep.subr.mxu0 0.0
    %2376 = vmatpush1.msra.mxu0 0.0
    %2377 = vmatprep.subr.mxu0 0.0
    %2378 = vmatpush1.msra.mxu0 0.0
    %2379 = vmatprep.subr.mxu0 0.0
    %2380 = vmatpush1.msra.mxu0 0.0
    %2381 = vmatprep.subr.mxu0 0.0
    %2382 = vmatpush1.msra.mxu0 0.0
    %2383 = vmatprep.subr.mxu0 0.0
    %2384 = vmatpush1.msra.mxu0 0.0
    %2385 = vmatprep.mubr.f32.mxu0 0.0
    %2386 = vmatmul.mubr.f32.gmra.mrb[0].mxu0 %v2319
    %v2387 = vpop.f32.mrb[0].mxu0
    %v2388 = vadd.f32 0.0, %v2387
    %v2389 = vpop.f32.mrb[0].mxu0
    %2390 = vdwg.mxu0
    %2391 = vrot.lane.b32.xlu0 %v172, 48
    %v2392 = vpop.permute.xlu0 %2391
    %v2395 = vsel %vm183, %v2162, 0
    %2397 = vmatprep.subr.mxu0 0.0
    %2398 = vmatpush1.msra.mxu0 %v2392
    %2399 = vmatprep.subr.mxu0 0.0
    %2400 = vmatpush1.msra.mxu0 0.0
    %2401 = vmatprep.subr.mxu0 0.0
    %2402 = vmatpush1.msra.mxu0 0.0
    %2403 = vmatprep.subr.mxu0 0.0
    %2404 = vmatpush1.msra.mxu0 0.0
    %2405 = vmatprep.subr.mxu0 0.0
    %2406 = vmatpush1.msra.mxu0 0.0
    %2407 = vmatprep.subr.mxu0 0.0
    %2408 = vmatpush1.msra.mxu0 0.0
    %2409 = vmatprep.subr.mxu0 0.0
    %2410 = vmatpush1.msra.mxu0 0.0
    %2411 = vmatprep.subr.mxu0 0.0
    %2412 = vmatpush1.msra.mxu0 0.0
    %2413 = vmatprep.subr.mxu0 0.0
    %2414 = vmatpush1.msra.mxu0 0.0
    %2415 = vmatprep.subr.mxu0 0.0
    %2416 = vmatpush1.msra.mxu0 0.0
    %2417 = vmatprep.subr.mxu0 0.0
    %2418 = vmatpush1.msra.mxu0 0.0
    %2419 = vmatprep.subr.mxu0 0.0
    %2420 = vmatpush1.msra.mxu0 0.0
    %2421 = vmatprep.subr.mxu0 0.0
    %2422 = vmatpush1.msra.mxu0 0.0
    %2423 = vmatprep.subr.mxu0 0.0
    %2424 = vmatpush1.msra.mxu0 0.0
    %2425 = vmatprep.subr.mxu0 0.0
    %2426 = vmatpush1.msra.mxu0 0.0
    %2427 = vmatprep.subr.mxu0 0.0
    %2428 = vmatpush1.msra.mxu0 0.0
    %2429 = vmatprep.subr.mxu0 0.0
    %2430 = vmatpush1.msra.mxu0 0.0
    %2431 = vmatprep.subr.mxu0 0.0
    %2432 = vmatpush1.msra.mxu0 0.0
    %2433 = vmatprep.subr.mxu0 0.0
    %2434 = vmatpush1.msra.mxu0 0.0
    %2435 = vmatprep.subr.mxu0 0.0
    %2436 = vmatpush1.msra.mxu0 0.0
    %2437 = vmatprep.subr.mxu0 0.0
    %2438 = vmatpush1.msra.mxu0 0.0
    %2439 = vmatprep.subr.mxu0 0.0
    %2440 = vmatpush1.msra.mxu0 0.0
    %2441 = vmatprep.subr.mxu0 0.0
    %2442 = vmatpush1.msra.mxu0 0.0
    %2443 = vmatprep.subr.mxu0 0.0
    %2444 = vmatpush1.msra.mxu0 0.0
    %2445 = vmatprep.subr.mxu0 0.0
    %2446 = vmatpush1.msra.mxu0 0.0
    %2447 = vmatprep.subr.mxu0 0.0
    %2448 = vmatpush1.msra.mxu0 0.0
    %2449 = vmatprep.subr.mxu0 0.0
    %2450 = vmatpush1.msra.mxu0 0.0
    %2451 = vmatprep.subr.mxu0 0.0
    %2452 = vmatpush1.msra.mxu0 0.0
    %2453 = vmatprep.subr.mxu0 0.0
    %2454 = vmatpush1.msra.mxu0 0.0
    %2455 = vmatprep.subr.mxu0 0.0
    %2456 = vmatpush1.msra.mxu0 0.0
    %2457 = vmatprep.subr.mxu0 0.0
    %2458 = vmatpush1.msra.mxu0 0.0
    %2459 = vmatprep.subr.mxu0 0.0
    %2460 = vmatpush1.msra.mxu0 0.0
    %2461 = vmatprep.mubr.f32.mxu0 0.0
    %2462 = vmatmul.mubr.f32.gmra.mrb[0].mxu0 %v2395
    %v2463 = vpop.f32.mrb[0].mxu0
    %v2464 = vadd.f32 0.0, %v2463
    %v2465 = vpop.f32.mrb[0].mxu0
    %2466 = vdwg.mxu0
    %v2467 = vsel 1, %v2135, -inf
    %v2468 = vsel 0, %v2136, -inf
    %v2469 = vsel 1, %v2137, -inf
    %v2470 = vsel 0, %v2138, -inf
    %v2471 = vsel %vm183, %v2467, -inf
    %2472 = vmax.xlane.f32.xlu0 %v2471
    %v2473 = vpop.xlane.xlu0 %2472
    %v2474 = vsel %vm183, %v2468, -inf
    %2475 = vmax.xlane.f32.xlu0 %v2474
    %v2476 = vpop.xlane.xlu0 %2475
    %v2477 = vsel %vm183, %v2469, -inf
    %2478 = vmax.xlane.f32.xlu0 %v2477
    %v2479 = vpop.xlane.xlu0 %2478
    %v2480 = vsel %vm183, %v2470, -inf
    %2481 = vmax.xlane.f32.xlu0 %v2480
    %v2482 = vpop.xlane.xlu0 %2481
    %v2483 = vsub.f32 %v2467, %v2473
    %v2484 = vsub.f32 %v2468, %v2476
    %v2485 = vsub.f32 %v2469, %v2479
    %v2486 = vsub.f32 %v2470, %v2482
    %v2487 = vmul.f32 %v2483, 1.442695
    %v2488 = vpow.pop %v2487
    %v2489 = vmul.f32 %v2484, 1.442695
    %v2490 = vpow.pop %v2489
    %v2491 = vmul.f32 %v2485, 1.442695
    %v2492 = vpow.pop %v2491
    %v2493 = vmul.f32 %v2486, 1.442695
    %v2494 = vpow.pop %v2493
    %v2495 = vsub.f32 -inf, %v2473
    %v2496 = vsub.f32 -inf, %v2476
    %v2497 = vsub.f32 -inf, %v2479
    %v2498 = vsub.f32 -inf, %v2482
    %v2499 = vmul.f32 %v2495, 1.442695
    %v2500 = vpow.pop %v2499
    %v2501 = vmul.f32 %v2496, 1.442695
    %v2502 = vpow.pop %v2501
    %v2503 = vmul.f32 %v2497, 1.442695
    %v2504 = vpow.pop %v2503
    %v2505 = vmul.f32 %v2498, 1.442695
    %v2506 = vpow.pop %v2505
    %v2507 = vmul.f32 %v2500, 0.0
    %v2508 = vmul.f32 %v2502, 0.0
    %v2509 = vmul.f32 %v2504, 0.0
    %v2510 = vmul.f32 %v2506, 0.0
    %v2511 = vsel %vm183, %v2488, 0.0
    %2512 = vadd.xlane.f32.xlu0 %v2511
    %v2513 = vpop.xlane.xlu0 %2512
    %v2514 = vsel %vm183, %v2490, 0.0
    %2515 = vadd.xlane.f32.xlu0 %v2514
    %v2516 = vpop.xlane.xlu0 %2515
    %v2517 = vsel %vm183, %v2492, 0.0
    %2518 = vadd.xlane.f32.xlu0 %v2517
    %v2519 = vpop.xlane.xlu0 %2518
    %v2520 = vsel %vm183, %v2494, 0.0
    %2521 = vadd.xlane.f32.xlu0 %v2520
    %v2522 = vpop.xlane.xlu0 %2521
    %v2523 = vadd.f32 %v2507, %v2513
    %v2524 = vadd.f32 %v2508, %v2516
    %v2525 = vadd.f32 %v2509, %v2519
    %v2526 = vadd.f32 %v2510, %v2522
    %v2527 = vsel 1, %v2236, 0.0
    %v2528 = vsel 0, %v2312, nan
    %v2529 = vsel 1, %v2388, 0.0
    %v2530 = vsel 0, %v2464, nan
    %v2531 = vrcp.pop %v2523
    %v2532 = vmul.f32 0.0, %v2531
    %v2533 = vrcp.pop %v2524
    %v2534 = vmul.f32 0.0, %v2533
    %v2535 = vrcp.pop %v2525
    %v2536 = vmul.f32 0.0, %v2535
    %v2537 = vrcp.pop %v2526
    %v2538 = vmul.f32 0.0, %v2537
    %v2539 = vmul.f32 %v2527, %v2532
    %v2540 = vmul.f32 %v2528, %v2534
    %v2541 = vmul.f32 %v2529, %v2536
    %v2542 = vmul.f32 %v2530, %v2538
    %v2543 = vadd.f32 %v2539, 0.0
    %v2544 = vadd.f32 %v2540, 0.0
    %v2545 = vadd.f32 %v2541, 0.0
    %v2546 = vadd.f32 %v2542, 0.0
    %v2547 = vsel 0, %v2135, -inf
    %v2548 = vsel 1, %v2136, -inf
    %v2549 = vsel 0, %v2137, -inf
    %v2550 = vsel 1, %v2138, -inf
    %v2551 = vsel %vm183, %v2547, -inf
    %2552 = vmax.xlane.f32.xlu0 %v2551
    %v2553 = vpop.xlane.xlu0 %2552
    %v2554 = vsel %vm183, %v2548, -inf
    %2555 = vmax.xlane.f32.xlu0 %v2554
    %v2556 = vpop.xlane.xlu0 %2555
    %v2557 = vsel %vm183, %v2549, -inf
    %2558 = vmax.xlane.f32.xlu0 %v2557
    %v2559 = vpop.xlane.xlu0 %2558
    %v2560 = vsel %vm183, %v2550, -inf
    %2561 = vmax.xlane.f32.xlu0 %v2560
    %v2562 = vpop.xlane.xlu0 %2561
    %v2563 = vmax.f32 %v2473, %v2553
    %v2564 = vmax.f32 %v2476, %v2556
    %v2565 = vmax.f32 %v2479, %v2559
    %v2566 = vmax.f32 %v2482, %v2562
    %v2567 = vsub.f32 %v2547, %v2563
    %v2568 = vsub.f32 %v2548, %v2564
    %v2569 = vsub.f32 %v2549, %v2565
    %v2570 = vsub.f32 %v2550, %v2566
    %v2571 = vmul.f32 %v2567, 1.442695
    %v2572 = vpow.pop %v2571
    %v2573 = vmul.f32 %v2568, 1.442695
    %v2574 = vpow.pop %v2573
    %v2575 = vmul.f32 %v2569, 1.442695
    %v2576 = vpow.pop %v2575
    %v2577 = vmul.f32 %v2570, 1.442695
    %v2578 = vpow.pop %v2577
    %v2579 = vsub.f32 %v2473, %v2563
    %v2580 = vsub.f32 %v2476, %v2564
    %v2581 = vsub.f32 %v2479, %v2565
    %v2582 = vsub.f32 %v2482, %v2566
    %v2583 = vmul.f32 %v2579, 1.442695
    %v2584 = vpow.pop %v2583
    %v2585 = vmul.f32 %v2580, 1.442695
    %v2586 = vpow.pop %v2585
    %v2587 = vmul.f32 %v2581, 1.442695
    %v2588 = vpow.pop %v2587
    %v2589 = vmul.f32 %v2582, 1.442695
    %v2590 = vpow.pop %v2589
    %v2591 = vmul.f32 %v2523, %v2584
    %v2592 = vmul.f32 %v2524, %v2586
    %v2593 = vmul.f32 %v2525, %v2588
    %v2594 = vmul.f32 %v2526, %v2590
    %v2595 = vsel %vm183, %v2572, 0.0
    %2596 = vadd.xlane.f32.xlu0 %v2595
    %v2597 = vpop.xlane.xlu0 %2596
    %v2598 = vsel %vm183, %v2574, 0.0
    %2599 = vadd.xlane.f32.xlu0 %v2598
    %v2600 = vpop.xlane.xlu0 %2599
    %v2601 = vsel %vm183, %v2576, 0.0
    %2602 = vadd.xlane.f32.xlu0 %v2601
    %v2603 = vpop.xlane.xlu0 %2602
    %v2604 = vsel %vm183, %v2578, 0.0
    %2605 = vadd.xlane.f32.xlu0 %v2604
    %v2606 = vpop.xlane.xlu0 %2605
    %v2607 = vadd.f32 %v2591, %v2597
    %v2608 = vadd.f32 %v2592, %v2600
    %v2609 = vadd.f32 %v2593, %v2603
    %v2610 = vadd.f32 %v2594, %v2606
    %v2611 = vsel 0, %v2236, 0.0
    %v2612 = vsel 1, %v2312, 0.0
    %v2613 = vsel 0, %v2388, 0.0
    %v2614 = vsel 1, %v2464, 0.0
    %v2615 = vsub.f32 %v2611, %v2543
    %v2616 = vsub.f32 %v2612, %v2544
    %v2617 = vsub.f32 %v2613, %v2545
    %v2618 = vsub.f32 %v2614, %v2546
    %v2619 = vrcp.pop %v2607
    %v2620 = vmul.f32 %v2523, %v2619
    %v2621 = vrcp.pop %v2608
    %v2622 = vmul.f32 %v2524, %v2621
    %v2623 = vrcp.pop %v2609
    %v2624 = vmul.f32 %v2525, %v2623
    %v2625 = vrcp.pop %v2610
    %v2626 = vmul.f32 %v2526, %v2625
    %v2627 = vmul.f32 %v2615, %v2620
    %v2628 = vmul.f32 %v2616, %v2622
    %v2629 = vmul.f32 %v2617, %v2624
    %v2630 = vmul.f32 %v2618, %v2626
    %v2631 = vadd.f32 %v2543, %v2627
    %v2632 = vadd.f32 %v2544, %v2628
    %v2633 = vadd.f32 %v2545, %v2629
    %v2634 = vadd.f32 %v2546, %v2630
    %v2635 = vmul.f32 %v2631, %v2619
    %v2636 = vmul.f32 %v2632, %v2621
    %v2637 = vmul.f32 %v2633, %v2623
    %v2638 = vmul.f32 %v2634, %v2625
    %2639 = vrot.lane.b32.xlu0 %v157, 104
    %v2640 = vpop.permute.xlu0 %2639
    %2641 = vrot.lane.b32.xlu0 %v157, 72
    %v2642 = vpop.permute.xlu0 %2641
    %v2643 = vsel %vm183, %v2640, 0
    %v2645 = vsel %vm183, %v2642, 0
    %2647 = vmatprep.subr.mxu0 0.0
    %2648 = vmatpush1.xpose.msra.mxu0 %v2645
    %2649 = vmatprep.subr.mxu0 0.0
    %2650 = vmatpush1.xpose.msra.mxu0 0.0
    %2651 = vmatprep.subr.mxu0 0.0
    %2652 = vmatpush1.xpose.msra.mxu0 0.0
    %2653 = vmatprep.subr.mxu0 0.0
    %2654 = vmatpush1.xpose.msra.mxu0 0.0
    %2655 = vmatprep.subr.mxu0 0.0
    %2656 = vmatpush1.xpose.msra.mxu0 0.0
    %2657 = vmatprep.subr.mxu0 0.0
    %2658 = vmatpush1.xpose.msra.mxu0 0.0
    %2659 = vmatprep.subr.mxu0 0.0
    %2660 = vmatpush1.xpose.msra.mxu0 0.0
    %2661 = vmatprep.subr.mxu0 0.0
    %2662 = vmatpush1.xpose.msra.mxu0 0.0
    %2663 = vmatprep.subr.mxu0 0.0
    %2664 = vmatpush1.xpose.msra.mxu0 0.0
    %2665 = vmatprep.subr.mxu0 0.0
    %2666 = vmatpush1.xpose.msra.mxu0 0.0
    %2667 = vmatprep.subr.mxu0 0.0
    %2668 = vmatpush1.xpose.msra.mxu0 0.0
    %2669 = vmatprep.subr.mxu0 0.0
    %2670 = vmatpush1.xpose.msra.mxu0 0.0
    %2671 = vmatprep.subr.mxu0 0.0
    %2672 = vmatpush1.xpose.msra.mxu0 0.0
    %2673 = vmatprep.subr.mxu0 0.0
    %2674 = vmatpush1.xpose.msra.mxu0 0.0
    %2675 = vmatprep.subr.mxu0 0.0
    %2676 = vmatpush1.xpose.msra.mxu0 0.0
    %2677 = vmatprep.subr.mxu0 0.0
    %2678 = vmatpush1.xpose.msra.mxu0 0.0
    %2679 = vmatprep.subr.mxu0 0.0
    %2680 = vmatpush1.xpose.msra.mxu0 0.0
    %2681 = vmatprep.subr.mxu0 0.0
    %2682 = vmatpush1.xpose.msra.mxu0 0.0
    %2683 = vmatprep.subr.mxu0 0.0
    %2684 = vmatpush1.xpose.msra.mxu0 0.0
    %2685 = vmatprep.subr.mxu0 0.0
    %2686 = vmatpush1.xpose.msra.mxu0 0.0
    %2687 = vmatprep.subr.mxu0 0.0
    %2688 = vmatpush1.xpose.msra.mxu0 0.0
    %2689 = vmatprep.subr.mxu0 0.0
    %2690 = vmatpush1.xpose.msra.mxu0 0.0
    %2691 = vmatprep.subr.mxu0 0.0
    %2692 = vmatpush1.xpose.msra.mxu0 0.0
    %2693 = vmatprep.subr.mxu0 0.0
    %2694 = vmatpush1.xpose.msra.mxu0 0.0
    %2695 = vmatprep.subr.mxu0 0.0
    %2696 = vmatpush1.xpose.msra.mxu0 0.0
    %2697 = vmatprep.subr.mxu0 0.0
    %2698 = vmatpush1.xpose.msra.mxu0 0.0
    %2699 = vmatprep.subr.mxu0 0.0
    %2700 = vmatpush1.xpose.msra.mxu0 0.0
    %2701 = vmatprep.subr.mxu0 0.0
    %2702 = vmatpush1.xpose.msra.mxu0 0.0
    %2703 = vmatprep.subr.mxu0 0.0
    %2704 = vmatpush1.xpose.msra.mxu0 0.0
    %2705 = vmatprep.subr.mxu0 0.0
    %2706 = vmatpush1.xpose.msra.mxu0 0.0
    %2707 = vmatprep.subr.mxu0 0.0
    %2708 = vmatpush1.xpose.msra.mxu0 0.0
    %2709 = vmatprep.subr.mxu0 0.0
    %2710 = vmatpush1.xpose.msra.mxu0 0.0
    %2711 = vmatprep.mubr.f32.mxu0 0.0
    %2712 = vmatmul.mubr.f32.gmra.mrb[0].mxu0 %v2643
    %v2713 = vpop.f32.mrb[0].mxu0
    %v2714 = vadd.f32 0.0, %v2713
    %v2715 = vpop.f32.mrb[0].mxu0
    %2716 = vdwg.mxu0
    %2717 = vrot.lane.b32.xlu0 %v162, 104
    %v2718 = vpop.permute.xlu0 %2717
    %2719 = vrot.lane.b32.xlu0 %v162, 72
    %v2720 = vpop.permute.xlu0 %2719
    %v2721 = vsel %vm183, %v2718, 0
    %v2723 = vsel %vm183, %v2720, 0
    %2725 = vmatprep.subr.mxu0 0.0
    %2726 = vmatpush1.xpose.msra.mxu0 %v2723
    %2727 = vmatprep.subr.mxu0 0.0
    %2728 = vmatpush1.xpose.msra.mxu0 0.0
    %2729 = vmatprep.subr.mxu0 0.0
    %2730 = vmatpush1.xpose.msra.mxu0 0.0
    %2731 = vmatprep.subr.mxu0 0.0
    %2732 = vmatpush1.xpose.msra.mxu0 0.0
    %2733 = vmatprep.subr.mxu0 0.0
    %2734 = vmatpush1.xpose.msra.mxu0 0.0
    %2735 = vmatprep.subr.mxu0 0.0
    %2736 = vmatpush1.xpose.msra.mxu0 0.0
    %2737 = vmatprep.subr.mxu0 0.0
    %2738 = vmatpush1.xpose.msra.mxu0 0.0
    %2739 = vmatprep.subr.mxu0 0.0
    %2740 = vmatpush1.xpose.msra.mxu0 0.0
    %2741 = vmatprep.subr.mxu0 0.0
    %2742 = vmatpush1.xpose.msra.mxu0 0.0
    %2743 = vmatprep.subr.mxu0 0.0
    %2744 = vmatpush1.xpose.msra.mxu0 0.0
    %2745 = vmatprep.subr.mxu0 0.0
    %2746 = vmatpush1.xpose.msra.mxu0 0.0
    %2747 = vmatprep.subr.mxu0 0.0
    %2748 = vmatpush1.xpose.msra.mxu0 0.0
    %2749 = vmatprep.subr.mxu0 0.0
    %2750 = vmatpush1.xpose.msra.mxu0 0.0
    %2751 = vmatprep.subr.mxu0 0.0
    %2752 = vmatpush1.xpose.msra.mxu0 0.0
    %2753 = vmatprep.subr.mxu0 0.0
    %2754 = vmatpush1.xpose.msra.mxu0 0.0
    %2755 = vmatprep.subr.mxu0 0.0
    %2756 = vmatpush1.xpose.msra.mxu0 0.0
    %2757 = vmatprep.subr.mxu0 0.0
    %2758 = vmatpush1.xpose.msra.mxu0 0.0
    %2759 = vmatprep.subr.mxu0 0.0
    %2760 = vmatpush1.xpose.msra.mxu0 0.0
    %2761 = vmatprep.subr.mxu0 0.0
    %2762 = vmatpush1.xpose.msra.mxu0 0.0
    %2763 = vmatprep.subr.mxu0 0.0
    %2764 = vmatpush1.xpose.msra.mxu0 0.0
    %2765 = vmatprep.subr.mxu0 0.0
    %2766 = vmatpush1.xpose.msra.mxu0 0.0
    %2767 = vmatprep.subr.mxu0 0.0
    %2768 = vmatpush1.xpose.msra.mxu0 0.0
    %2769 = vmatprep.subr.mxu0 0.0
    %2770 = vmatpush1.xpose.msra.mxu0 0.0
    %2771 = vmatprep.subr.mxu0 0.0
    %2772 = vmatpush1.xpose.msra.mxu0 0.0
    %2773 = vmatprep.subr.mxu0 0.0
    %2774 = vmatpush1.xpose.msra.mxu0 0.0
    %2775 = vmatprep.subr.mxu0 0.0
    %2776 = vmatpush1.xpose.msra.mxu0 0.0
    %2777 = vmatprep.subr.mxu0 0.0
    %2778 = vmatpush1.xpose.msra.mxu0 0.0
    %2779 = vmatprep.subr.mxu0 0.0
    %2780 = vmatpush1.xpose.msra.mxu0 0.0
    %2781 = vmatprep.subr.mxu0 0.0
    %2782 = vmatpush1.xpose.msra.mxu0 0.0
    %2783 = vmatprep.subr.mxu0 0.0
    %2784 = vmatpush1.xpose.msra.mxu0 0.0
    %2785 = vmatprep.subr.mxu0 0.0
    %2786 = vmatpush1.xpose.msra.mxu0 0.0
    %2787 = vmatprep.subr.mxu0 0.0
    %2788 = vmatpush1.xpose.msra.mxu0 0.0
    %2789 = vmatprep.mubr.f32.mxu0 0.0
    %2790 = vmatmul.mubr.f32.gmra.mrb[0].mxu0 %v2721
    %v2791 = vpop.f32.mrb[0].mxu0
    %v2792 = vadd.f32 0.0, %v2791
    %v2793 = vpop.f32.mrb[0].mxu0
    %2794 = vdwg.mxu0
    %2795 = vrot.lane.b32.xlu0 %v167, 104
    %v2796 = vpop.permute.xlu0 %2795
    %2797 = vrot.lane.b32.xlu0 %v167, 72
    %v2798 = vpop.permute.xlu0 %2797
    %v2799 = vsel %vm183, %v2796, 0
    %v2801 = vsel %vm183, %v2798, 0
    %2803 = vmatprep.subr.mxu0 0.0
    %2804 = vmatpush1.xpose.msra.mxu0 %v2801
    %2805 = vmatprep.subr.mxu0 0.0
    %2806 = vmatpush1.xpose.msra.mxu0 0.0
    %2807 = vmatprep.subr.mxu0 0.0
    %2808 = vmatpush1.xpose.msra.mxu0 0.0
    %2809 = vmatprep.subr.mxu0 0.0
    %2810 = vmatpush1.xpose.msra.mxu0 0.0
    %2811 = vmatprep.subr.mxu0 0.0
    %2812 = vmatpush1.xpose.msra.mxu0 0.0
    %2813 = vmatprep.subr.mxu0 0.0
    %2814 = vmatpush1.xpose.msra.mxu0 0.0
    %2815 = vmatprep.subr.mxu0 0.0
    %2816 = vmatpush1.xpose.msra.mxu0 0.0
    %2817 = vmatprep.subr.mxu0 0.0
    %2818 = vmatpush1.xpose.msra.mxu0 0.0
    %2819 = vmatprep.subr.mxu0 0.0
    %2820 = vmatpush1.xpose.msra.mxu0 0.0
    %2821 = vmatprep.subr.mxu0 0.0
    %2822 = vmatpush1.xpose.msra.mxu0 0.0
    %2823 = vmatprep.subr.mxu0 0.0
    %2824 = vmatpush1.xpose.msra.mxu0 0.0
    %2825 = vmatprep.subr.mxu0 0.0
    %2826 = vmatpush1.xpose.msra.mxu0 0.0
    %2827 = vmatprep.subr.mxu0 0.0
    %2828 = vmatpush1.xpose.msra.mxu0 0.0
    %2829 = vmatprep.subr.mxu0 0.0
    %2830 = vmatpush1.xpose.msra.mxu0 0.0
    %2831 = vmatprep.subr.mxu0 0.0
    %2832 = vmatpush1.xpose.msra.mxu0 0.0
    %2833 = vmatprep.subr.mxu0 0.0
    %2834 = vmatpush1.xpose.msra.mxu0 0.0
    %2835 = vmatprep.subr.mxu0 0.0
    %2836 = vmatpush1.xpose.msra.mxu0 0.0
    %2837 = vmatprep.subr.mxu0 0.0
    %2838 = vmatpush1.xpose.msra.mxu0 0.0
    %2839 = vmatprep.subr.mxu0 0.0
    %2840 = vmatpush1.xpose.msra.mxu0 0.0
    %2841 = vmatprep.subr.mxu0 0.0
    %2842 = vmatpush1.xpose.msra.mxu0 0.0
    %2843 = vmatprep.subr.mxu0 0.0
    %2844 = vmatpush1.xpose.msra.mxu0 0.0
    %2845 = vmatprep.subr.mxu0 0.0
    %2846 = vmatpush1.xpose.msra.mxu0 0.0
    %2847 = vmatprep.subr.mxu0 0.0
    %2848 = vmatpush1.xpose.msra.mxu0 0.0
    %2849 = vmatprep.subr.mxu0 0.0
    %2850 = vmatpush1.xpose.msra.mxu0 0.0
    %2851 = vmatprep.subr.mxu0 0.0
    %2852 = vmatpush1.xpose.msra.mxu0 0.0
    %2853 = vmatprep.subr.mxu0 0.0
    %2854 = vmatpush1.xpose.msra.mxu0 0.0
    %2855 = vmatprep.subr.mxu0 0.0
    %2856 = vmatpush1.xpose.msra.mxu0 0.0
    %2857 = vmatprep.subr.mxu0 0.0
    %2858 = vmatpush1.xpose.msra.mxu0 0.0
    %2859 = vmatprep.subr.mxu0 0.0
    %2860 = vmatpush1.xpose.msra.mxu0 0.0
    %2861 = vmatprep.subr.mxu0 0.0
    %2862 = vmatpush1.xpose.msra.mxu0 0.0
    %2863 = vmatprep.subr.mxu0 0.0
    %2864 = vmatpush1.xpose.msra.mxu0 0.0
    %2865 = vmatprep.subr.mxu0 0.0
    %2866 = vmatpush1.xpose.msra.mxu0 0.0
    %2867 = vmatprep.mubr.f32.mxu0 0.0
    %2868 = vmatmul.mubr.f32.gmra.mrb[0].mxu0 %v2799
    %v2869 = vpop.f32.mrb[0].mxu0
    %v2870 = vadd.f32 0.0, %v2869
    %v2871 = vpop.f32.mrb[0].mxu0
    %2872 = vdwg.mxu0
    %2873 = vrot.lane.b32.xlu0 %v172, 104
    %v2874 = vpop.permute.xlu0 %2873
    %2875 = vrot.lane.b32.xlu0 %v172, 72
    %v2876 = vpop.permute.xlu0 %2875
    %v2877 = vsel %vm183, %v2874, 0
    %v2879 = vsel %vm183, %v2876, 0
    %2881 = vmatprep.subr.mxu0 0.0
    %2882 = vmatpush1.xpose.msra.mxu0 %v2879
    %2883 = vmatprep.subr.mxu0 0.0
    %2884 = vmatpush1.xpose.msra.mxu0 0.0
    %2885 = vmatprep.subr.mxu0 0.0
    %2886 = vmatpush1.xpose.msra.mxu0 0.0
    %2887 = vmatprep.subr.mxu0 0.0
    %2888 = vmatpush1.xpose.msra.mxu0 0.0
    %2889 = vmatprep.subr.mxu0 0.0
    %2890 = vmatpush1.xpose.msra.mxu0 0.0
    %2891 = vmatprep.subr.mxu0 0.0
    %2892 = vmatpush1.xpose.msra.mxu0 0.0
    %2893 = vmatprep.subr.mxu0 0.0
    %2894 = vmatpush1.xpose.msra.mxu0 0.0
    %2895 = vmatprep.subr.mxu0 0.0
    %2896 = vmatpush1.xpose.msra.mxu0 0.0
    %2897 = vmatprep.subr.mxu0 0.0
    %2898 = vmatpush1.xpose.msra.mxu0 0.0
    %2899 = vmatprep.subr.mxu0 0.0
    %2900 = vmatpush1.xpose.msra.mxu0 0.0
    %2901 = vmatprep.subr.mxu0 0.0
    %2902 = vmatpush1.xpose.msra.mxu0 0.0
    %2903 = vmatprep.subr.mxu0 0.0
    %2904 = vmatpush1.xpose.msra.mxu0 0.0
    %2905 = vmatprep.subr.mxu0 0.0
    %2906 = vmatpush1.xpose.msra.mxu0 0.0
    %2907 = vmatprep.subr.mxu0 0.0
    %2908 = vmatpush1.xpose.msra.mxu0 0.0
    %2909 = vmatprep.subr.mxu0 0.0
    %2910 = vmatpush1.xpose.msra.mxu0 0.0
    %2911 = vmatprep.subr.mxu0 0.0
    %2912 = vmatpush1.xpose.msra.mxu0 0.0
    %2913 = vmatprep.subr.mxu0 0.0
    %2914 = vmatpush1.xpose.msra.mxu0 0.0
    %2915 = vmatprep.subr.mxu0 0.0
    %2916 = vmatpush1.xpose.msra.mxu0 0.0
    %2917 = vmatprep.subr.mxu0 0.0
    %2918 = vmatpush1.xpose.msra.mxu0 0.0
    %2919 = vmatprep.subr.mxu0 0.0
    %2920 = vmatpush1.xpose.msra.mxu0 0.0
    %2921 = vmatprep.subr.mxu0 0.0
    %2922 = vmatpush1.xpose.msra.mxu0 0.0
    %2923 = vmatprep.subr.mxu0 0.0
    %2924 = vmatpush1.xpose.msra.mxu0 0.0
    %2925 = vmatprep.subr.mxu0 0.0
    %2926 = vmatpush1.xpose.msra.mxu0 0.0
    %2927 = vmatprep.subr.mxu0 0.0
    %2928 = vmatpush1.xpose.msra.mxu0 0.0
    %2929 = vmatprep.subr.mxu0 0.0
    %2930 = vmatpush1.xpose.msra.mxu0 0.0
    %2931 = vmatprep.subr.mxu0 0.0
    %2932 = vmatpush1.xpose.msra.mxu0 0.0
    %2933 = vmatprep.subr.mxu0 0.0
    %2934 = vmatpush1.xpose.msra.mxu0 0.0
    %2935 = vmatprep.subr.mxu0 0.0
    %2936 = vmatpush1.xpose.msra.mxu0 0.0
    %2937 = vmatprep.subr.mxu0 0.0
    %2938 = vmatpush1.xpose.msra.mxu0 0.0
    %2939 = vmatprep.subr.mxu0 0.0
    %2940 = vmatpush1.xpose.msra.mxu0 0.0
    %2941 = vmatprep.subr.mxu0 0.0
    %2942 = vmatpush1.xpose.msra.mxu0 0.0
    %2943 = vmatprep.subr.mxu0 0.0
    %2944 = vmatpush1.xpose.msra.mxu0 0.0
    %2945 = vmatprep.mubr.f32.mxu0 0.0
    %2946 = vmatmul.mubr.f32.gmra.mrb[0].mxu0 %v2877
    %v2947 = vpop.f32.mrb[0].mxu0
    %v2948 = vadd.f32 0.0, %v2947
    %v2949 = vpop.f32.mrb[0].mxu0
    %2950 = vdwg.mxu0
    %v2951 = vmul.f32 %v2714, 0.35355338
    %v2952 = vmul.f32 %v2792, 0.35355338
    %v2953 = vmul.f32 %v2870, 0.35355338
    %v2954 = vmul.f32 %v2948, 0.35355338
    %v2955 = vsel %vm494, -inf, %v2951
    %v2956 = vsel %vm494, -inf, %v2952
    %v2957 = vsel %vm494, -inf, %v2953
    %v2958 = vsel %vm494, -inf, %v2954
    %v2959 = vsel %vm183, %v2955, -inf
    %2960 = vmax.xlane.f32.xlu0 %v2959
    %v2961 = vpop.xlane.xlu0 %2960
    %v2962 = vsel %vm183, %v2956, -inf
    %2963 = vmax.xlane.f32.xlu0 %v2962
    %v2964 = vpop.xlane.xlu0 %2963
    %v2965 = vsel %vm183, %v2957, -inf
    %2966 = vmax.xlane.f32.xlu0 %v2965
    %v2967 = vpop.xlane.xlu0 %2966
    %v2968 = vsel %vm183, %v2958, -inf
    %2969 = vmax.xlane.f32.xlu0 %v2968
    %v2970 = vpop.xlane.xlu0 %2969
    %v2971 = vsub.f32 %v2955, %v2961
    %v2972 = vsub.f32 %v2956, %v2964
    %v2973 = vsub.f32 %v2957, %v2967
    %v2974 = vsub.f32 %v2958, %v2970
    %v2975 = vmul.f32 %v2971, 1.442695
    %v2976 = vpow.pop %v2975
    %v2977 = vmul.f32 %v2972, 1.442695
    %v2978 = vpow.pop %v2977
    %v2979 = vmul.f32 %v2973, 1.442695
    %v2980 = vpow.pop %v2979
    %v2981 = vmul.f32 %v2974, 1.442695
    %v2982 = vpow.pop %v2981
    %2983 = vrot.lane.b32.xlu0 %v157, 40
    %v2984 = vpop.permute.xlu0 %2983
    %v2987 = vsel %vm183, %v2976, 0
    %2989 = vmatprep.subr.mxu0 0.0
    %2990 = vmatpush1.msra.mxu0 %v2984
    %2991 = vmatprep.subr.mxu0 0.0
    %2992 = vmatpush1.msra.mxu0 0.0
    %2993 = vmatprep.subr.mxu0 0.0
    %2994 = vmatpush1.msra.mxu0 0.0
    %2995 = vmatprep.subr.mxu0 0.0
    %2996 = vmatpush1.msra.mxu0 0.0
    %2997 = vmatprep.subr.mxu0 0.0
    %2998 = vmatpush1.msra.mxu0 0.0
    %2999 = vmatprep.subr.mxu0 0.0
    %3000 = vmatpush1.msra.mxu0 0.0
    %3001 = vmatprep.subr.mxu0 0.0
    %3002 = vmatpush1.msra.mxu0 0.0
    %3003 = vmatprep.subr.mxu0 0.0
    %3004 = vmatpush1.msra.mxu0 0.0
    %3005 = vmatprep.subr.mxu0 0.0
    %3006 = vmatpush1.msra.mxu0 0.0
    %3007 = vmatprep.subr.mxu0 0.0
    %3008 = vmatpush1.msra.mxu0 0.0
    %3009 = vmatprep.subr.mxu0 0.0
    %3010 = vmatpush1.msra.mxu0 0.0
    %3011 = vmatprep.subr.mxu0 0.0
    %3012 = vmatpush1.msra.mxu0 0.0
    %3013 = vmatprep.subr.mxu0 0.0
    %3014 = vmatpush1.msra.mxu0 0.0
    %3015 = vmatprep.subr.mxu0 0.0
    %3016 = vmatpush1.msra.mxu0 0.0
    %3017 = vmatprep.subr.mxu0 0.0
    %3018 = vmatpush1.msra.mxu0 0.0
    %3019 = vmatprep.subr.mxu0 0.0
    %3020 = vmatpush1.msra.mxu0 0.0
    %3021 = vmatprep.subr.mxu0 0.0
    %3022 = vmatpush1.msra.mxu0 0.0
    %3023 = vmatprep.subr.mxu0 0.0
    %3024 = vmatpush1.msra.mxu0 0.0
    %3025 = vmatprep.subr.mxu0 0.0
    %3026 = vmatpush1.msra.mxu0 0.0
    %3027 = vmatprep.subr.mxu0 0.0
    %3028 = vmatpush1.msra.mxu0 0.0
    %3029 = vmatprep.subr.mxu0 0.0
    %3030 = vmatpush1.msra.mxu0 0.0
    %3031 = vmatprep.subr.mxu0 0.0
    %3032 = vmatpush1.msra.mxu0 0.0
    %3033 = vmatprep.subr.mxu0 0.0
    %3034 = vmatpush1.msra.mxu0 0.0
    %3035 = vmatprep.subr.mxu0 0.0
    %3036 = vmatpush1.msra.mxu0 0.0
    %3037 = vmatprep.subr.mxu0 0.0
    %3038 = vmatpush1.msra.mxu0 0.0
    %3039 = vmatprep.subr.mxu0 0.0
    %3040 = vmatpush1.msra.mxu0 0.0
    %3041 = vmatprep.subr.mxu0 0.0
    %3042 = vmatpush1.msra.mxu0 0.0
    %3043 = vmatprep.subr.mxu0 0.0
    %3044 = vmatpush1.msra.mxu0 0.0
    %3045 = vmatprep.subr.mxu0 0.0
    %3046 = vmatpush1.msra.mxu0 0.0
    %3047 = vmatprep.subr.mxu0 0.0
    %3048 = vmatpush1.msra.mxu0 0.0
    %3049 = vmatprep.subr.mxu0 0.0
    %3050 = vmatpush1.msra.mxu0 0.0
    %3051 = vmatprep.subr.mxu0 0.0
    %3052 = vmatpush1.msra.mxu0 0.0
    %3053 = vmatprep.mubr.f32.mxu0 0.0
    %3054 = vmatmul.mubr.f32.gmra.mrb[0].mxu0 %v2987
    %v3055 = vpop.f32.mrb[0].mxu0
    %v3056 = vadd.f32 0.0, %v3055
    %v3057 = vpop.f32.mrb[0].mxu0
    %3058 = vdwg.mxu0
    %3059 = vrot.lane.b32.xlu0 %v162, 40
    %v3060 = vpop.permute.xlu0 %3059
    %v3063 = vsel %vm183, %v2978, 0
    %3065 = vmatprep.subr.mxu0 0.0
    %3066 = vmatpush1.msra.mxu0 %v3060
    %3067 = vmatprep.subr.mxu0 0.0
    %3068 = vmatpush1.msra.mxu0 0.0
    %3069 = vmatprep.subr.mxu0 0.0
    %3070 = vmatpush1.msra.mxu0 0.0
    %3071 = vmatprep.subr.mxu0 0.0
    %3072 = vmatpush1.msra.mxu0 0.0
    %3073 = vmatprep.subr.mxu0 0.0
    %3074 = vmatpush1.msra.mxu0 0.0
    %3075 = vmatprep.subr.mxu0 0.0
    %3076 = vmatpush1.msra.mxu0 0.0
    %3077 = vmatprep.subr.mxu0 0.0
    %3078 = vmatpush1.msra.mxu0 0.0
    %3079 = vmatprep.subr.mxu0 0.0
    %3080 = vmatpush1.msra.mxu0 0.0
    %3081 = vmatprep.subr.mxu0 0.0
    %3082 = vmatpush1.msra.mxu0 0.0
    %3083 = vmatprep.subr.mxu0 0.0
    %3084 = vmatpush1.msra.mxu0 0.0
    %3085 = vmatprep.subr.mxu0 0.0
    %3086 = vmatpush1.msra.mxu0 0.0
    %3087 = vmatprep.subr.mxu0 0.0
    %3088 = vmatpush1.msra.mxu0 0.0
    %3089 = vmatprep.subr.mxu0 0.0
    %3090 = vmatpush1.msra.mxu0 0.0
    %3091 = vmatprep.subr.mxu0 0.0
    %3092 = vmatpush1.msra.mxu0 0.0
    %3093 = vmatprep.subr.mxu0 0.0
    %3094 = vmatpush1.msra.mxu0 0.0
    %3095 = vmatprep.subr.mxu0 0.0
    %3096 = vmatpush1.msra.mxu0 0.0
    %3097 = vmatprep.subr.mxu0 0.0
    %3098 = vmatpush1.msra.mxu0 0.0
    %3099 = vmatprep.subr.mxu0 0.0
    %3100 = vmatpush1.msra.mxu0 0.0
    %3101 = vmatprep.subr.mxu0 0.0
    %3102 = vmatpush1.msra.mxu0 0.0
    %3103 = vmatprep.subr.mxu0 0.0
    %3104 = vmatpush1.msra.mxu0 0.0
    %3105 = vmatprep.subr.mxu0 0.0
    %3106 = vmatpush1.msra.mxu0 0.0
    %3107 = vmatprep.subr.mxu0 0.0
    %3108 = vmatpush1.msra.mxu0 0.0
    %3109 = vmatprep.subr.mxu0 0.0
    %3110 = vmatpush1.msra.mxu0 0.0
    %3111 = vmatprep.subr.mxu0 0.0
    %3112 = vmatpush1.msra.mxu0 0.0
    %3113 = vmatprep.subr.mxu0 0.0
    %3114 = vmatpush1.msra.mxu0 0.0
    %3115 = vmatprep.subr.mxu0 0.0
    %3116 = vmatpush1.msra.mxu0 0.0
    %3117 = vmatprep.subr.mxu0 0.0
    %3118 = vmatpush1.msra.mxu0 0.0
    %3119 = vmatprep.subr.mxu0 0.0
    %3120 = vmatpush1.msra.mxu0 0.0
    %3121 = vmatprep.subr.mxu0 0.0
    %3122 = vmatpush1.msra.mxu0 0.0
    %3123 = vmatprep.subr.mxu0 0.0
    %3124 = vmatpush1.msra.mxu0 0.0
    %3125 = vmatprep.subr.mxu0 0.0
    %3126 = vmatpush1.msra.mxu0 0.0
    %3127 = vmatprep.subr.mxu0 0.0
    %3128 = vmatpush1.msra.mxu0 0.0
    %3129 = vmatprep.mubr.f32.mxu0 0.0
    %3130 = vmatmul.mubr.f32.gmra.mrb[0].mxu0 %v3063
    %v3131 = vpop.f32.mrb[0].mxu0
    %v3132 = vadd.f32 0.0, %v3131
    %v3133 = vpop.f32.mrb[0].mxu0
    %3134 = vdwg.mxu0
    %3135 = vrot.lane.b32.xlu0 %v167, 40
    %v3136 = vpop.permute.xlu0 %3135
    %v3139 = vsel %vm183, %v2980, 0
    %3141 = vmatprep.subr.mxu0 0.0
    %3142 = vmatpush1.msra.mxu0 %v3136
    %3143 = vmatprep.subr.mxu0 0.0
    %3144 = vmatpush1.msra.mxu0 0.0
    %3145 = vmatprep.subr.mxu0 0.0
    %3146 = vmatpush1.msra.mxu0 0.0
    %3147 = vmatprep.subr.mxu0 0.0
    %3148 = vmatpush1.msra.mxu0 0.0
    %3149 = vmatprep.subr.mxu0 0.0
    %3150 = vmatpush1.msra.mxu0 0.0
    %3151 = vmatprep.subr.mxu0 0.0
    %3152 = vmatpush1.msra.mxu0 0.0
    %3153 = vmatprep.subr.mxu0 0.0
    %3154 = vmatpush1.msra.mxu0 0.0
    %3155 = vmatprep.subr.mxu0 0.0
    %3156 = vmatpush1.msra.mxu0 0.0
    %3157 = vmatprep.subr.mxu0 0.0
    %3158 = vmatpush1.msra.mxu0 0.0
    %3159 = vmatprep.subr.mxu0 0.0
    %3160 = vmatpush1.msra.mxu0 0.0
    %3161 = vmatprep.subr.mxu0 0.0
    %3162 = vmatpush1.msra.mxu0 0.0
    %3163 = vmatprep.subr.mxu0 0.0
    %3164 = vmatpush1.msra.mxu0 0.0
    %3165 = vmatprep.subr.mxu0 0.0
    %3166 = vmatpush1.msra.mxu0 0.0
    %3167 = vmatprep.subr.mxu0 0.0
    %3168 = vmatpush1.msra.mxu0 0.0
    %3169 = vmatprep.subr.mxu0 0.0
    %3170 = vmatpush1.msra.mxu0 0.0
    %3171 = vmatprep.subr.mxu0 0.0
    %3172 = vmatpush1.msra.mxu0 0.0
    %3173 = vmatprep.subr.mxu0 0.0
    %3174 = vmatpush1.msra.mxu0 0.0
    %3175 = vmatprep.subr.mxu0 0.0
    %3176 = vmatpush1.msra.mxu0 0.0
    %3177 = vmatprep.subr.mxu0 0.0
    %3178 = vmatpush1.msra.mxu0 0.0
    %3179 = vmatprep.subr.mxu0 0.0
    %3180 = vmatpush1.msra.mxu0 0.0
    %3181 = vmatprep.subr.mxu0 0.0
    %3182 = vmatpush1.msra.mxu0 0.0
    %3183 = vmatprep.subr.mxu0 0.0
    %3184 = vmatpush1.msra.mxu0 0.0
    %3185 = vmatprep.subr.mxu0 0.0
    %3186 = vmatpush1.msra.mxu0 0.0
    %3187 = vmatprep.subr.mxu0 0.0
    %3188 = vmatpush1.msra.mxu0 0.0
    %3189 = vmatprep.subr.mxu0 0.0
    %3190 = vmatpush1.msra.mxu0 0.0
    %3191 = vmatprep.subr.mxu0 0.0
    %3192 = vmatpush1.msra.mxu0 0.0
    %3193 = vmatprep.subr.mxu0 0.0
    %3194 = vmatpush1.msra.mxu0 0.0
    %3195 = vmatprep.subr.mxu0 0.0
    %3196 = vmatpush1.msra.mxu0 0.0
    %3197 = vmatprep.subr.mxu0 0.0
    %3198 = vmatpush1.msra.mxu0 0.0
    %3199 = vmatprep.subr.mxu0 0.0
    %3200 = vmatpush1.msra.mxu0 0.0
    %3201 = vmatprep.subr.mxu0 0.0
    %3202 = vmatpush1.msra.mxu0 0.0
    %3203 = vmatprep.subr.mxu0 0.0
    %3204 = vmatpush1.msra.mxu0 0.0
    %3205 = vmatprep.mubr.f32.mxu0 0.0
    %3206 = vmatmul.mubr.f32.gmra.mrb[0].mxu0 %v3139
    %v3207 = vpop.f32.mrb[0].mxu0
    %v3208 = vadd.f32 0.0, %v3207
    %v3209 = vpop.f32.mrb[0].mxu0
    %3210 = vdwg.mxu0
    %3211 = vrot.lane.b32.xlu0 %v172, 40
    %v3212 = vpop.permute.xlu0 %3211
    %v3215 = vsel %vm183, %v2982, 0
    %3217 = vmatprep.subr.mxu0 0.0
    %3218 = vmatpush1.msra.mxu0 %v3212
    %3219 = vmatprep.subr.mxu0 0.0
    %3220 = vmatpush1.msra.mxu0 0.0
    %3221 = vmatprep.subr.mxu0 0.0
    %3222 = vmatpush1.msra.mxu0 0.0
    %3223 = vmatprep.subr.mxu0 0.0
    %3224 = vmatpush1.msra.mxu0 0.0
    %3225 = vmatprep.subr.mxu0 0.0
    %3226 = vmatpush1.msra.mxu0 0.0
    %3227 = vmatprep.subr.mxu0 0.0
    %3228 = vmatpush1.msra.mxu0 0.0
    %3229 = vmatprep.subr.mxu0 0.0
    %3230 = vmatpush1.msra.mxu0 0.0
    %3231 = vmatprep.subr.mxu0 0.0
    %3232 = vmatpush1.msra.mxu0 0.0
    %3233 = vmatprep.subr.mxu0 0.0
    %3234 = vmatpush1.msra.mxu0 0.0
    %3235 = vmatprep.subr.mxu0 0.0
    %3236 = vmatpush1.msra.mxu0 0.0
    %3237 = vmatprep.subr.mxu0 0.0
    %3238 = vmatpush1.msra.mxu0 0.0
    %3239 = vmatprep.subr.mxu0 0.0
    %3240 = vmatpush1.msra.mxu0 0.0
    %3241 = vmatprep.subr.mxu0 0.0
    %3242 = vmatpush1.msra.mxu0 0.0
    %3243 = vmatprep.subr.mxu0 0.0
    %3244 = vmatpush1.msra.mxu0 0.0
    %3245 = vmatprep.subr.mxu0 0.0
    %3246 = vmatpush1.msra.mxu0 0.0
    %3247 = vmatprep.subr.mxu0 0.0
    %3248 = vmatpush1.msra.mxu0 0.0
    %3249 = vmatprep.subr.mxu0 0.0
    %3250 = vmatpush1.msra.mxu0 0.0
    %3251 = vmatprep.subr.mxu0 0.0
    %3252 = vmatpush1.msra.mxu0 0.0
    %3253 = vmatprep.subr.mxu0 0.0
    %3254 = vmatpush1.msra.mxu0 0.0
    %3255 = vmatprep.subr.mxu0 0.0
    %3256 = vmatpush1.msra.mxu0 0.0
    %3257 = vmatprep.subr.mxu0 0.0
    %3258 = vmatpush1.msra.mxu0 0.0
    %3259 = vmatprep.subr.mxu0 0.0
    %3260 = vmatpush1.msra.mxu0 0.0
    %3261 = vmatprep.subr.mxu0 0.0
    %3262 = vmatpush1.msra.mxu0 0.0
    %3263 = vmatprep.subr.mxu0 0.0
    %3264 = vmatpush1.msra.mxu0 0.0
    %3265 = vmatprep.subr.mxu0 0.0
    %3266 = vmatpush1.msra.mxu0 0.0
    %3267 = vmatprep.subr.mxu0 0.0
    %3268 = vmatpush1.msra.mxu0 0.0
    %3269 = vmatprep.subr.mxu0 0.0
    %3270 = vmatpush1.msra.mxu0 0.0
    %3271 = vmatprep.subr.mxu0 0.0
    %3272 = vmatpush1.msra.mxu0 0.0
    %3273 = vmatprep.subr.mxu0 0.0
    %3274 = vmatpush1.msra.mxu0 0.0
    %3275 = vmatprep.subr.mxu0 0.0
    %3276 = vmatpush1.msra.mxu0 0.0
    %3277 = vmatprep.subr.mxu0 0.0
    %3278 = vmatpush1.msra.mxu0 0.0
    %3279 = vmatprep.subr.mxu0 0.0
    %3280 = vmatpush1.msra.mxu0 0.0
    %3281 = vmatprep.mubr.f32.mxu0 0.0
    %3282 = vmatmul.mubr.f32.gmra.mrb[0].mxu0 %v3215
    %v3283 = vpop.f32.mrb[0].mxu0
    %v3284 = vadd.f32 0.0, %v3283
    %v3285 = vpop.f32.mrb[0].mxu0
    %3286 = vdwg.mxu0
    %v3287 = vsel 1, %v2955, -inf
    %v3288 = vsel 0, %v2956, -inf
    %v3289 = vsel 1, %v2957, -inf
    %v3290 = vsel 0, %v2958, -inf
    %v3291 = vsel %vm183, %v3287, -inf
    %3292 = vmax.xlane.f32.xlu0 %v3291
    %v3293 = vpop.xlane.xlu0 %3292
    %v3294 = vsel %vm183, %v3288, -inf
    %3295 = vmax.xlane.f32.xlu0 %v3294
    %v3296 = vpop.xlane.xlu0 %3295
    %v3297 = vsel %vm183, %v3289, -inf
    %3298 = vmax.xlane.f32.xlu0 %v3297
    %v3299 = vpop.xlane.xlu0 %3298
    %v3300 = vsel %vm183, %v3290, -inf
    %3301 = vmax.xlane.f32.xlu0 %v3300
    %v3302 = vpop.xlane.xlu0 %3301
    %v3303 = vsub.f32 %v3287, %v3293
    %v3304 = vsub.f32 %v3288, %v3296
    %v3305 = vsub.f32 %v3289, %v3299
    %v3306 = vsub.f32 %v3290, %v3302
    %v3307 = vmul.f32 %v3303, 1.442695
    %v3308 = vpow.pop %v3307
    %v3309 = vmul.f32 %v3304, 1.442695
    %v3310 = vpow.pop %v3309
    %v3311 = vmul.f32 %v3305, 1.442695
    %v3312 = vpow.pop %v3311
    %v3313 = vmul.f32 %v3306, 1.442695
    %v3314 = vpow.pop %v3313
    %v3315 = vsub.f32 -inf, %v3293
    %v3316 = vsub.f32 -inf, %v3296
    %v3317 = vsub.f32 -inf, %v3299
    %v3318 = vsub.f32 -inf, %v3302
    %v3319 = vmul.f32 %v3315, 1.442695
    %v3320 = vpow.pop %v3319
    %v3321 = vmul.f32 %v3316, 1.442695
    %v3322 = vpow.pop %v3321
    %v3323 = vmul.f32 %v3317, 1.442695
    %v3324 = vpow.pop %v3323
    %v3325 = vmul.f32 %v3318, 1.442695
    %v3326 = vpow.pop %v3325
    %v3327 = vmul.f32 %v3320, 0.0
    %v3328 = vmul.f32 %v3322, 0.0
    %v3329 = vmul.f32 %v3324, 0.0
    %v3330 = vmul.f32 %v3326, 0.0
    %v3331 = vsel %vm183, %v3308, 0.0
    %3332 = vadd.xlane.f32.xlu0 %v3331
    %v3333 = vpop.xlane.xlu0 %3332
    %v3334 = vsel %vm183, %v3310, 0.0
    %3335 = vadd.xlane.f32.xlu0 %v3334
    %v3336 = vpop.xlane.xlu0 %3335
    %v3337 = vsel %vm183, %v3312, 0.0
    %3338 = vadd.xlane.f32.xlu0 %v3337
    %v3339 = vpop.xlane.xlu0 %3338
    %v3340 = vsel %vm183, %v3314, 0.0
    %3341 = vadd.xlane.f32.xlu0 %v3340
    %v3342 = vpop.xlane.xlu0 %3341
    %v3343 = vadd.f32 %v3327, %v3333
    %v3344 = vadd.f32 %v3328, %v3336
    %v3345 = vadd.f32 %v3329, %v3339
    %v3346 = vadd.f32 %v3330, %v3342
    %v3347 = vsel 1, %v3056, 0.0
    %v3348 = vsel 0, %v3132, nan
    %v3349 = vsel 1, %v3208, 0.0
    %v3350 = vsel 0, %v3284, nan
    %v3351 = vrcp.pop %v3343
    %v3352 = vmul.f32 0.0, %v3351
    %v3353 = vrcp.pop %v3344
    %v3354 = vmul.f32 0.0, %v3353
    %v3355 = vrcp.pop %v3345
    %v3356 = vmul.f32 0.0, %v3355
    %v3357 = vrcp.pop %v3346
    %v3358 = vmul.f32 0.0, %v3357
    %v3359 = vmul.f32 %v3347, %v3352
    %v3360 = vmul.f32 %v3348, %v3354
    %v3361 = vmul.f32 %v3349, %v3356
    %v3362 = vmul.f32 %v3350, %v3358
    %v3363 = vadd.f32 %v3359, 0.0
    %v3364 = vadd.f32 %v3360, 0.0
    %v3365 = vadd.f32 %v3361, 0.0
    %v3366 = vadd.f32 %v3362, 0.0
    %v3367 = vsel 0, %v2955, -inf
    %v3368 = vsel 1, %v2956, -inf
    %v3369 = vsel 0, %v2957, -inf
    %v3370 = vsel 1, %v2958, -inf
    %v3371 = vsel %vm183, %v3367, -inf
    %3372 = vmax.xlane.f32.xlu0 %v3371
    %v3373 = vpop.xlane.xlu0 %3372
    %v3374 = vsel %vm183, %v3368, -inf
    %3375 = vmax.xlane.f32.xlu0 %v3374
    %v3376 = vpop.xlane.xlu0 %3375
    %v3377 = vsel %vm183, %v3369, -inf
    %3378 = vmax.xlane.f32.xlu0 %v3377
    %v3379 = vpop.xlane.xlu0 %3378
    %v3380 = vsel %vm183, %v3370, -inf
    %3381 = vmax.xlane.f32.xlu0 %v3380
    %v3382 = vpop.xlane.xlu0 %3381
    %v3383 = vmax.f32 %v3293, %v3373
    %v3384 = vmax.f32 %v3296, %v3376
    %v3385 = vmax.f32 %v3299, %v3379
    %v3386 = vmax.f32 %v3302, %v3382
    %v3387 = vsub.f32 %v3367, %v3383
    %v3388 = vsub.f32 %v3368, %v3384
    %v3389 = vsub.f32 %v3369, %v3385
    %v3390 = vsub.f32 %v3370, %v3386
    %v3391 = vmul.f32 %v3387, 1.442695
    %v3392 = vpow.pop %v3391
    %v3393 = vmul.f32 %v3388, 1.442695
    %v3394 = vpow.pop %v3393
    %v3395 = vmul.f32 %v3389, 1.442695
    %v3396 = vpow.pop %v3395
    %v3397 = vmul.f32 %v3390, 1.442695
    %v3398 = vpow.pop %v3397
    %v3399 = vsub.f32 %v3293, %v3383
    %v3400 = vsub.f32 %v3296, %v3384
    %v3401 = vsub.f32 %v3299, %v3385
    %v3402 = vsub.f32 %v3302, %v3386
    %v3403 = vmul.f32 %v3399, 1.442695
    %v3404 = vpow.pop %v3403
    %v3405 = vmul.f32 %v3400, 1.442695
    %v3406 = vpow.pop %v3405
    %v3407 = vmul.f32 %v3401, 1.442695
    %v3408 = vpow.pop %v3407
    %v3409 = vmul.f32 %v3402, 1.442695
    %v3410 = vpow.pop %v3409
    %v3411 = vmul.f32 %v3343, %v3404
    %v3412 = vmul.f32 %v3344, %v3406
    %v3413 = vmul.f32 %v3345, %v3408
    %v3414 = vmul.f32 %v3346, %v3410
    %v3415 = vsel %vm183, %v3392, 0.0
    %3416 = vadd.xlane.f32.xlu0 %v3415
    %v3417 = vpop.xlane.xlu0 %3416
    %v3418 = vsel %vm183, %v3394, 0.0
    %3419 = vadd.xlane.f32.xlu0 %v3418
    %v3420 = vpop.xlane.xlu0 %3419
    %v3421 = vsel %vm183, %v3396, 0.0
    %3422 = vadd.xlane.f32.xlu0 %v3421
    %v3423 = vpop.xlane.xlu0 %3422
    %v3424 = vsel %vm183, %v3398, 0.0
    %3425 = vadd.xlane.f32.xlu0 %v3424
    %v3426 = vpop.xlane.xlu0 %3425
    %v3427 = vadd.f32 %v3411, %v3417
    %v3428 = vadd.f32 %v3412, %v3420
    %v3429 = vadd.f32 %v3413, %v3423
    %v3430 = vadd.f32 %v3414, %v3426
    %v3431 = vsel 0, %v3056, 0.0
    %v3432 = vsel 1, %v3132, 0.0
    %v3433 = vsel 0, %v3208, 0.0
    %v3434 = vsel 1, %v3284, 0.0
    %v3435 = vsub.f32 %v3431, %v3363
    %v3436 = vsub.f32 %v3432, %v3364
    %v3437 = vsub.f32 %v3433, %v3365
    %v3438 = vsub.f32 %v3434, %v3366
    %v3439 = vrcp.pop %v3427
    %v3440 = vmul.f32 %v3343, %v3439
    %v3441 = vrcp.pop %v3428
    %v3442 = vmul.f32 %v3344, %v3441
    %v3443 = vrcp.pop %v3429
    %v3444 = vmul.f32 %v3345, %v3443
    %v3445 = vrcp.pop %v3430
    %v3446 = vmul.f32 %v3346, %v3445
    %v3447 = vmul.f32 %v3435, %v3440
    %v3448 = vmul.f32 %v3436, %v3442
    %v3449 = vmul.f32 %v3437, %v3444
    %v3450 = vmul.f32 %v3438, %v3446
    %v3451 = vadd.f32 %v3363, %v3447
    %v3452 = vadd.f32 %v3364, %v3448
    %v3453 = vadd.f32 %v3365, %v3449
    %v3454 = vadd.f32 %v3366, %v3450
    %v3455 = vmul.f32 %v3451, %v3439
    %v3456 = vmul.f32 %v3452, %v3441
    %v3457 = vmul.f32 %v3453, %v3443
    %v3458 = vmul.f32 %v3454, %v3445
    %3463 = vrot.lane.b32.xlu0 %v1815, 8
    %v3464 = vpop.permute.xlu0 %3463
    %3465 = vrot.lane.b32.xlu0 %v1816, 8
    %v3466 = vpop.permute.xlu0 %3465
    %3467 = vrot.lane.b32.xlu0 %v1817, 8
    %v3468 = vpop.permute.xlu0 %3467
    %3469 = vrot.lane.b32.xlu0 %v1818, 8
    %v3470 = vpop.permute.xlu0 %3469
    %3479 = vrot.lane.b32.xlu0 %v2635, 16
    %v3480 = vpop.permute.xlu0 %3479
    %3481 = vrot.lane.b32.xlu0 %v2636, 16
    %v3482 = vpop.permute.xlu0 %3481
    %3483 = vrot.lane.b32.xlu0 %v2637, 16
    %v3484 = vpop.permute.xlu0 %3483
    %3485 = vrot.lane.b32.xlu0 %v2638, 16
    %v3486 = vpop.permute.xlu0 %3485
    %3495 = vrot.lane.b32.xlu0 %v3455, 24
    %v3496 = vpop.permute.xlu0 %3495
    %3497 = vrot.lane.b32.xlu0 %v3456, 24
    %v3498 = vpop.permute.xlu0 %3497
    %3499 = vrot.lane.b32.xlu0 %v3457, 24
    %v3500 = vpop.permute.xlu0 %3499
    %3501 = vrot.lane.b32.xlu0 %v3458, 24
    %v3502 = vpop.permute.xlu0 %3501
    %v3507 = vsel %vm183, %v995, %v3464
    %v3508 = vsel %vm183, %v996, %v3466
    %v3509 = vsel %vm183, %v997, %v3468
    %v3510 = vsel %vm183, %v998, %v3470
    %vm3511 = vcmask 130048
    %v3512 = vsel %vm3511, %v3507, %v3480
    %v3513 = vsel %vm3511, %v3508, %v3482
    %v3514 = vsel %vm3511, %v3509, %v3484
    %v3515 = vsel %vm3511, %v3510, %v3486
    %vm3516 = vcmask 195584
    %v3517 = vsel %vm3516, %v3512, %v3496
    %v3518 = vsel %vm3516, %v3513, %v3498
    %v3519 = vsel %vm3516, %v3514, %v3500
    %v3520 = vsel %vm3516, %v3515, %v3502
    %v3521 = vld [vmem:[#allocation7] sm:$0xff]
    %v3522 = vld [vmem:[#allocation7 + $0x8] sm:$0xff]
    %v3523 = vld [vmem:[#allocation7 + $0x10] sm:$0xff]
    %v3524 = vld [vmem:[#allocation7 + $0x18] sm:$0xff]
    %v3525 = vld [vmem:[%s4] sm:$0x1]
    %v3527 = vlaneseq
    %v3528 = vshrl.u32 %v3527, 7
    %v3529 = vsub.s32 0, %v3528
    %v3530 = vrot.slane %v3525, %v3529
    %v3533 = vsel %vm77, %v3517, 0
    %v3536 = vsel %vm77, %v3518, 0
    %v3539 = vsel %vm77, %v3519, 0
    %v3542 = vsel %vm77, %v3520, 0
    %3544 = vmatprep.subr.mxu0 0.0
    %3545 = vmatpush1.msra.mxu0 %v3521
    %3546 = vmatprep.subr.mxu0 0.0
    %3547 = vmatpush1.msra.mxu0 %v3522
    %3548 = vmatprep.subr.mxu0 0.0
    %3549 = vmatpush1.msra.mxu0 %v3523
    %3550 = vmatprep.subr.mxu0 0.0
    %3551 = vmatpush1.msra.mxu0 %v3524
    %3552 = vmatprep.subr.mxu0 0.0
    %3553 = vmatpush1.msra.mxu0 0.0
    %3554 = vmatprep.subr.mxu0 0.0
    %3555 = vmatpush1.msra.mxu0 0.0
    %3556 = vmatprep.subr.mxu0 0.0
    %3557 = vmatpush1.msra.mxu0 0.0
    %3558 = vmatprep.subr.mxu0 0.0
    %3559 = vmatpush1.msra.mxu0 0.0
    %3560 = vmatprep.subr.mxu0 0.0
    %3561 = vmatpush1.msra.mxu0 0.0
    %3562 = vmatprep.subr.mxu0 0.0
    %3563 = vmatpush1.msra.mxu0 0.0
    %3564 = vmatprep.subr.mxu0 0.0
    %3565 = vmatpush1.msra.mxu0 0.0
    %3566 = vmatprep.subr.mxu0 0.0
    %3567 = vmatpush1.msra.mxu0 0.0
    %3568 = vmatprep.subr.mxu0 0.0
    %3569 = vmatpush1.msra.mxu0 0.0
    %3570 = vmatprep.subr.mxu0 0.0
    %3571 = vmatpush1.msra.mxu0 0.0
    %3572 = vmatprep.subr.mxu0 0.0
    %3573 = vmatpush1.msra.mxu0 0.0
    %3574 = vmatprep.subr.mxu0 0.0
    %3575 = vmatpush1.msra.mxu0 0.0
    %3576 = vmatprep.subr.mxu0 0.0
    %3577 = vmatpush1.msra.mxu0 0.0
    %3578 = vmatprep.subr.mxu0 0.0
    %3579 = vmatpush1.msra.mxu0 0.0
    %3580 = vmatprep.subr.mxu0 0.0
    %3581 = vmatpush1.msra.mxu0 0.0
    %3582 = vmatprep.subr.mxu0 0.0
    %3583 = vmatpush1.msra.mxu0 0.0
    %3584 = vmatprep.subr.mxu0 0.0
    %3585 = vmatpush1.msra.mxu0 0.0
    %3586 = vmatprep.subr.mxu0 0.0
    %3587 = vmatpush1.msra.mxu0 0.0
    %3588 = vmatprep.subr.mxu0 0.0
    %3589 = vmatpush1.msra.mxu0 0.0
    %3590 = vmatprep.subr.mxu0 0.0
    %3591 = vmatpush1.msra.mxu0 0.0
    %3592 = vmatprep.subr.mxu0 0.0
    %3593 = vmatpush1.msra.mxu0 0.0
    %3594 = vmatprep.subr.mxu0 0.0
    %3595 = vmatpush1.msra.mxu0 0.0
    %3596 = vmatprep.subr.mxu0 0.0
    %3597 = vmatpush1.msra.mxu0 0.0
    %3598 = vmatprep.subr.mxu0 0.0
    %3599 = vmatpush1.msra.mxu0 0.0
    %3600 = vmatprep.subr.mxu0 0.0
    %3601 = vmatpush1.msra.mxu0 0.0
    %3602 = vmatprep.subr.mxu0 0.0
    %3603 = vmatpush1.msra.mxu0 0.0
    %3604 = vmatprep.subr.mxu0 0.0
    %3605 = vmatpush1.msra.mxu0 0.0
    %3606 = vmatprep.subr.mxu0 0.0
    %3607 = vmatpush1.msra.mxu0 0.0
    %3608 = vmatprep.mubr.f32.mxu0 0.0
    %3609 = vmatmul.mubr.f32.gmra.mrb[0].mxu0 %v3533
    %v3610 = vpop.f32.mrb[0].mxu0
    %v3611 = vadd.f32 %v3530, %v3610
    %v3612 = vpop.f32.mrb[0].mxu0
    %3613 = vmatprep.mubr.f32.mxu0 0.0
    %3614 = vmatmul.mubr.f32.gmra.mrb[0].mxu0 %v3536
    %v3615 = vpop.f32.mrb[0].mxu0
    %v3616 = vadd.f32 %v3530, %v3615
    %v3617 = vpop.f32.mrb[0].mxu0
    %3618 = vmatprep.mubr.f32.mxu0 0.0
    %3619 = vmatmul.mubr.f32.gmra.mrb[0].mxu0 %v3539
    %v3620 = vpop.f32.mrb[0].mxu0
    %v3621 = vadd.f32 %v3530, %v3620
    %v3622 = vpop.f32.mrb[0].mxu0
    %3623 = vmatprep.mubr.f32.mxu0 0.0
    %3624 = vmatmul.mubr.f32.gmra.mrb[0].mxu0 %v3542
    %v3625 = vpop.f32.mrb[0].mxu0
    %v3626 = vadd.f32 %v3530, %v3625
    %v3627 = vpop.f32.mrb[0].mxu0
    %3628 = vdwg.mxu0
    %3629 = vst.msk [vmem:[#allocation8] sm:$0xff] %vm77, %v3611
    %3630 = vst.msk [vmem:[#allocation8 + $0x8] sm:$0xff] %vm77, %v3616
    %3631 = vst.msk [vmem:[#allocation8 + $0x10] sm:$0xff] %vm77, %v3621
    %3632 = vst.msk [vmem:[#allocation8 + $0x18] sm:$0xff] %vm77, %v3626
    // Predicated region
    $region34: #{tpu_custom_call.1} parent=1 // pred_check
      _
    $region35: #{tpu_custom_call.1} parent=1 // pred_check_branch
      %3634 = sbr.rel (0) target = $region37
    $region36: #{tpu_custom_call.1} parent=1 // pred_region
      %s3636 = ssub.s32 512, 512
      %3637 = vsyncadd [#allocation4], %s3636
      %s3638 = sshll.u32 [#allocation8], 4
      %s3639 = int_to_ptr.vmem [resolvable:$true] %s3638
      %3644 = dma.vmem_to_hbm [thread:$0]  %s3639, 512, %s5, [#allocation4], 128, 128, 8
    $region37: #{tpu_custom_call.1} parent=1 // pred_fallthru
      _
    // Predicated region
    $region38: #{tpu_custom_call.1} parent=1 // pred_check
      _
    $region39: #{tpu_custom_call.1} parent=1 // pred_check_branch
      %3646 = sbr.rel (0) target = $region41
    $region40: #{tpu_custom_call.1} parent=1 // pred_region
      %3647 = dma.done [#allocation4], 512
    $region41: #{tpu_custom_call.1} parent=1 // pred_fallthru
      _
    %3648 = vsyncpa [#allocation3], 1
    %3649 = vsyncpa [#allocation6], 1
    %3650 = vsyncpa [#allocation4], 1

</llo_original>
